<compile_context>
chip_gen: v7x
topology: tpu7x:2x2x1
jax: 0.10.0
libtpu: 0.0.40
codegen_flags: <defaults>
</compile_context>

<pallas_src>
import functools
import math

import jax
import jax.numpy as jnp
from jax.experimental import pallas as pl
from jax.experimental.pallas import tpu as pltpu

NEG_INF = -1e9   # finite stand-in for -inf additive mask values (avoids NaN rows)
LN_EPS = 1e-5    # PyTorch LayerNorm default


# --------------------------- in-kernel helpers -----------------------------

def _ln(x, g, b):
    """LayerNorm over last dim in f32 (vector math stays f32 for v5e compat)."""
    mean = jnp.mean(x, axis=-1, keepdims=True)
    var = jnp.mean(jnp.square(x - mean), axis=-1, keepdims=True)
    return (x - mean) * jax.lax.rsqrt(var + LN_EPS) * g + b


def _bf16_dot(a, b):
    """bf16 MXU matmul with f32 accumulation."""
    return jnp.dot(a.astype(jnp.bfloat16), b.astype(jnp.bfloat16),
                   preferred_element_type=jnp.float32)


# ----------------------------- Pallas kernels ------------------------------

def _linear_kernel(x_ref, w_ref, b_ref, o_ref):
    o_ref[...] = _bf16_dot(x_ref[...], w_ref[...]) + b_ref[...]


def _ln_linear_kernel(x_ref, g_ref, beta_ref, w_ref, b_ref, o_ref):
    xn = _ln(x_ref[...], g_ref[...], beta_ref[...])
    o_ref[...] = _bf16_dot(xn, w_ref[...]) + b_ref[...]


def _ln_ffn_residual_kernel(x_ref, g_ref, beta_ref, w1_ref, b1_ref,
                            w2_ref, b2_ref, o_ref):
    x = x_ref[...]
    xn = _ln(x, g_ref[...], beta_ref[...])
    h = jnp.maximum(_bf16_dot(xn, w1_ref[...]) + b1_ref[...], 0.0)
    o_ref[...] = x + _bf16_dot(h, w2_ref[...]) + b2_ref[...]


def _layernorm_kernel(x_ref, g_ref, b_ref, o_ref):
    o_ref[...] = _ln(x_ref[...], g_ref[...], b_ref[...])


def _mha_attn_kernel(q_ref, kv_ref, mask_ref, o_ref, *, n_head, scale):
    """One batch element per grid step; all heads inside via static lane slices.

    q_ref:  (1, Tq, E)   kv_ref: (1, Tk, 2E) laid out [K | V]
    mask_ref: (1, Tq, Tk) additive bias shared by all heads
    o_ref:  (1, Tq, E)   heads concatenated back on the lane dim (single store)
    """
    E = q_ref.shape[-1]
    Dh = E // n_head
    q = q_ref[0]       # (Tq, E)  f32
    kv = kv_ref[0]     # (Tk, 2E) f32
    mask = mask_ref[0]  # (Tq, Tk) f32
    outs = []
    for h in range(n_head):                     # static unroll, no per-head launch
        lo, hi = h * Dh, (h + 1) * Dh
        q_h = q[:, lo:hi].astype(jnp.bfloat16)
        k_h = kv[:, lo:hi].astype(jnp.bfloat16)
        v_h = kv[:, E + lo:E + hi].astype(jnp.bfloat16)
        s = jnp.dot(q_h, k_h.T, preferred_element_type=jnp.float32) * scale + mask
        s = s - jnp.max(s, axis=-1, keepdims=True)
        p = jnp.exp(s)
        p = p * pl.reciprocal(jnp.sum(p, axis=-1, keepdims=True), approx=True)
        outs.append(jnp.dot(p.astype(jnp.bfloat16), v_h,
                            preferred_element_type=jnp.float32))
    o_ref[0] = jnp.concatenate(outs, axis=-1)   # one lane-dense store


# ------------------------------ wrappers ------------------------------------

def _pad_cols(w, b, mult=128):
    """Zero-pad the output (lane) dim of a linear to a multiple of 128."""
    n = w.shape[1]
    n_pad = -(-n // mult) * mult
    if n_pad != n:
        w = jnp.pad(w, ((0, 0), (0, n_pad - n)))
        b = jnp.pad(b, (0, n_pad - n))
    return w, b, n


def linear(x, w, b):
    """x: (M, K) f32, w: (K, N), b: (N,) -> (M, N) f32. Lane-padded internally."""
    M, K = x.shape
    wp, bp, n = _pad_cols(w, b)
    Np = wp.shape[1]
    out = pl.pallas_call(
        _linear_kernel,
        out_shape=jax.ShapeDtypeStruct((M, Np), jnp.float32),
        grid=(1,),
        in_specs=[
            pl.BlockSpec((M, K), lambda i: (0, 0)),
            pl.BlockSpec((K, Np), lambda i: (0, 0)),
            pl.BlockSpec((1, Np), lambda i: (0, 0)),
        ],
        out_specs=pl.BlockSpec((M, Np), lambda i: (0, 0)),
    )(x, wp, bp.reshape(1, Np))
    return out[:, :n] if n != Np else out


def ln_linear(x, gamma, beta, w, b):
    """LayerNorm(x) @ w + b fused in one kernel."""
    M, K = x.shape
    wp, bp, n = _pad_cols(w, b)
    Np = wp.shape[1]
    out = pl.pallas_call(
        _ln_linear_kernel,
        out_shape=jax.ShapeDtypeStruct((M, Np), jnp.float32),
        grid=(1,),
        in_specs=[
            pl.BlockSpec((M, K), lambda i: (0, 0)),
            pl.BlockSpec((1, K), lambda i: (0, 0)),
            pl.BlockSpec((1, K), lambda i: (0, 0)),
            pl.BlockSpec((K, Np), lambda i: (0, 0)),
            pl.BlockSpec((1, Np), lambda i: (0, 0)),
        ],
        out_specs=pl.BlockSpec((M, Np), lambda i: (0, 0)),
    )(x, gamma.reshape(1, K), beta.reshape(1, K), wp, bp.reshape(1, Np))
    return out[:, :n] if n != Np else out


def ffn_block(x, gamma, beta, w1, b1, w2, b2):
    """Returns x + W2 @ relu(W1 @ LN(x) + b1) + b2, fully fused (hidden stays on-chip)."""
    B, T, E = x.shape
    M = B * T
    F = w1.shape[1]
    Fp = -(-F // 128) * 128
    if Fp != F:   # zero-padding the hidden dim is exact: relu(0)=0 -> w2 zero rows add 0
        w1 = jnp.pad(w1, ((0, 0), (0, Fp - F)))
        b1 = jnp.pad(b1, (0, Fp - F))
        w2 = jnp.pad(w2, ((0, Fp - F), (0, 0)))
    out = pl.pallas_call(
        _ln_ffn_residual_kernel,
        out_shape=jax.ShapeDtypeStruct((M, E), jnp.float32),
        grid=(1,),
        in_specs=[
            pl.BlockSpec((M, E), lambda i: (0, 0)),
            pl.BlockSpec((1, E), lambda i: (0, 0)),
            pl.BlockSpec((1, E), lambda i: (0, 0)),
            pl.BlockSpec((E, Fp), lambda i: (0, 0)),
            pl.BlockSpec((1, Fp), lambda i: (0, 0)),
            pl.BlockSpec((Fp, E), lambda i: (0, 0)),
            pl.BlockSpec((1, E), lambda i: (0, 0)),
        ],
        out_specs=pl.BlockSpec((M, E), lambda i: (0, 0)),
    )(x.reshape(M, E), gamma.reshape(1, E), beta.reshape(1, E),
      w1, b1.reshape(1, Fp), w2, b2.reshape(1, E))
    return out.reshape(B, T, E)


def layernorm(x, gamma, beta):
    """Standalone LN (only used once, for the final encoder norm)."""
    M, E = x.shape
    return pl.pallas_call(
        _layernorm_kernel,
        out_shape=jax.ShapeDtypeStruct((M, E), jnp.float32),
        grid=(1,),
        in_specs=[
            pl.BlockSpec((M, E), lambda i: (0, 0)),
            pl.BlockSpec((1, E), lambda i: (0, 0)),
            pl.BlockSpec((1, E), lambda i: (0, 0)),
        ],
        out_specs=pl.BlockSpec((M, E), lambda i: (0, 0)),
    )(x, gamma.reshape(1, E), beta.reshape(1, E))


def mha_attention(q, kv, mask, n_head):
    """q: (B, Tq, E), kv: (B, Tk, 2E) = [K|V], mask: (B, Tq, Tk) additive bias."""
    B, Tq, E = q.shape
    Tk = kv.shape[1]
    Dh = E // n_head
    scale = 1.0 / math.sqrt(Dh)
    kernel = functools.partial(_mha_attn_kernel, n_head=n_head, scale=scale)
    return pl.pallas_call(
        kernel,
        out_shape=jax.ShapeDtypeStruct((B, Tq, E), jnp.float32),
        grid=(B,),
        in_specs=[
            pl.BlockSpec((1, Tq, E), lambda i: (i, 0, 0)),
            pl.BlockSpec((1, Tk, 2 * E), lambda i: (i, 0, 0)),
            pl.BlockSpec((1, Tq, Tk), lambda i: (i, 0, 0)),
        ],
        out_specs=pl.BlockSpec((1, Tq, E), lambda i: (i, 0, 0)),
        compiler_params=pltpu.CompilerParams(
            dimension_semantics=("parallel",)),
    )(q, kv, mask)


# ----------------------------- model glue -----------------------------------

def build_attn_bias(B, Tq, Tk, attn_mask=None, key_padding_mask=None):
    """Additive float mask (B, Tq, Tk), matching PyTorch MHA mask semantics."""
    bias = jnp.zeros((B, Tq, Tk), jnp.float32)
    if attn_mask is not None:
        bias = bias + attn_mask[None, :, :]
    if key_padding_mask is not None:  # bool, True = ignore key
        bias = bias + jnp.where(key_padding_mask, NEG_INF, 0.0)[:, None, :]
    return bias


def self_attention_block(x, p, n_head, bias, ng, nb):
    """x + MHA(LN(x)); pre-LN fused into the single (E x 3E) QKV projection."""
    B, T, E = x.shape
    qkv = ln_linear(x.reshape(B * T, E), ng, nb, p["in_w"], p["in_b"])  # (BT, 3E)
    q = qkv[:, :E].reshape(B, T, E)
    kv = qkv[:, E:].reshape(B, T, 2 * E)
    o = mha_attention(q, kv, bias, n_head)
    o = linear(o.reshape(B * T, E), p["out_w"], p["out_b"]).reshape(B, T, E)
    return x + o


def cross_attention_block(x, memory, p, n_head, bias, ng, nb):
    """x + MHA(LN(x), memory); K/V projected from (unnormalized) memory."""
    B, Tq, E = x.shape
    Tk = memory.shape[1]
    q = ln_linear(x.reshape(B * Tq, E), ng, nb,
                  p["in_w"][:, :E], p["in_b"][:E]).reshape(B, Tq, E)
    kv = linear(memory.reshape(B * Tk, E),
                p["in_w"][:, E:], p["in_b"][E:]).reshape(B, Tk, 2 * E)
    o = mha_attention(q, kv, bias, n_head)
    o = linear(o.reshape(B * Tq, E), p["out_w"], p["out_b"]).reshape(B, Tq, E)
    return x + o


def encoder_layer(x, p, n_head, self_bias):
    """Pre-LN (norm_first=True) TransformerEncoderLayer, ReLU FFN."""
    x = self_attention_block(x, p["self_attn"], n_head, self_bias,
                             p["norm1_g"], p["norm1_b"])
    x = ffn_block(x, p["norm2_g"], p["norm2_b"],
                  p["ff_w1"], p["ff_b1"], p["ff_w2"], p["ff_b2"])
    return x


def decoder_layer(x, memory, p, n_head, self_bias, cross_bias):
    """Pre-LN (norm_first=True) TransformerDecoderLayer, ReLU FFN."""
    x = self_attention_block(x, p["self_attn"], n_head, self_bias,
                             p["norm1_g"], p["norm1_b"])
    x = cross_attention_block(x, memory, p["cross_attn"], n_head, cross_bias,
                              p["norm2_g"], p["norm2_b"])
    x = ffn_block(x, p["norm3_g"], p["norm3_b"],
                  p["ff_w1"], p["ff_b1"], p["ff_w2"], p["ff_b2"])
    return x


def translation_model_forward(params, src_seq, src_pos, tgt_seq, tgt_pos,
                              tgt_mask, src_padding_mask, tgt_padding_mask,
                              *, n_head):
    # Mirrors TranslationModel.forward
    local_tgt_seq = tgt_seq[:, :-1]
    local_tgt_pos = tgt_pos[:, :-1]
    tgt_len = local_tgt_seq.shape[1]
    local_tgt_padding = tgt_padding_mask[:, :tgt_len]
    local_tgt_mask = tgt_mask[:tgt_len, :tgt_len]

    # TODO(synk): SequenceEmbeddings source not given; assumed tok_emb(seq) + pos_emb(pos), dropout omitted (eval).
    src_emb = params["src_tok_emb"][src_seq] + params["src_pos_emb"][src_pos]
    tgt_emb = params["tgt_tok_emb"][local_tgt_seq] + params["tgt_pos_emb"][local_tgt_pos]

    B, S, E = src_emb.shape
    T = tgt_emb.shape[1]

    enc_self_bias = build_attn_bias(B, S, S, None, src_padding_mask)
    dec_self_bias = build_attn_bias(B, T, T, local_tgt_mask, local_tgt_padding)
    cross_bias = build_attn_bias(B, T, S, None, None)  # memory_key_padding_mask=None

    x = src_emb
    for lp in params["encoder_layers"]:
        x = encoder_layer(x, lp, n_head, enc_self_bias)
    memory = layernorm(x.reshape(B * S, E),
                       params["enc_norm_g"], params["enc_norm_b"]).reshape(B, S, E)

    y = tgt_emb
    for lp in params["decoder_layers"]:
        y = decoder_layer(y, memory, lp, n_head, dec_self_bias, cross_bias)

    # final decoder LayerNorm fused into the LM head projection (lane-padded vocab)
    logits = ln_linear(y.reshape(B * T, E),
                       params["dec_norm_g"], params["dec_norm_b"],
                       params["head_w"], params["head_b"])
    return logits.reshape(B, T, params["head_w"].shape[1])


# --------------------------- parameter init ---------------------------------

def init_params(key, num_enc, num_dec, E, F, src_vocab, tgt_vocab, n_positions):
    keys = iter(jax.random.split(key, 512))

    def xavier(shape):  # xavier_normal_, matching __init_weights; biases -> 0
        fan_in, fan_out = shape
        std = math.sqrt(2.0 / (fan_in + fan_out))
        return jax.random.normal(next(keys), shape, jnp.float32) * std

    def emb(shape):  # nn.Embedding default: N(0, 1)
        return jax.random.normal(next(keys), shape, jnp.float32)

    def mha():
        return {"in_w": xavier((E, 3 * E)), "in_b": jnp.zeros((3 * E,), jnp.float32),
                "out_w": xavier((E, E)), "out_b": jnp.zeros((E,), jnp.float32)}

    def ln():
        return jnp.ones((E,), jnp.float32), jnp.zeros((E,), jnp.float32)

    def enc_layer():
        n1g, n1b = ln(); n2g, n2b = ln()
        return {"self_attn": mha(),
                "ff_w1": xavier((E, F)), "ff_b1": jnp.zeros((F,), jnp.float32),
                "ff_w2": xavier((F, E)), "ff_b2": jnp.zeros((E,), jnp.float32),
                "norm1_g": n1g, "norm1_b": n1b, "norm2_g": n2g, "norm2_b": n2b}

    def dec_layer():
        n1g, n1b = ln(); n2g, n2b = ln(); n3g, n3b = ln()
        return {"self_attn": mha(), "cross_attn": mha(),
                "ff_w1": xavier((E, F)), "ff_b1": jnp.zeros((F,), jnp.float32),
                "ff_w2": xavier((F, E)), "ff_b2": jnp.zeros((E,), jnp.float32),
                "norm1_g": n1g, "norm1_b": n1b, "norm2_g": n2g, "norm2_b": n2b,
                "norm3_g": n3g, "norm3_b": n3b}

    enc_ng, enc_nb = ln()
    dec_ng, dec_nb = ln()
    return {
        "src_tok_emb": emb((src_vocab, E)),
        "src_pos_emb": emb((n_positions, E)),
        # NOTE: module builds tgt_embeddings with src_vocab_size (reproduced as-is)
        "tgt_tok_emb": emb((src_vocab, E)),
        "tgt_pos_emb": emb((n_positions, E)),
        "encoder_layers": [enc_layer() for _ in range(num_enc)],
        "decoder_layers": [dec_layer() for _ in range(num_dec)],
        "enc_norm_g": enc_ng, "enc_norm_b": enc_nb,
        "dec_norm_g": dec_ng, "dec_norm_b": dec_nb,
        "head_w": xavier((E, tgt_vocab)),
        "head_b": jnp.zeros((tgt_vocab,), jnp.float32),
    }


# ------------------------------- main ----------------------------------------

if __name__ == "__main__":
    B, S_src, S_tgt = 2, 8, 8
    num_enc, num_dec = 2, 2
    E, F, n_head = 32, 64, 4
    src_vocab, tgt_vocab, n_positions = 50, 60, 16

    key = jax.random.PRNGKey(0)
    pkey, k1, k2 = jax.random.split(key, 3)
    params = init_params(pkey, num_enc, num_dec, E, F, src_vocab, tgt_vocab, n_positions)

    src_seq = jax.random.randint(k1, (B, S_src), 0, src_vocab, dtype=jnp.int32)
    tgt_seq = jax.random.randint(k2, (B, S_tgt), 0, src_vocab, dtype=jnp.int32)
    src_pos = jnp.tile(jnp.arange(S_src, dtype=jnp.int32)[None, :], (B, 1))
    tgt_pos = jnp.tile(jnp.arange(S_tgt, dtype=jnp.int32)[None, :], (B, 1))

    # causal target mask (additive; -inf above diagonal -> finite NEG_INF here)
    tgt_mask = jnp.where(jnp.triu(jnp.ones((S_tgt, S_tgt), jnp.bool_), k=1),
                         NEG_INF, 0.0).astype(jnp.float32)
    src_padding_mask = jnp.zeros((B, S_src), jnp.bool_).at[:, -2:].set(True)
    tgt_padding_mask = jnp.zeros((B, S_tgt), jnp.bool_).at[:, -2:].set(True)

    fwd = jax.jit(functools.partial(translation_model_forward, n_head=n_head))
    logits = fwd(params, src_seq, src_pos, tgt_seq, tgt_pos,
                 tgt_mask, src_padding_mask, tgt_padding_mask)
    jax.block_until_ready(logits)

    assert logits.shape == (B, S_tgt - 1, tgt_vocab), logits.shape
    assert bool(jnp.all(jnp.isfinite(logits)))
    print("KERNEL_OK")
</pallas_src>

<mosaic_0001>
module attributes {stable_mosaic.version = 11 : i64} {
  func.func @_mha_attn_kernel(%arg0: i32, %arg1: memref<1x8x32xf32, #tpu.memory_space<vmem>>, %arg2: memref<1x8x64xf32, #tpu.memory_space<vmem>>, %arg3: memref<1x8x8xf32, #tpu.memory_space<vmem>>, %arg4: memref<1x8x32xf32, #tpu.memory_space<vmem>>) attributes {dimension_semantics = [#tpu.dimension_semantics<parallel>], iteration_bounds = array<i64: 2>, scalar_prefetch = 0 : i64, scratch_operands = 0 : i64, tpu.core_type = #tpu.core_type<tc>, window_params = [{transform_indices = @transform_0, window_bounds = array<i64: 1, 8, 32>}, {transform_indices = @transform_1, window_bounds = array<i64: 1, 8, 64>}, {transform_indices = @transform_2, window_bounds = array<i64: 1, 8, 8>}, {transform_indices = @transform_3, window_bounds = array<i64: 1, 8, 32>}]} {
    %c0 = arith.constant 0 : index
    %c0_0 = arith.constant 0 : index
    %c0_1 = arith.constant 0 : index
    %0 = vector.load %arg1[%c0, %c0_0, %c0_1] : memref<1x8x32xf32, #tpu.memory_space<vmem>>, vector<1x8x32xf32>
    %1 = vector.shape_cast %0 : vector<1x8x32xf32> to vector<8x32xf32>
    %c0_2 = arith.constant 0 : index
    %c0_3 = arith.constant 0 : index
    %c0_4 = arith.constant 0 : index
    %2 = vector.load %arg2[%c0_2, %c0_3, %c0_4] : memref<1x8x64xf32, #tpu.memory_space<vmem>>, vector<1x8x64xf32>
    %3 = vector.shape_cast %2 : vector<1x8x64xf32> to vector<8x64xf32>
    %c0_5 = arith.constant 0 : index
    %c0_6 = arith.constant 0 : index
    %c0_7 = arith.constant 0 : index
    %4 = vector.load %arg3[%c0_5, %c0_6, %c0_7] : memref<1x8x8xf32, #tpu.memory_space<vmem>>, vector<1x8x8xf32>
    %5 = vector.shape_cast %4 : vector<1x8x8xf32> to vector<8x8xf32>
    %6 = vector.extract_strided_slice %1 {offsets = [0, 0], sizes = [8, 8], strides = [1, 1]} : vector<8x32xf32> to vector<8x8xf32>
    %7 = arith.truncf %6 : vector<8x8xf32> to vector<8x8xbf16>
    %8 = vector.extract_strided_slice %3 {offsets = [0, 0], sizes = [8, 8], strides = [1, 1]} : vector<8x64xf32> to vector<8x8xf32>
    %9 = arith.truncf %8 : vector<8x8xf32> to vector<8x8xbf16>
    %10 = vector.extract_strided_slice %3 {offsets = [0, 32], sizes = [8, 8], strides = [1, 1]} : vector<8x64xf32> to vector<8x8xf32>
    %11 = arith.truncf %10 : vector<8x8xf32> to vector<8x8xbf16>
    %12 = tpu.transpose %9, [1, 0] : vector<8x8xbf16> -> vector<8x8xbf16>
    %cst = arith.constant dense<0.000000e+00> : vector<8x8xf32>
    %13 = tpu.matmul %7, %12, %cst {dimension_numbers = #tpu.dot_dimension_numbers<[1], [0], [0], [1], [0, 0, 1, 1], [], []>} : vector<8x8xbf16>, vector<8x8xbf16>, vector<8x8xf32> -> vector<8x8xf32>
    %cst_8 = arith.constant 0.353553385 : f32
    %14 = vector.broadcast %cst_8 : f32 to vector<8x8xf32>
    %15 = arith.mulf %13, %14 : vector<8x8xf32>
    %16 = arith.addf %15, %5 : vector<8x8xf32>
    %cst_9 = arith.constant dense<0xFF800000> : vector<8xf32>
    %17 = vector.multi_reduction <maximumf>, %16, %cst_9 [1] : vector<8x8xf32> to vector<8xf32>
    %18 = vector.shape_cast %17 : vector<8xf32> to vector<8x1xf32>
    %19 = vector.broadcast %18 : vector<8x1xf32> to vector<8x8xf32>
    %20 = arith.subf %16, %19 : vector<8x8xf32>
    %21 = math.exp %20 : vector<8x8xf32>
    %cst_10 = arith.constant dense<0.000000e+00> : vector<8xf32>
    %22 = vector.multi_reduction <add>, %21, %cst_10 [1] : vector<8x8xf32> to vector<8xf32>
    %23 = vector.shape_cast %22 : vector<8xf32> to vector<8x1xf32>
    %24 = tpu.reciprocal %23 {approx = true} : vector<8x1xf32> -> vector<8x1xf32>
    %25 = vector.broadcast %24 : vector<8x1xf32> to vector<8x8xf32>
    %26 = arith.mulf %21, %25 : vector<8x8xf32>
    %27 = arith.truncf %26 : vector<8x8xf32> to vector<8x8xbf16>
    %cst_11 = arith.constant dense<0.000000e+00> : vector<8x8xf32>
    %28 = tpu.matmul %27, %11, %cst_11 {dimension_numbers = #tpu.dot_dimension_numbers<[1], [0], [0], [1], [0, 0, 1, 1], [], []>} : vector<8x8xbf16>, vector<8x8xbf16>, vector<8x8xf32> -> vector<8x8xf32>
    %29 = vector.extract_strided_slice %1 {offsets = [0, 8], sizes = [8, 8], strides = [1, 1]} : vector<8x32xf32> to vector<8x8xf32>
    %30 = arith.truncf %29 : vector<8x8xf32> to vector<8x8xbf16>
    %31 = vector.extract_strided_slice %3 {offsets = [0, 8], sizes = [8, 8], strides = [1, 1]} : vector<8x64xf32> to vector<8x8xf32>
    %32 = arith.truncf %31 : vector<8x8xf32> to vector<8x8xbf16>
    %33 = vector.extract_strided_slice %3 {offsets = [0, 40], sizes = [8, 8], strides = [1, 1]} : vector<8x64xf32> to vector<8x8xf32>
    %34 = arith.truncf %33 : vector<8x8xf32> to vector<8x8xbf16>
    %35 = tpu.transpose %32, [1, 0] : vector<8x8xbf16> -> vector<8x8xbf16>
    %cst_12 = arith.constant dense<0.000000e+00> : vector<8x8xf32>
    %36 = tpu.matmul %30, %35, %cst_12 {dimension_numbers = #tpu.dot_dimension_numbers<[1], [0], [0], [1], [0, 0, 1, 1], [], []>} : vector<8x8xbf16>, vector<8x8xbf16>, vector<8x8xf32> -> vector<8x8xf32>
    %cst_13 = arith.constant 0.353553385 : f32
    %37 = vector.broadcast %cst_13 : f32 to vector<8x8xf32>
    %38 = arith.mulf %36, %37 : vector<8x8xf32>
    %39 = arith.addf %38, %5 : vector<8x8xf32>
    %cst_14 = arith.constant dense<0xFF800000> : vector<8xf32>
    %40 = vector.multi_reduction <maximumf>, %39, %cst_14 [1] : vector<8x8xf32> to vector<8xf32>
    %41 = vector.shape_cast %40 : vector<8xf32> to vector<8x1xf32>
    %42 = vector.broadcast %41 : vector<8x1xf32> to vector<8x8xf32>
    %43 = arith.subf %39, %42 : vector<8x8xf32>
    %44 = math.exp %43 : vector<8x8xf32>
    %cst_15 = arith.constant dense<0.000000e+00> : vector<8xf32>
    %45 = vector.multi_reduction <add>, %44, %cst_15 [1] : vector<8x8xf32> to vector<8xf32>
    %46 = vector.shape_cast %45 : vector<8xf32> to vector<8x1xf32>
    %47 = tpu.reciprocal %46 {approx = true} : vector<8x1xf32> -> vector<8x1xf32>
    %48 = vector.broadcast %47 : vector<8x1xf32> to vector<8x8xf32>
    %49 = arith.mulf %44, %48 : vector<8x8xf32>
    %50 = arith.truncf %49 : vector<8x8xf32> to vector<8x8xbf16>
    %cst_16 = arith.constant dense<0.000000e+00> : vector<8x8xf32>
    %51 = tpu.matmul %50, %34, %cst_16 {dimension_numbers = #tpu.dot_dimension_numbers<[1], [0], [0], [1], [0, 0, 1, 1], [], []>} : vector<8x8xbf16>, vector<8x8xbf16>, vector<8x8xf32> -> vector<8x8xf32>
    %52 = vector.extract_strided_slice %1 {offsets = [0, 16], sizes = [8, 8], strides = [1, 1]} : vector<8x32xf32> to vector<8x8xf32>
    %53 = arith.truncf %52 : vector<8x8xf32> to vector<8x8xbf16>
    %54 = vector.extract_strided_slice %3 {offsets = [0, 16], sizes = [8, 8], strides = [1, 1]} : vector<8x64xf32> to vector<8x8xf32>
    %55 = arith.truncf %54 : vector<8x8xf32> to vector<8x8xbf16>
    %56 = vector.extract_strided_slice %3 {offsets = [0, 48], sizes = [8, 8], strides = [1, 1]} : vector<8x64xf32> to vector<8x8xf32>
    %57 = arith.truncf %56 : vector<8x8xf32> to vector<8x8xbf16>
    %58 = tpu.transpose %55, [1, 0] : vector<8x8xbf16> -> vector<8x8xbf16>
    %cst_17 = arith.constant dense<0.000000e+00> : vector<8x8xf32>
    %59 = tpu.matmul %53, %58, %cst_17 {dimension_numbers = #tpu.dot_dimension_numbers<[1], [0], [0], [1], [0, 0, 1, 1], [], []>} : vector<8x8xbf16>, vector<8x8xbf16>, vector<8x8xf32> -> vector<8x8xf32>
    %cst_18 = arith.constant 0.353553385 : f32
    %60 = vector.broadcast %cst_18 : f32 to vector<8x8xf32>
    %61 = arith.mulf %59, %60 : vector<8x8xf32>
    %62 = arith.addf %61, %5 : vector<8x8xf32>
    %cst_19 = arith.constant dense<0xFF800000> : vector<8xf32>
    %63 = vector.multi_reduction <maximumf>, %62, %cst_19 [1] : vector<8x8xf32> to vector<8xf32>
    %64 = vector.shape_cast %63 : vector<8xf32> to vector<8x1xf32>
    %65 = vector.broadcast %64 : vector<8x1xf32> to vector<8x8xf32>
    %66 = arith.subf %62, %65 : vector<8x8xf32>
    %67 = math.exp %66 : vector<8x8xf32>
    %cst_20 = arith.constant dense<0.000000e+00> : vector<8xf32>
    %68 = vector.multi_reduction <add>, %67, %cst_20 [1] : vector<8x8xf32> to vector<8xf32>
    %69 = vector.shape_cast %68 : vector<8xf32> to vector<8x1xf32>
    %70 = tpu.reciprocal %69 {approx = true} : vector<8x1xf32> -> vector<8x1xf32>
    %71 = vector.broadcast %70 : vector<8x1xf32> to vector<8x8xf32>
    %72 = arith.mulf %67, %71 : vector<8x8xf32>
    %73 = arith.truncf %72 : vector<8x8xf32> to vector<8x8xbf16>
    %cst_21 = arith.constant dense<0.000000e+00> : vector<8x8xf32>
    %74 = tpu.matmul %73, %57, %cst_21 {dimension_numbers = #tpu.dot_dimension_numbers<[1], [0], [0], [1], [0, 0, 1, 1], [], []>} : vector<8x8xbf16>, vector<8x8xbf16>, vector<8x8xf32> -> vector<8x8xf32>
    %75 = vector.extract_strided_slice %1 {offsets = [0, 24], sizes = [8, 8], strides = [1, 1]} : vector<8x32xf32> to vector<8x8xf32>
    %76 = arith.truncf %75 : vector<8x8xf32> to vector<8x8xbf16>
    %77 = vector.extract_strided_slice %3 {offsets = [0, 24], sizes = [8, 8], strides = [1, 1]} : vector<8x64xf32> to vector<8x8xf32>
    %78 = arith.truncf %77 : vector<8x8xf32> to vector<8x8xbf16>
    %79 = vector.extract_strided_slice %3 {offsets = [0, 56], sizes = [8, 8], strides = [1, 1]} : vector<8x64xf32> to vector<8x8xf32>
    %80 = arith.truncf %79 : vector<8x8xf32> to vector<8x8xbf16>
    %81 = tpu.transpose %78, [1, 0] : vector<8x8xbf16> -> vector<8x8xbf16>
    %cst_22 = arith.constant dense<0.000000e+00> : vector<8x8xf32>
    %82 = tpu.matmul %76, %81, %cst_22 {dimension_numbers = #tpu.dot_dimension_numbers<[1], [0], [0], [1], [0, 0, 1, 1], [], []>} : vector<8x8xbf16>, vector<8x8xbf16>, vector<8x8xf32> -> vector<8x8xf32>
    %cst_23 = arith.constant 0.353553385 : f32
    %83 = vector.broadcast %cst_23 : f32 to vector<8x8xf32>
    %84 = arith.mulf %82, %83 : vector<8x8xf32>
    %85 = arith.addf %84, %5 : vector<8x8xf32>
    %cst_24 = arith.constant dense<0xFF800000> : vector<8xf32>
    %86 = vector.multi_reduction <maximumf>, %85, %cst_24 [1] : vector<8x8xf32> to vector<8xf32>
    %87 = vector.shape_cast %86 : vector<8xf32> to vector<8x1xf32>
    %88 = vector.broadcast %87 : vector<8x1xf32> to vector<8x8xf32>
    %89 = arith.subf %85, %88 : vector<8x8xf32>
    %90 = math.exp %89 : vector<8x8xf32>
    %cst_25 = arith.constant dense<0.000000e+00> : vector<8xf32>
    %91 = vector.multi_reduction <add>, %90, %cst_25 [1] : vector<8x8xf32> to vector<8xf32>
    %92 = vector.shape_cast %91 : vector<8xf32> to vector<8x1xf32>
    %93 = tpu.reciprocal %92 {approx = true} : vector<8x1xf32> -> vector<8x1xf32>
    %94 = vector.broadcast %93 : vector<8x1xf32> to vector<8x8xf32>
    %95 = arith.mulf %90, %94 : vector<8x8xf32>
    %96 = arith.truncf %95 : vector<8x8xf32> to vector<8x8xbf16>
    %cst_26 = arith.constant dense<0.000000e+00> : vector<8x8xf32>
    %97 = tpu.matmul %96, %80, %cst_26 {dimension_numbers = #tpu.dot_dimension_numbers<[1], [0], [0], [1], [0, 0, 1, 1], [], []>} : vector<8x8xbf16>, vector<8x8xbf16>, vector<8x8xf32> -> vector<8x8xf32>
    %98 = tpu.concatenate %28, %51, %74, %97 in 1 : vector<8x8xf32>, vector<8x8xf32>, vector<8x8xf32>, vector<8x8xf32> -> vector<8x32xf32>
    %c0_27 = arith.constant 0 : index
    %c0_28 = arith.constant 0 : index
    %c0_29 = arith.constant 0 : index
    %99 = vector.load %arg4[%c0_27, %c0_28, %c0_29] : memref<1x8x32xf32, #tpu.memory_space<vmem>>, vector<1x8x32xf32>
    %100 = vector.shape_cast %99 : vector<1x8x32xf32> to vector<8x32xf32>
    %101 = vector.shape_cast %98 : vector<8x32xf32> to vector<1x8x32xf32>
    tpu.vector_store %arg4[%c0_27, %c0_28, %c0_29], %101 {strides = array<i32>} : memref<1x8x32xf32, #tpu.memory_space<vmem>>, vector<1x8x32xf32>,
    return
  }
  func.func @transform_0(%arg0: i32) -> (i32, i32, i32) {
    %c0_i32 = arith.constant 0 : i32
    %c0_i32_0 = arith.constant 0 : i32
    %c0_i32_1 = arith.constant 0 : i32
    return %arg0, %c0_i32, %c0_i32_0 : i32, i32, i32
  }
  func.func @transform_1(%arg0: i32) -> (i32, i32, i32) {
    %c0_i32 = arith.constant 0 : i32
    %c0_i32_0 = arith.constant 0 : i32
    %c0_i32_1 = arith.constant 0 : i32
    return %arg0, %c0_i32, %c0_i32_0 : i32, i32, i32
  }
  func.func @transform_2(%arg0: i32) -> (i32, i32, i32) {
    %c0_i32 = arith.constant 0 : i32
    %c0_i32_0 = arith.constant 0 : i32
    %c0_i32_1 = arith.constant 0 : i32
    return %arg0, %c0_i32, %c0_i32_0 : i32, i32, i32
  }
  func.func @transform_3(%arg0: i32) -> (i32, i32, i32) {
    %c0_i32 = arith.constant 0 : i32
    %c0_i32_0 = arith.constant 0 : i32
    %c0_i32_1 = arith.constant 0 : i32
    return %arg0, %c0_i32, %c0_i32_0 : i32, i32, i32
  }
}

module attributes {stable_mosaic.version = 11 : i64} {
  func.func @_ln_linear_kernel(%arg0: i32, %arg1: memref<16x32xf32, #tpu.memory_space<vmem>>, %arg2: memref<1x32xf32, #tpu.memory_space<vmem>>, %arg3: memref<1x32xf32, #tpu.memory_space<vmem>>, %arg4: memref<32x128xf32, #tpu.memory_space<vmem>>, %arg5: memref<1x128xf32, #tpu.memory_space<vmem>>, %arg6: memref<16x128xf32, #tpu.memory_space<vmem>>) attributes {dimension_semantics = [#tpu.dimension_semantics<arbitrary>], iteration_bounds = array<i64: 1>, scalar_prefetch = 0 : i64, scratch_operands = 0 : i64, tpu.core_type = #tpu.core_type<tc>, window_params = [{pipeline_mode = #tpu.pipeline_mode<synchronous>, transform_indices = @transform_0, window_bounds = array<i64: 16, 32>}, {pipeline_mode = #tpu.pipeline_mode<synchronous>, transform_indices = @transform_1, window_bounds = array<i64: 1, 32>}, {pipeline_mode = #tpu.pipeline_mode<synchronous>, transform_indices = @transform_2, window_bounds = array<i64: 1, 32>}, {pipeline_mode = #tpu.pipeline_mode<synchronous>, transform_indices = @transform_3, window_bounds = array<i64: 32, 128>}, {pipeline_mode = #tpu.pipeline_mode<synchronous>, transform_indices = @transform_4, window_bounds = array<i64: 1, 128>}, {pipeline_mode = #tpu.pipeline_mode<synchronous>, transform_indices = @transform_5, window_bounds = array<i64: 16, 128>}]} {
    %c0 = arith.constant 0 : index
    %c0_0 = arith.constant 0 : index
    %0 = vector.load %arg1[%c0, %c0_0] : memref<16x32xf32, #tpu.memory_space<vmem>>, vector<16x32xf32>
    %c0_1 = arith.constant 0 : index
    %c0_2 = arith.constant 0 : index
    %1 = vector.load %arg2[%c0_1, %c0_2] : memref<1x32xf32, #tpu.memory_space<vmem>>, vector<1x32xf32>
    %c0_3 = arith.constant 0 : index
    %c0_4 = arith.constant 0 : index
    %2 = vector.load %arg3[%c0_3, %c0_4] : memref<1x32xf32, #tpu.memory_space<vmem>>, vector<1x32xf32>
    %cst = arith.constant dense<0.000000e+00> : vector<16xf32>
    %3 = vector.multi_reduction <add>, %0, %cst [1] : vector<16x32xf32> to vector<16xf32>
    %4 = vector.shape_cast %3 : vector<16xf32> to vector<16x1xf32>
    %cst_5 = arith.constant 3.200000e+01 : f32
    %5 = vector.broadcast %cst_5 : f32 to vector<16x1xf32>
    %6 = arith.divf %4, %5 : vector<16x1xf32>
    %7 = vector.broadcast %6 : vector<16x1xf32> to vector<16x32xf32>
    %8 = arith.subf %0, %7 : vector<16x32xf32>
    %9 = arith.mulf %8, %8 : vector<16x32xf32>
    %cst_6 = arith.constant dense<0.000000e+00> : vector<16xf32>
    %10 = vector.multi_reduction <add>, %9, %cst_6 [1] : vector<16x32xf32> to vector<16xf32>
    %11 = vector.shape_cast %10 : vector<16xf32> to vector<16x1xf32>
    %cst_7 = arith.constant 3.200000e+01 : f32
    %12 = vector.broadcast %cst_7 : f32 to vector<16x1xf32>
    %13 = arith.divf %11, %12 : vector<16x1xf32>
    %14 = vector.broadcast %6 : vector<16x1xf32> to vector<16x32xf32>
    %15 = arith.subf %0, %14 : vector<16x32xf32>
    %cst_8 = arith.constant 9.99999974E-6 : f32
    %16 = vector.broadcast %cst_8 : f32 to vector<16x1xf32>
    %17 = arith.addf %13, %16 : vector<16x1xf32>
    %18 = math.rsqrt %17 : vector<16x1xf32>
    %19 = vector.broadcast %18 : vector<16x1xf32> to vector<16x32xf32>
    %20 = arith.mulf %15, %19 : vector<16x32xf32>
    %21 = vector.broadcast %1 : vector<1x32xf32> to vector<16x32xf32>
    %22 = arith.mulf %20, %21 : vector<16x32xf32>
    %23 = vector.broadcast %2 : vector<1x32xf32> to vector<16x32xf32>
    %24 = arith.addf %22, %23 : vector<16x32xf32>
    %c0_9 = arith.constant 0 : index
    %c0_10 = arith.constant 0 : index
    %25 = vector.load %arg4[%c0_9, %c0_10] : memref<32x128xf32, #tpu.memory_space<vmem>>, vector<32x128xf32>
    %26 = arith.truncf %24 : vector<16x32xf32> to vector<16x32xbf16>
    %27 = arith.truncf %25 : vector<32x128xf32> to vector<32x128xbf16>
    %cst_11 = arith.constant dense<0.000000e+00> : vector<16x128xf32>
    %28 = tpu.matmul %26, %27, %cst_11 {dimension_numbers = #tpu.dot_dimension_numbers<[1], [0], [0], [1], [0, 0, 1, 1], [], []>} : vector<16x32xbf16>, vector<32x128xbf16>, vector<16x128xf32> -> vector<16x128xf32>
    %c0_12 = arith.constant 0 : index
    %c0_13 = arith.constant 0 : index
    %29 = vector.load %arg5[%c0_12, %c0_13] : memref<1x128xf32, #tpu.memory_space<vmem>>, vector<1x128xf32>
    %30 = vector.broadcast %29 : vector<1x128xf32> to vector<16x128xf32>
    %31 = arith.addf %28, %30 : vector<16x128xf32>
    %c0_14 = arith.constant 0 : index
    %c0_15 = arith.constant 0 : index
    %32 = vector.load %arg6[%c0_14, %c0_15] : memref<16x128xf32, #tpu.memory_space<vmem>>, vector<16x128xf32>
    tpu.vector_store %arg6[%c0_14, %c0_15], %31 {strides = array<i32>} : memref<16x128xf32, #tpu.memory_space<vmem>>, vector<16x128xf32>,
    return
  }
  func.func @transform_0(%arg0: i32) -> (i32, i32) {
    %c0_i32 = arith.constant 0 : i32
    %c0_i32_0 = arith.constant 0 : i32
    %c0_i32_1 = arith.constant 0 : i32
    return %c0_i32, %c0_i32_0 : i32, i32
  }
  func.func @transform_1(%arg0: i32) -> (i32, i32) {
    %c0_i32 = arith.constant 0 : i32
    %c0_i32_0 = arith.constant 0 : i32
    %c0_i32_1 = arith.constant 0 : i32
    return %c0_i32, %c0_i32_0 : i32, i32
  }
  func.func @transform_2(%arg0: i32) -> (i32, i32) {
    %c0_i32 = arith.constant 0 : i32
    %c0_i32_0 = arith.constant 0 : i32
    %c0_i32_1 = arith.constant 0 : i32
    return %c0_i32, %c0_i32_0 : i32, i32
  }
  func.func @transform_3(%arg0: i32) -> (i32, i32) {
    %c0_i32 = arith.constant 0 : i32
    %c0_i32_0 = arith.constant 0 : i32
    %c0_i32_1 = arith.constant 0 : i32
    return %c0_i32, %c0_i32_0 : i32, i32
  }
  func.func @transform_4(%arg0: i32) -> (i32, i32) {
    %c0_i32 = arith.constant 0 : i32
    %c0_i32_0 = arith.constant 0 : i32
    %c0_i32_1 = arith.constant 0 : i32
    return %c0_i32, %c0_i32_0 : i32, i32
  }
  func.func @transform_5(%arg0: i32) -> (i32, i32) {
    %c0_i32 = arith.constant 0 : i32
    %c0_i32_0 = arith.constant 0 : i32
    %c0_i32_1 = arith.constant 0 : i32
    return %c0_i32, %c0_i32_0 : i32, i32
  }
}

module attributes {stable_mosaic.version = 11 : i64} {
  func.func @_linear_kernel(%arg0: i32, %arg1: memref<16x32xf32, #tpu.memory_space<vmem>>, %arg2: memref<32x128xf32, #tpu.memory_space<vmem>>, %arg3: memref<1x128xf32, #tpu.memory_space<vmem>>, %arg4: memref<16x128xf32, #tpu.memory_space<vmem>>) attributes {dimension_semantics = [#tpu.dimension_semantics<arbitrary>], iteration_bounds = array<i64: 1>, scalar_prefetch = 0 : i64, scratch_operands = 0 : i64, tpu.core_type = #tpu.core_type<tc>, window_params = [{pipeline_mode = #tpu.pipeline_mode<synchronous>, transform_indices = @transform_0, window_bounds = array<i64: 16, 32>}, {pipeline_mode = #tpu.pipeline_mode<synchronous>, transform_indices = @transform_1, window_bounds = array<i64: 32, 128>}, {pipeline_mode = #tpu.pipeline_mode<synchronous>, transform_indices = @transform_2, window_bounds = array<i64: 1, 128>}, {pipeline_mode = #tpu.pipeline_mode<synchronous>, transform_indices = @transform_3, window_bounds = array<i64: 16, 128>}]} {
    %c0 = arith.constant 0 : index
    %c0_0 = arith.constant 0 : index
    %0 = vector.load %arg1[%c0, %c0_0] : memref<16x32xf32, #tpu.memory_space<vmem>>, vector<16x32xf32>
    %c0_1 = arith.constant 0 : index
    %c0_2 = arith.constant 0 : index
    %1 = vector.load %arg2[%c0_1, %c0_2] : memref<32x128xf32, #tpu.memory_space<vmem>>, vector<32x128xf32>
    %2 = arith.truncf %0 : vector<16x32xf32> to vector<16x32xbf16>
    %3 = arith.truncf %1 : vector<32x128xf32> to vector<32x128xbf16>
    %cst = arith.constant dense<0.000000e+00> : vector<16x128xf32>
    %4 = tpu.matmul %2, %3, %cst {dimension_numbers = #tpu.dot_dimension_numbers<[1], [0], [0], [1], [0, 0, 1, 1], [], []>} : vector<16x32xbf16>, vector<32x128xbf16>, vector<16x128xf32> -> vector<16x128xf32>
    %c0_3 = arith.constant 0 : index
    %c0_4 = arith.constant 0 : index
    %5 = vector.load %arg3[%c0_3, %c0_4] : memref<1x128xf32, #tpu.memory_space<vmem>>, vector<1x128xf32>
    %6 = vector.broadcast %5 : vector<1x128xf32> to vector<16x128xf32>
    %7 = arith.addf %4, %6 : vector<16x128xf32>
    %c0_5 = arith.constant 0 : index
    %c0_6 = arith.constant 0 : index
    %8 = vector.load %arg4[%c0_5, %c0_6] : memref<16x128xf32, #tpu.memory_space<vmem>>, vector<16x128xf32>
    tpu.vector_store %arg4[%c0_5, %c0_6], %7 {strides = array<i32>} : memref<16x128xf32, #tpu.memory_space<vmem>>, vector<16x128xf32>,
    return
  }
  func.func @transform_0(%arg0: i32) -> (i32, i32) {
    %c0_i32 = arith.constant 0 : i32
    %c0_i32_0 = arith.constant 0 : i32
    %c0_i32_1 = arith.constant 0 : i32
    return %c0_i32, %c0_i32_0 : i32, i32
  }
  func.func @transform_1(%arg0: i32) -> (i32, i32) {
    %c0_i32 = arith.constant 0 : i32
    %c0_i32_0 = arith.constant 0 : i32
    %c0_i32_1 = arith.constant 0 : i32
    return %c0_i32, %c0_i32_0 : i32, i32
  }
  func.func @transform_2(%arg0: i32) -> (i32, i32) {
    %c0_i32 = arith.constant 0 : i32
    %c0_i32_0 = arith.constant 0 : i32
    %c0_i32_1 = arith.constant 0 : i32
    return %c0_i32, %c0_i32_0 : i32, i32
  }
  func.func @transform_3(%arg0: i32) -> (i32, i32) {
    %c0_i32 = arith.constant 0 : i32
    %c0_i32_0 = arith.constant 0 : i32
    %c0_i32_1 = arith.constant 0 : i32
    return %c0_i32, %c0_i32_0 : i32, i32
  }
}

module attributes {stable_mosaic.version = 11 : i64} {
  func.func @_ln_ffn_residual_kernel(%arg0: i32, %arg1: memref<16x32xf32, #tpu.memory_space<vmem>>, %arg2: memref<1x32xf32, #tpu.memory_space<vmem>>, %arg3: memref<1x32xf32, #tpu.memory_space<vmem>>, %arg4: memref<32x128xf32, #tpu.memory_space<vmem>>, %arg5: memref<1x128xf32, #tpu.memory_space<vmem>>, %arg6: memref<128x32xf32, #tpu.memory_space<vmem>>, %arg7: memref<1x32xf32, #tpu.memory_space<vmem>>, %arg8: memref<16x32xf32, #tpu.memory_space<vmem>>) attributes {dimension_semantics = [#tpu.dimension_semantics<arbitrary>], iteration_bounds = array<i64: 1>, scalar_prefetch = 0 : i64, scratch_operands = 0 : i64, tpu.core_type = #tpu.core_type<tc>, window_params = [{pipeline_mode = #tpu.pipeline_mode<synchronous>, transform_indices = @transform_0, window_bounds = array<i64: 16, 32>}, {pipeline_mode = #tpu.pipeline_mode<synchronous>, transform_indices = @transform_1, window_bounds = array<i64: 1, 32>}, {pipeline_mode = #tpu.pipeline_mode<synchronous>, transform_indices = @transform_2, window_bounds = array<i64: 1, 32>}, {pipeline_mode = #tpu.pipeline_mode<synchronous>, transform_indices = @transform_3, window_bounds = array<i64: 32, 128>}, {pipeline_mode = #tpu.pipeline_mode<synchronous>, transform_indices = @transform_4, window_bounds = array<i64: 1, 128>}, {pipeline_mode = #tpu.pipeline_mode<synchronous>, transform_indices = @transform_5, window_bounds = array<i64: 128, 32>}, {pipeline_mode = #tpu.pipeline_mode<synchronous>, transform_indices = @transform_6, window_bounds = array<i64: 1, 32>}, {pipeline_mode = #tpu.pipeline_mode<synchronous>, transform_indices = @transform_7, window_bounds = array<i64: 16, 32>}]} {
    %c0 = arith.constant 0 : index
    %c0_0 = arith.constant 0 : index
    %0 = vector.load %arg1[%c0, %c0_0] : memref<16x32xf32, #tpu.memory_space<vmem>>, vector<16x32xf32>
    %c0_1 = arith.constant 0 : index
    %c0_2 = arith.constant 0 : index
    %1 = vector.load %arg2[%c0_1, %c0_2] : memref<1x32xf32, #tpu.memory_space<vmem>>, vector<1x32xf32>
    %c0_3 = arith.constant 0 : index
    %c0_4 = arith.constant 0 : index
    %2 = vector.load %arg3[%c0_3, %c0_4] : memref<1x32xf32, #tpu.memory_space<vmem>>, vector<1x32xf32>
    %cst = arith.constant dense<0.000000e+00> : vector<16xf32>
    %3 = vector.multi_reduction <add>, %0, %cst [1] : vector<16x32xf32> to vector<16xf32>
    %4 = vector.shape_cast %3 : vector<16xf32> to vector<16x1xf32>
    %cst_5 = arith.constant 3.200000e+01 : f32
    %5 = vector.broadcast %cst_5 : f32 to vector<16x1xf32>
    %6 = arith.divf %4, %5 : vector<16x1xf32>
    %7 = vector.broadcast %6 : vector<16x1xf32> to vector<16x32xf32>
    %8 = arith.subf %0, %7 : vector<16x32xf32>
    %9 = arith.mulf %8, %8 : vector<16x32xf32>
    %cst_6 = arith.constant dense<0.000000e+00> : vector<16xf32>
    %10 = vector.multi_reduction <add>, %9, %cst_6 [1] : vector<16x32xf32> to vector<16xf32>
    %11 = vector.shape_cast %10 : vector<16xf32> to vector<16x1xf32>
    %cst_7 = arith.constant 3.200000e+01 : f32
    %12 = vector.broadcast %cst_7 : f32 to vector<16x1xf32>
    %13 = arith.divf %11, %12 : vector<16x1xf32>
    %14 = vector.broadcast %6 : vector<16x1xf32> to vector<16x32xf32>
    %15 = arith.subf %0, %14 : vector<16x32xf32>
    %cst_8 = arith.constant 9.99999974E-6 : f32
    %16 = vector.broadcast %cst_8 : f32 to vector<16x1xf32>
    %17 = arith.addf %13, %16 : vector<16x1xf32>
    %18 = math.rsqrt %17 : vector<16x1xf32>
    %19 = vector.broadcast %18 : vector<16x1xf32> to vector<16x32xf32>
    %20 = arith.mulf %15, %19 : vector<16x32xf32>
    %21 = vector.broadcast %1 : vector<1x32xf32> to vector<16x32xf32>
    %22 = arith.mulf %20, %21 : vector<16x32xf32>
    %23 = vector.broadcast %2 : vector<1x32xf32> to vector<16x32xf32>
    %24 = arith.addf %22, %23 : vector<16x32xf32>
    %c0_9 = arith.constant 0 : index
    %c0_10 = arith.constant 0 : index
    %25 = vector.load %arg4[%c0_9, %c0_10] : memref<32x128xf32, #tpu.memory_space<vmem>>, vector<32x128xf32>
    %26 = arith.truncf %24 : vector<16x32xf32> to vector<16x32xbf16>
    %27 = arith.truncf %25 : vector<32x128xf32> to vector<32x128xbf16>
    %cst_11 = arith.constant dense<0.000000e+00> : vector<16x128xf32>
    %28 = tpu.matmul %26, %27, %cst_11 {dimension_numbers = #tpu.dot_dimension_numbers<[1], [0], [0], [1], [0, 0, 1, 1], [], []>} : vector<16x32xbf16>, vector<32x128xbf16>, vector<16x128xf32> -> vector<16x128xf32>
    %c0_12 = arith.constant 0 : index
    %c0_13 = arith.constant 0 : index
    %29 = vector.load %arg5[%c0_12, %c0_13] : memref<1x128xf32, #tpu.memory_space<vmem>>, vector<1x128xf32>
    %30 = vector.broadcast %29 : vector<1x128xf32> to vector<16x128xf32>
    %31 = arith.addf %28, %30 : vector<16x128xf32>
    %cst_14 = arith.constant 0.000000e+00 : f32
    %32 = vector.broadcast %cst_14 : f32 to vector<16x128xf32>
    %33 = arith.maximumf %31, %32 : vector<16x128xf32>
    %c0_15 = arith.constant 0 : index
    %c0_16 = arith.constant 0 : index
    %34 = vector.load %arg6[%c0_15, %c0_16] : memref<128x32xf32, #tpu.memory_space<vmem>>, vector<128x32xf32>
    %35 = arith.truncf %33 : vector<16x128xf32> to vector<16x128xbf16>
    %36 = arith.truncf %34 : vector<128x32xf32> to vector<128x32xbf16>
    %cst_17 = arith.constant dense<0.000000e+00> : vector<16x32xf32>
    %37 = tpu.matmul %35, %36, %cst_17 {dimension_numbers = #tpu.dot_dimension_numbers<[1], [0], [0], [1], [0, 0, 1, 1], [], []>} : vector<16x128xbf16>, vector<128x32xbf16>, vector<16x32xf32> -> vector<16x32xf32>
    %38 = arith.addf %0, %37 : vector<16x32xf32>
    %c0_18 = arith.constant 0 : index
    %c0_19 = arith.constant 0 : index
    %39 = vector.load %arg7[%c0_18, %c0_19] : memref<1x32xf32, #tpu.memory_space<vmem>>, vector<1x32xf32>
    %40 = vector.broadcast %39 : vector<1x32xf32> to vector<16x32xf32>
    %41 = arith.addf %38, %40 : vector<16x32xf32>
    %c0_20 = arith.constant 0 : index
    %c0_21 = arith.constant 0 : index
    %42 = vector.load %arg8[%c0_20, %c0_21] : memref<16x32xf32, #tpu.memory_space<vmem>>, vector<16x32xf32>
    tpu.vector_store %arg8[%c0_20, %c0_21], %41 {strides = array<i32>} : memref<16x32xf32, #tpu.memory_space<vmem>>, vector<16x32xf32>,
    return
  }
  func.func @transform_0(%arg0: i32) -> (i32, i32) {
    %c0_i32 = arith.constant 0 : i32
    %c0_i32_0 = arith.constant 0 : i32
    %c0_i32_1 = arith.constant 0 : i32
    return %c0_i32, %c0_i32_0 : i32, i32
  }
  func.func @transform_1(%arg0: i32) -> (i32, i32) {
    %c0_i32 = arith.constant 0 : i32
    %c0_i32_0 = arith.constant 0 : i32
    %c0_i32_1 = arith.constant 0 : i32
    return %c0_i32, %c0_i32_0 : i32, i32
  }
  func.func @transform_2(%arg0: i32) -> (i32, i32) {
    %c0_i32 = arith.constant 0 : i32
    %c0_i32_0 = arith.constant 0 : i32
    %c0_i32_1 = arith.constant 0 : i32
    return %c0_i32, %c0_i32_0 : i32, i32
  }
  func.func @transform_3(%arg0: i32) -> (i32, i32) {
    %c0_i32 = arith.constant 0 : i32
    %c0_i32_0 = arith.constant 0 : i32
    %c0_i32_1 = arith.constant 0 : i32
    return %c0_i32, %c0_i32_0 : i32, i32
  }
  func.func @transform_4(%arg0: i32) -> (i32, i32) {
    %c0_i32 = arith.constant 0 : i32
    %c0_i32_0 = arith.constant 0 : i32
    %c0_i32_1 = arith.constant 0 : i32
    return %c0_i32, %c0_i32_0 : i32, i32
  }
  func.func @transform_5(%arg0: i32) -> (i32, i32) {
    %c0_i32 = arith.constant 0 : i32
    %c0_i32_0 = arith.constant 0 : i32
    %c0_i32_1 = arith.constant 0 : i32
    return %c0_i32, %c0_i32_0 : i32, i32
  }
  func.func @transform_6(%arg0: i32) -> (i32, i32) {
    %c0_i32 = arith.constant 0 : i32
    %c0_i32_0 = arith.constant 0 : i32
    %c0_i32_1 = arith.constant 0 : i32
    return %c0_i32, %c0_i32_0 : i32, i32
  }
  func.func @transform_7(%arg0: i32) -> (i32, i32) {
    %c0_i32 = arith.constant 0 : i32
    %c0_i32_0 = arith.constant 0 : i32
    %c0_i32_1 = arith.constant 0 : i32
    return %c0_i32, %c0_i32_0 : i32, i32
  }
}

module attributes {stable_mosaic.version = 11 : i64} {
  func.func @_layernorm_kernel(%arg0: i32, %arg1: memref<16x32xf32, #tpu.memory_space<vmem>>, %arg2: memref<1x32xf32, #tpu.memory_space<vmem>>, %arg3: memref<1x32xf32, #tpu.memory_space<vmem>>, %arg4: memref<16x32xf32, #tpu.memory_space<vmem>>) attributes {dimension_semantics = [#tpu.dimension_semantics<arbitrary>], iteration_bounds = array<i64: 1>, scalar_prefetch = 0 : i64, scratch_operands = 0 : i64, tpu.core_type = #tpu.core_type<tc>, window_params = [{pipeline_mode = #tpu.pipeline_mode<synchronous>, transform_indices = @transform_0, window_bounds = array<i64: 16, 32>}, {pipeline_mode = #tpu.pipeline_mode<synchronous>, transform_indices = @transform_1, window_bounds = array<i64: 1, 32>}, {pipeline_mode = #tpu.pipeline_mode<synchronous>, transform_indices = @transform_2, window_bounds = array<i64: 1, 32>}, {pipeline_mode = #tpu.pipeline_mode<synchronous>, transform_indices = @transform_3, window_bounds = array<i64: 16, 32>}]} {
    %c0 = arith.constant 0 : index
    %c0_0 = arith.constant 0 : index
    %0 = vector.load %arg1[%c0, %c0_0] : memref<16x32xf32, #tpu.memory_space<vmem>>, vector<16x32xf32>
    %c0_1 = arith.constant 0 : index
    %c0_2 = arith.constant 0 : index
    %1 = vector.load %arg2[%c0_1, %c0_2] : memref<1x32xf32, #tpu.memory_space<vmem>>, vector<1x32xf32>
    %c0_3 = arith.constant 0 : index
    %c0_4 = arith.constant 0 : index
    %2 = vector.load %arg3[%c0_3, %c0_4] : memref<1x32xf32, #tpu.memory_space<vmem>>, vector<1x32xf32>
    %cst = arith.constant dense<0.000000e+00> : vector<16xf32>
    %3 = vector.multi_reduction <add>, %0, %cst [1] : vector<16x32xf32> to vector<16xf32>
    %4 = vector.shape_cast %3 : vector<16xf32> to vector<16x1xf32>
    %cst_5 = arith.constant 3.200000e+01 : f32
    %5 = vector.broadcast %cst_5 : f32 to vector<16x1xf32>
    %6 = arith.divf %4, %5 : vector<16x1xf32>
    %7 = vector.broadcast %6 : vector<16x1xf32> to vector<16x32xf32>
    %8 = arith.subf %0, %7 : vector<16x32xf32>
    %9 = arith.mulf %8, %8 : vector<16x32xf32>
    %cst_6 = arith.constant dense<0.000000e+00> : vector<16xf32>
    %10 = vector.multi_reduction <add>, %9, %cst_6 [1] : vector<16x32xf32> to vector<16xf32>
    %11 = vector.shape_cast %10 : vector<16xf32> to vector<16x1xf32>
    %cst_7 = arith.constant 3.200000e+01 : f32
    %12 = vector.broadcast %cst_7 : f32 to vector<16x1xf32>
    %13 = arith.divf %11, %12 : vector<16x1xf32>
    %14 = vector.broadcast %6 : vector<16x1xf32> to vector<16x32xf32>
    %15 = arith.subf %0, %14 : vector<16x32xf32>
    %cst_8 = arith.constant 9.99999974E-6 : f32
    %16 = vector.broadcast %cst_8 : f32 to vector<16x1xf32>
    %17 = arith.addf %13, %16 : vector<16x1xf32>
    %18 = math.rsqrt %17 : vector<16x1xf32>
    %19 = vector.broadcast %18 : vector<16x1xf32> to vector<16x32xf32>
    %20 = arith.mulf %15, %19 : vector<16x32xf32>
    %21 = vector.broadcast %1 : vector<1x32xf32> to vector<16x32xf32>
    %22 = arith.mulf %20, %21 : vector<16x32xf32>
    %23 = vector.broadcast %2 : vector<1x32xf32> to vector<16x32xf32>
    %24 = arith.addf %22, %23 : vector<16x32xf32>
    %c0_9 = arith.constant 0 : index
    %c0_10 = arith.constant 0 : index
    %25 = vector.load %arg4[%c0_9, %c0_10] : memref<16x32xf32, #tpu.memory_space<vmem>>, vector<16x32xf32>
    tpu.vector_store %arg4[%c0_9, %c0_10], %24 {strides = array<i32>} : memref<16x32xf32, #tpu.memory_space<vmem>>, vector<16x32xf32>,
    return
  }
  func.func @transform_0(%arg0: i32) -> (i32, i32) {
    %c0_i32 = arith.constant 0 : i32
    %c0_i32_0 = arith.constant 0 : i32
    %c0_i32_1 = arith.constant 0 : i32
    return %c0_i32, %c0_i32_0 : i32, i32
  }
  func.func @transform_1(%arg0: i32) -> (i32, i32) {
    %c0_i32 = arith.constant 0 : i32
    %c0_i32_0 = arith.constant 0 : i32
    %c0_i32_1 = arith.constant 0 : i32
    return %c0_i32, %c0_i32_0 : i32, i32
  }
  func.func @transform_2(%arg0: i32) -> (i32, i32) {
    %c0_i32 = arith.constant 0 : i32
    %c0_i32_0 = arith.constant 0 : i32
    %c0_i32_1 = arith.constant 0 : i32
    return %c0_i32, %c0_i32_0 : i32, i32
  }
  func.func @transform_3(%arg0: i32) -> (i32, i32) {
    %c0_i32 = arith.constant 0 : i32
    %c0_i32_0 = arith.constant 0 : i32
    %c0_i32_1 = arith.constant 0 : i32
    return %c0_i32, %c0_i32_0 : i32, i32
  }
}

module attributes {stable_mosaic.version = 11 : i64} {
  func.func @_ln_linear_kernel(%arg0: i32, %arg1: memref<14x32xf32, #tpu.memory_space<vmem>>, %arg2: memref<1x32xf32, #tpu.memory_space<vmem>>, %arg3: memref<1x32xf32, #tpu.memory_space<vmem>>, %arg4: memref<32x128xf32, #tpu.memory_space<vmem>>, %arg5: memref<1x128xf32, #tpu.memory_space<vmem>>, %arg6: memref<14x128xf32, #tpu.memory_space<vmem>>) attributes {dimension_semantics = [#tpu.dimension_semantics<arbitrary>], iteration_bounds = array<i64: 1>, scalar_prefetch = 0 : i64, scratch_operands = 0 : i64, tpu.core_type = #tpu.core_type<tc>, window_params = [{pipeline_mode = #tpu.pipeline_mode<synchronous>, transform_indices = @transform_0, window_bounds = array<i64: 14, 32>}, {pipeline_mode = #tpu.pipeline_mode<synchronous>, transform_indices = @transform_1, window_bounds = array<i64: 1, 32>}, {pipeline_mode = #tpu.pipeline_mode<synchronous>, transform_indices = @transform_2, window_bounds = array<i64: 1, 32>}, {pipeline_mode = #tpu.pipeline_mode<synchronous>, transform_indices = @transform_3, window_bounds = array<i64: 32, 128>}, {pipeline_mode = #tpu.pipeline_mode<synchronous>, transform_indices = @transform_4, window_bounds = array<i64: 1, 128>}, {pipeline_mode = #tpu.pipeline_mode<synchronous>, transform_indices = @transform_5, window_bounds = array<i64: 14, 128>}]} {
    %c0 = arith.constant 0 : index
    %c0_0 = arith.constant 0 : index
    %0 = vector.load %arg1[%c0, %c0_0] : memref<14x32xf32, #tpu.memory_space<vmem>>, vector<14x32xf32>
    %c0_1 = arith.constant 0 : index
    %c0_2 = arith.constant 0 : index
    %1 = vector.load %arg2[%c0_1, %c0_2] : memref<1x32xf32, #tpu.memory_space<vmem>>, vector<1x32xf32>
    %c0_3 = arith.constant 0 : index
    %c0_4 = arith.constant 0 : index
    %2 = vector.load %arg3[%c0_3, %c0_4] : memref<1x32xf32, #tpu.memory_space<vmem>>, vector<1x32xf32>
    %cst = arith.constant dense<0.000000e+00> : vector<14xf32>
    %3 = vector.multi_reduction <add>, %0, %cst [1] : vector<14x32xf32> to vector<14xf32>
    %4 = vector.shape_cast %3 : vector<14xf32> to vector<14x1xf32>
    %cst_5 = arith.constant 3.200000e+01 : f32
    %5 = vector.broadcast %cst_5 : f32 to vector<14x1xf32>
    %6 = arith.divf %4, %5 : vector<14x1xf32>
    %7 = vector.broadcast %6 : vector<14x1xf32> to vector<14x32xf32>
    %8 = arith.subf %0, %7 : vector<14x32xf32>
    %9 = arith.mulf %8, %8 : vector<14x32xf32>
    %cst_6 = arith.constant dense<0.000000e+00> : vector<14xf32>
    %10 = vector.multi_reduction <add>, %9, %cst_6 [1] : vector<14x32xf32> to vector<14xf32>
    %11 = vector.shape_cast %10 : vector<14xf32> to vector<14x1xf32>
    %cst_7 = arith.constant 3.200000e+01 : f32
    %12 = vector.broadcast %cst_7 : f32 to vector<14x1xf32>
    %13 = arith.divf %11, %12 : vector<14x1xf32>
    %14 = vector.broadcast %6 : vector<14x1xf32> to vector<14x32xf32>
    %15 = arith.subf %0, %14 : vector<14x32xf32>
    %cst_8 = arith.constant 9.99999974E-6 : f32
    %16 = vector.broadcast %cst_8 : f32 to vector<14x1xf32>
    %17 = arith.addf %13, %16 : vector<14x1xf32>
    %18 = math.rsqrt %17 : vector<14x1xf32>
    %19 = vector.broadcast %18 : vector<14x1xf32> to vector<14x32xf32>
    %20 = arith.mulf %15, %19 : vector<14x32xf32>
    %21 = vector.broadcast %1 : vector<1x32xf32> to vector<14x32xf32>
    %22 = arith.mulf %20, %21 : vector<14x32xf32>
    %23 = vector.broadcast %2 : vector<1x32xf32> to vector<14x32xf32>
    %24 = arith.addf %22, %23 : vector<14x32xf32>
    %c0_9 = arith.constant 0 : index
    %c0_10 = arith.constant 0 : index
    %25 = vector.load %arg4[%c0_9, %c0_10] : memref<32x128xf32, #tpu.memory_space<vmem>>, vector<32x128xf32>
    %26 = arith.truncf %24 : vector<14x32xf32> to vector<14x32xbf16>
    %27 = arith.truncf %25 : vector<32x128xf32> to vector<32x128xbf16>
    %cst_11 = arith.constant dense<0.000000e+00> : vector<14x128xf32>
    %28 = tpu.matmul %26, %27, %cst_11 {dimension_numbers = #tpu.dot_dimension_numbers<[1], [0], [0], [1], [0, 0, 1, 1], [], []>} : vector<14x32xbf16>, vector<32x128xbf16>, vector<14x128xf32> -> vector<14x128xf32>
    %c0_12 = arith.constant 0 : index
    %c0_13 = arith.constant 0 : index
    %29 = vector.load %arg5[%c0_12, %c0_13] : memref<1x128xf32, #tpu.memory_space<vmem>>, vector<1x128xf32>
    %30 = vector.broadcast %29 : vector<1x128xf32> to vector<14x128xf32>
    %31 = arith.addf %28, %30 : vector<14x128xf32>
    %c0_14 = arith.constant 0 : index
    %c0_15 = arith.constant 0 : index
    %32 = vector.load %arg6[%c0_14, %c0_15] : memref<14x128xf32, #tpu.memory_space<vmem>>, vector<14x128xf32>
    tpu.vector_store %arg6[%c0_14, %c0_15], %31 {strides = array<i32>} : memref<14x128xf32, #tpu.memory_space<vmem>>, vector<14x128xf32>,
    return
  }
  func.func @transform_0(%arg0: i32) -> (i32, i32) {
    %c0_i32 = arith.constant 0 : i32
    %c0_i32_0 = arith.constant 0 : i32
    %c0_i32_1 = arith.constant 0 : i32
    return %c0_i32, %c0_i32_0 : i32, i32
  }
  func.func @transform_1(%arg0: i32) -> (i32, i32) {
    %c0_i32 = arith.constant 0 : i32
    %c0_i32_0 = arith.constant 0 : i32
    %c0_i32_1 = arith.constant 0 : i32
    return %c0_i32, %c0_i32_0 : i32, i32
  }
  func.func @transform_2(%arg0: i32) -> (i32, i32) {
    %c0_i32 = arith.constant 0 : i32
    %c0_i32_0 = arith.constant 0 : i32
    %c0_i32_1 = arith.constant 0 : i32
    return %c0_i32, %c0_i32_0 : i32, i32
  }
  func.func @transform_3(%arg0: i32) -> (i32, i32) {
    %c0_i32 = arith.constant 0 : i32
    %c0_i32_0 = arith.constant 0 : i32
    %c0_i32_1 = arith.constant 0 : i32
    return %c0_i32, %c0_i32_0 : i32, i32
  }
  func.func @transform_4(%arg0: i32) -> (i32, i32) {
    %c0_i32 = arith.constant 0 : i32
    %c0_i32_0 = arith.constant 0 : i32
    %c0_i32_1 = arith.constant 0 : i32
    return %c0_i32, %c0_i32_0 : i32, i32
  }
  func.func @transform_5(%arg0: i32) -> (i32, i32) {
    %c0_i32 = arith.constant 0 : i32
    %c0_i32_0 = arith.constant 0 : i32
    %c0_i32_1 = arith.constant 0 : i32
    return %c0_i32, %c0_i32_0 : i32, i32
  }
}

module attributes {stable_mosaic.version = 11 : i64} {
  func.func @_mha_attn_kernel(%arg0: i32, %arg1: memref<1x7x32xf32, #tpu.memory_space<vmem>>, %arg2: memref<1x7x64xf32, #tpu.memory_space<vmem>>, %arg3: memref<1x7x7xf32, #tpu.memory_space<vmem>>, %arg4: memref<1x7x32xf32, #tpu.memory_space<vmem>>) attributes {dimension_semantics = [#tpu.dimension_semantics<parallel>], iteration_bounds = array<i64: 2>, scalar_prefetch = 0 : i64, scratch_operands = 0 : i64, tpu.core_type = #tpu.core_type<tc>, window_params = [{transform_indices = @transform_0, window_bounds = array<i64: 1, 7, 32>}, {transform_indices = @transform_1, window_bounds = array<i64: 1, 7, 64>}, {transform_indices = @transform_2, window_bounds = array<i64: 1, 7, 7>}, {transform_indices = @transform_3, window_bounds = array<i64: 1, 7, 32>}]} {
    %c0 = arith.constant 0 : index
    %c0_0 = arith.constant 0 : index
    %c0_1 = arith.constant 0 : index
    %0 = vector.load %arg1[%c0, %c0_0, %c0_1] : memref<1x7x32xf32, #tpu.memory_space<vmem>>, vector<1x7x32xf32>
    %1 = vector.shape_cast %0 : vector<1x7x32xf32> to vector<7x32xf32>
    %c0_2 = arith.constant 0 : index
    %c0_3 = arith.constant 0 : index
    %c0_4 = arith.constant 0 : index
    %2 = vector.load %arg2[%c0_2, %c0_3, %c0_4] : memref<1x7x64xf32, #tpu.memory_space<vmem>>, vector<1x7x64xf32>
    %3 = vector.shape_cast %2 : vector<1x7x64xf32> to vector<7x64xf32>
    %c0_5 = arith.constant 0 : index
    %c0_6 = arith.constant 0 : index
    %c0_7 = arith.constant 0 : index
    %4 = vector.load %arg3[%c0_5, %c0_6, %c0_7] : memref<1x7x7xf32, #tpu.memory_space<vmem>>, vector<1x7x7xf32>
    %5 = vector.shape_cast %4 : vector<1x7x7xf32> to vector<7x7xf32>
    %6 = vector.extract_strided_slice %1 {offsets = [0, 0], sizes = [7, 8], strides = [1, 1]} : vector<7x32xf32> to vector<7x8xf32>
    %7 = arith.truncf %6 : vector<7x8xf32> to vector<7x8xbf16>
    %8 = vector.extract_strided_slice %3 {offsets = [0, 0], sizes = [7, 8], strides = [1, 1]} : vector<7x64xf32> to vector<7x8xf32>
    %9 = arith.truncf %8 : vector<7x8xf32> to vector<7x8xbf16>
    %10 = vector.extract_strided_slice %3 {offsets = [0, 32], sizes = [7, 8], strides = [1, 1]} : vector<7x64xf32> to vector<7x8xf32>
    %11 = arith.truncf %10 : vector<7x8xf32> to vector<7x8xbf16>
    %12 = tpu.transpose %9, [1, 0] : vector<7x8xbf16> -> vector<8x7xbf16>
    %cst = arith.constant dense<0.000000e+00> : vector<7x7xf32>
    %13 = tpu.matmul %7, %12, %cst {dimension_numbers = #tpu.dot_dimension_numbers<[1], [0], [0], [1], [0, 0, 1, 1], [], []>} : vector<7x8xbf16>, vector<8x7xbf16>, vector<7x7xf32> -> vector<7x7xf32>
    %cst_8 = arith.constant 0.353553385 : f32
    %14 = vector.broadcast %cst_8 : f32 to vector<7x7xf32>
    %15 = arith.mulf %13, %14 : vector<7x7xf32>
    %16 = arith.addf %15, %5 : vector<7x7xf32>
    %cst_9 = arith.constant dense<0xFF800000> : vector<7xf32>
    %17 = vector.multi_reduction <maximumf>, %16, %cst_9 [1] : vector<7x7xf32> to vector<7xf32>
    %18 = vector.shape_cast %17 : vector<7xf32> to vector<7x1xf32>
    %19 = vector.broadcast %18 : vector<7x1xf32> to vector<7x7xf32>
    %20 = arith.subf %16, %19 : vector<7x7xf32>
    %21 = math.exp %20 : vector<7x7xf32>
    %cst_10 = arith.constant dense<0.000000e+00> : vector<7xf32>
    %22 = vector.multi_reduction <add>, %21, %cst_10 [1] : vector<7x7xf32> to vector<7xf32>
    %23 = vector.shape_cast %22 : vector<7xf32> to vector<7x1xf32>
    %24 = tpu.reciprocal %23 {approx = true} : vector<7x1xf32> -> vector<7x1xf32>
    %25 = vector.broadcast %24 : vector<7x1xf32> to vector<7x7xf32>
    %26 = arith.mulf %21, %25 : vector<7x7xf32>
    %27 = arith.truncf %26 : vector<7x7xf32> to vector<7x7xbf16>
    %cst_11 = arith.constant dense<0.000000e+00> : vector<7x8xf32>
    %28 = tpu.matmul %27, %11, %cst_11 {dimension_numbers = #tpu.dot_dimension_numbers<[1], [0], [0], [1], [0, 0, 1, 1], [], []>} : vector<7x7xbf16>, vector<7x8xbf16>, vector<7x8xf32> -> vector<7x8xf32>
    %29 = vector.extract_strided_slice %1 {offsets = [0, 8], sizes = [7, 8], strides = [1, 1]} : vector<7x32xf32> to vector<7x8xf32>
    %30 = arith.truncf %29 : vector<7x8xf32> to vector<7x8xbf16>
    %31 = vector.extract_strided_slice %3 {offsets = [0, 8], sizes = [7, 8], strides = [1, 1]} : vector<7x64xf32> to vector<7x8xf32>
    %32 = arith.truncf %31 : vector<7x8xf32> to vector<7x8xbf16>
    %33 = vector.extract_strided_slice %3 {offsets = [0, 40], sizes = [7, 8], strides = [1, 1]} : vector<7x64xf32> to vector<7x8xf32>
    %34 = arith.truncf %33 : vector<7x8xf32> to vector<7x8xbf16>
    %35 = tpu.transpose %32, [1, 0] : vector<7x8xbf16> -> vector<8x7xbf16>
    %cst_12 = arith.constant dense<0.000000e+00> : vector<7x7xf32>
    %36 = tpu.matmul %30, %35, %cst_12 {dimension_numbers = #tpu.dot_dimension_numbers<[1], [0], [0], [1], [0, 0, 1, 1], [], []>} : vector<7x8xbf16>, vector<8x7xbf16>, vector<7x7xf32> -> vector<7x7xf32>
    %cst_13 = arith.constant 0.353553385 : f32
    %37 = vector.broadcast %cst_13 : f32 to vector<7x7xf32>
    %38 = arith.mulf %36, %37 : vector<7x7xf32>
    %39 = arith.addf %38, %5 : vector<7x7xf32>
    %cst_14 = arith.constant dense<0xFF800000> : vector<7xf32>
    %40 = vector.multi_reduction <maximumf>, %39, %cst_14 [1] : vector<7x7xf32> to vector<7xf32>
    %41 = vector.shape_cast %40 : vector<7xf32> to vector<7x1xf32>
    %42 = vector.broadcast %41 : vector<7x1xf32> to vector<7x7xf32>
    %43 = arith.subf %39, %42 : vector<7x7xf32>
    %44 = math.exp %43 : vector<7x7xf32>
    %cst_15 = arith.constant dense<0.000000e+00> : vector<7xf32>
    %45 = vector.multi_reduction <add>, %44, %cst_15 [1] : vector<7x7xf32> to vector<7xf32>
    %46 = vector.shape_cast %45 : vector<7xf32> to vector<7x1xf32>
    %47 = tpu.reciprocal %46 {approx = true} : vector<7x1xf32> -> vector<7x1xf32>
    %48 = vector.broadcast %47 : vector<7x1xf32> to vector<7x7xf32>
    %49 = arith.mulf %44, %48 : vector<7x7xf32>
    %50 = arith.truncf %49 : vector<7x7xf32> to vector<7x7xbf16>
    %cst_16 = arith.constant dense<0.000000e+00> : vector<7x8xf32>
    %51 = tpu.matmul %50, %34, %cst_16 {dimension_numbers = #tpu.dot_dimension_numbers<[1], [0], [0], [1], [0, 0, 1, 1], [], []>} : vector<7x7xbf16>, vector<7x8xbf16>, vector<7x8xf32> -> vector<7x8xf32>
    %52 = vector.extract_strided_slice %1 {offsets = [0, 16], sizes = [7, 8], strides = [1, 1]} : vector<7x32xf32> to vector<7x8xf32>
    %53 = arith.truncf %52 : vector<7x8xf32> to vector<7x8xbf16>
    %54 = vector.extract_strided_slice %3 {offsets = [0, 16], sizes = [7, 8], strides = [1, 1]} : vector<7x64xf32> to vector<7x8xf32>
    %55 = arith.truncf %54 : vector<7x8xf32> to vector<7x8xbf16>
    %56 = vector.extract_strided_slice %3 {offsets = [0, 48], sizes = [7, 8], strides = [1, 1]} : vector<7x64xf32> to vector<7x8xf32>
    %57 = arith.truncf %56 : vector<7x8xf32> to vector<7x8xbf16>
    %58 = tpu.transpose %55, [1, 0] : vector<7x8xbf16> -> vector<8x7xbf16>
    %cst_17 = arith.constant dense<0.000000e+00> : vector<7x7xf32>
    %59 = tpu.matmul %53, %58, %cst_17 {dimension_numbers = #tpu.dot_dimension_numbers<[1], [0], [0], [1], [0, 0, 1, 1], [], []>} : vector<7x8xbf16>, vector<8x7xbf16>, vector<7x7xf32> -> vector<7x7xf32>
    %cst_18 = arith.constant 0.353553385 : f32
    %60 = vector.broadcast %cst_18 : f32 to vector<7x7xf32>
    %61 = arith.mulf %59, %60 : vector<7x7xf32>
    %62 = arith.addf %61, %5 : vector<7x7xf32>
    %cst_19 = arith.constant dense<0xFF800000> : vector<7xf32>
    %63 = vector.multi_reduction <maximumf>, %62, %cst_19 [1] : vector<7x7xf32> to vector<7xf32>
    %64 = vector.shape_cast %63 : vector<7xf32> to vector<7x1xf32>
    %65 = vector.broadcast %64 : vector<7x1xf32> to vector<7x7xf32>
    %66 = arith.subf %62, %65 : vector<7x7xf32>
    %67 = math.exp %66 : vector<7x7xf32>
    %cst_20 = arith.constant dense<0.000000e+00> : vector<7xf32>
    %68 = vector.multi_reduction <add>, %67, %cst_20 [1] : vector<7x7xf32> to vector<7xf32>
    %69 = vector.shape_cast %68 : vector<7xf32> to vector<7x1xf32>
    %70 = tpu.reciprocal %69 {approx = true} : vector<7x1xf32> -> vector<7x1xf32>
    %71 = vector.broadcast %70 : vector<7x1xf32> to vector<7x7xf32>
    %72 = arith.mulf %67, %71 : vector<7x7xf32>
    %73 = arith.truncf %72 : vector<7x7xf32> to vector<7x7xbf16>
    %cst_21 = arith.constant dense<0.000000e+00> : vector<7x8xf32>
    %74 = tpu.matmul %73, %57, %cst_21 {dimension_numbers = #tpu.dot_dimension_numbers<[1], [0], [0], [1], [0, 0, 1, 1], [], []>} : vector<7x7xbf16>, vector<7x8xbf16>, vector<7x8xf32> -> vector<7x8xf32>
    %75 = vector.extract_strided_slice %1 {offsets = [0, 24], sizes = [7, 8], strides = [1, 1]} : vector<7x32xf32> to vector<7x8xf32>
    %76 = arith.truncf %75 : vector<7x8xf32> to vector<7x8xbf16>
    %77 = vector.extract_strided_slice %3 {offsets = [0, 24], sizes = [7, 8], strides = [1, 1]} : vector<7x64xf32> to vector<7x8xf32>
    %78 = arith.truncf %77 : vector<7x8xf32> to vector<7x8xbf16>
    %79 = vector.extract_strided_slice %3 {offsets = [0, 56], sizes = [7, 8], strides = [1, 1]} : vector<7x64xf32> to vector<7x8xf32>
    %80 = arith.truncf %79 : vector<7x8xf32> to vector<7x8xbf16>
    %81 = tpu.transpose %78, [1, 0] : vector<7x8xbf16> -> vector<8x7xbf16>
    %cst_22 = arith.constant dense<0.000000e+00> : vector<7x7xf32>
    %82 = tpu.matmul %76, %81, %cst_22 {dimension_numbers = #tpu.dot_dimension_numbers<[1], [0], [0], [1], [0, 0, 1, 1], [], []>} : vector<7x8xbf16>, vector<8x7xbf16>, vector<7x7xf32> -> vector<7x7xf32>
    %cst_23 = arith.constant 0.353553385 : f32
    %83 = vector.broadcast %cst_23 : f32 to vector<7x7xf32>
    %84 = arith.mulf %82, %83 : vector<7x7xf32>
    %85 = arith.addf %84, %5 : vector<7x7xf32>
    %cst_24 = arith.constant dense<0xFF800000> : vector<7xf32>
    %86 = vector.multi_reduction <maximumf>, %85, %cst_24 [1] : vector<7x7xf32> to vector<7xf32>
    %87 = vector.shape_cast %86 : vector<7xf32> to vector<7x1xf32>
    %88 = vector.broadcast %87 : vector<7x1xf32> to vector<7x7xf32>
    %89 = arith.subf %85, %88 : vector<7x7xf32>
    %90 = math.exp %89 : vector<7x7xf32>
    %cst_25 = arith.constant dense<0.000000e+00> : vector<7xf32>
    %91 = vector.multi_reduction <add>, %90, %cst_25 [1] : vector<7x7xf32> to vector<7xf32>
    %92 = vector.shape_cast %91 : vector<7xf32> to vector<7x1xf32>
    %93 = tpu.reciprocal %92 {approx = true} : vector<7x1xf32> -> vector<7x1xf32>
    %94 = vector.broadcast %93 : vector<7x1xf32> to vector<7x7xf32>
    %95 = arith.mulf %90, %94 : vector<7x7xf32>
    %96 = arith.truncf %95 : vector<7x7xf32> to vector<7x7xbf16>
    %cst_26 = arith.constant dense<0.000000e+00> : vector<7x8xf32>
    %97 = tpu.matmul %96, %80, %cst_26 {dimension_numbers = #tpu.dot_dimension_numbers<[1], [0], [0], [1], [0, 0, 1, 1], [], []>} : vector<7x7xbf16>, vector<7x8xbf16>, vector<7x8xf32> -> vector<7x8xf32>
    %98 = tpu.concatenate %28, %51, %74, %97 in 1 : vector<7x8xf32>, vector<7x8xf32>, vector<7x8xf32>, vector<7x8xf32> -> vector<7x32xf32>
    %c0_27 = arith.constant 0 : index
    %c0_28 = arith.constant 0 : index
    %c0_29 = arith.constant 0 : index
    %99 = vector.load %arg4[%c0_27, %c0_28, %c0_29] : memref<1x7x32xf32, #tpu.memory_space<vmem>>, vector<1x7x32xf32>
    %100 = vector.shape_cast %99 : vector<1x7x32xf32> to vector<7x32xf32>
    %101 = vector.shape_cast %98 : vector<7x32xf32> to vector<1x7x32xf32>
    tpu.vector_store %arg4[%c0_27, %c0_28, %c0_29], %101 {strides = array<i32>} : memref<1x7x32xf32, #tpu.memory_space<vmem>>, vector<1x7x32xf32>,
    return
  }
  func.func @transform_0(%arg0: i32) -> (i32, i32, i32) {
    %c0_i32 = arith.constant 0 : i32
    %c0_i32_0 = arith.constant 0 : i32
    %c0_i32_1 = arith.constant 0 : i32
    return %arg0, %c0_i32, %c0_i32_0 : i32, i32, i32
  }
  func.func @transform_1(%arg0: i32) -> (i32, i32, i32) {
    %c0_i32 = arith.constant 0 : i32
    %c0_i32_0 = arith.constant 0 : i32
    %c0_i32_1 = arith.constant 0 : i32
    return %arg0, %c0_i32, %c0_i32_0 : i32, i32, i32
  }
  func.func @transform_2(%arg0: i32) -> (i32, i32, i32) {
    %c0_i32 = arith.constant 0 : i32
    %c0_i32_0 = arith.constant 0 : i32
    %c0_i32_1 = arith.constant 0 : i32
    return %arg0, %c0_i32, %c0_i32_0 : i32, i32, i32
  }
  func.func @transform_3(%arg0: i32) -> (i32, i32, i32) {
    %c0_i32 = arith.constant 0 : i32
    %c0_i32_0 = arith.constant 0 : i32
    %c0_i32_1 = arith.constant 0 : i32
    return %arg0, %c0_i32, %c0_i32_0 : i32, i32, i32
  }
}

module attributes {stable_mosaic.version = 11 : i64} {
  func.func @_linear_kernel(%arg0: i32, %arg1: memref<14x32xf32, #tpu.memory_space<vmem>>, %arg2: memref<32x128xf32, #tpu.memory_space<vmem>>, %arg3: memref<1x128xf32, #tpu.memory_space<vmem>>, %arg4: memref<14x128xf32, #tpu.memory_space<vmem>>) attributes {dimension_semantics = [#tpu.dimension_semantics<arbitrary>], iteration_bounds = array<i64: 1>, scalar_prefetch = 0 : i64, scratch_operands = 0 : i64, tpu.core_type = #tpu.core_type<tc>, window_params = [{pipeline_mode = #tpu.pipeline_mode<synchronous>, transform_indices = @transform_0, window_bounds = array<i64: 14, 32>}, {pipeline_mode = #tpu.pipeline_mode<synchronous>, transform_indices = @transform_1, window_bounds = array<i64: 32, 128>}, {pipeline_mode = #tpu.pipeline_mode<synchronous>, transform_indices = @transform_2, window_bounds = array<i64: 1, 128>}, {pipeline_mode = #tpu.pipeline_mode<synchronous>, transform_indices = @transform_3, window_bounds = array<i64: 14, 128>}]} {
    %c0 = arith.constant 0 : index
    %c0_0 = arith.constant 0 : index
    %0 = vector.load %arg1[%c0, %c0_0] : memref<14x32xf32, #tpu.memory_space<vmem>>, vector<14x32xf32>
    %c0_1 = arith.constant 0 : index
    %c0_2 = arith.constant 0 : index
    %1 = vector.load %arg2[%c0_1, %c0_2] : memref<32x128xf32, #tpu.memory_space<vmem>>, vector<32x128xf32>
    %2 = arith.truncf %0 : vector<14x32xf32> to vector<14x32xbf16>
    %3 = arith.truncf %1 : vector<32x128xf32> to vector<32x128xbf16>
    %cst = arith.constant dense<0.000000e+00> : vector<14x128xf32>
    %4 = tpu.matmul %2, %3, %cst {dimension_numbers = #tpu.dot_dimension_numbers<[1], [0], [0], [1], [0, 0, 1, 1], [], []>} : vector<14x32xbf16>, vector<32x128xbf16>, vector<14x128xf32> -> vector<14x128xf32>
    %c0_3 = arith.constant 0 : index
    %c0_4 = arith.constant 0 : index
    %5 = vector.load %arg3[%c0_3, %c0_4] : memref<1x128xf32, #tpu.memory_space<vmem>>, vector<1x128xf32>
    %6 = vector.broadcast %5 : vector<1x128xf32> to vector<14x128xf32>
    %7 = arith.addf %4, %6 : vector<14x128xf32>
    %c0_5 = arith.constant 0 : index
    %c0_6 = arith.constant 0 : index
    %8 = vector.load %arg4[%c0_5, %c0_6] : memref<14x128xf32, #tpu.memory_space<vmem>>, vector<14x128xf32>
    tpu.vector_store %arg4[%c0_5, %c0_6], %7 {strides = array<i32>} : memref<14x128xf32, #tpu.memory_space<vmem>>, vector<14x128xf32>,
    return
  }
  func.func @transform_0(%arg0: i32) -> (i32, i32) {
    %c0_i32 = arith.constant 0 : i32
    %c0_i32_0 = arith.constant 0 : i32
    %c0_i32_1 = arith.constant 0 : i32
    return %c0_i32, %c0_i32_0 : i32, i32
  }
  func.func @transform_1(%arg0: i32) -> (i32, i32) {
    %c0_i32 = arith.constant 0 : i32
    %c0_i32_0 = arith.constant 0 : i32
    %c0_i32_1 = arith.constant 0 : i32
    return %c0_i32, %c0_i32_0 : i32, i32
  }
  func.func @transform_2(%arg0: i32) -> (i32, i32) {
    %c0_i32 = arith.constant 0 : i32
    %c0_i32_0 = arith.constant 0 : i32
    %c0_i32_1 = arith.constant 0 : i32
    return %c0_i32, %c0_i32_0 : i32, i32
  }
  func.func @transform_3(%arg0: i32) -> (i32, i32) {
    %c0_i32 = arith.constant 0 : i32
    %c0_i32_0 = arith.constant 0 : i32
    %c0_i32_1 = arith.constant 0 : i32
    return %c0_i32, %c0_i32_0 : i32, i32
  }
}

module attributes {stable_mosaic.version = 11 : i64} {
  func.func @_mha_attn_kernel(%arg0: i32, %arg1: memref<1x7x32xf32, #tpu.memory_space<vmem>>, %arg2: memref<1x8x64xf32, #tpu.memory_space<vmem>>, %arg3: memref<1x7x8xf32, #tpu.memory_space<vmem>>, %arg4: memref<1x7x32xf32, #tpu.memory_space<vmem>>) attributes {dimension_semantics = [#tpu.dimension_semantics<parallel>], iteration_bounds = array<i64: 2>, scalar_prefetch = 0 : i64, scratch_operands = 0 : i64, tpu.core_type = #tpu.core_type<tc>, window_params = [{transform_indices = @transform_0, window_bounds = array<i64: 1, 7, 32>}, {transform_indices = @transform_1, window_bounds = array<i64: 1, 8, 64>}, {transform_indices = @transform_2, window_bounds = array<i64: 1, 7, 8>}, {transform_indices = @transform_3, window_bounds = array<i64: 1, 7, 32>}]} {
    %c0 = arith.constant 0 : index
    %c0_0 = arith.constant 0 : index
    %c0_1 = arith.constant 0 : index
    %0 = vector.load %arg1[%c0, %c0_0, %c0_1] : memref<1x7x32xf32, #tpu.memory_space<vmem>>, vector<1x7x32xf32>
    %1 = vector.shape_cast %0 : vector<1x7x32xf32> to vector<7x32xf32>
    %c0_2 = arith.constant 0 : index
    %c0_3 = arith.constant 0 : index
    %c0_4 = arith.constant 0 : index
    %2 = vector.load %arg2[%c0_2, %c0_3, %c0_4] : memref<1x8x64xf32, #tpu.memory_space<vmem>>, vector<1x8x64xf32>
    %3 = vector.shape_cast %2 : vector<1x8x64xf32> to vector<8x64xf32>
    %c0_5 = arith.constant 0 : index
    %c0_6 = arith.constant 0 : index
    %c0_7 = arith.constant 0 : index
    %4 = vector.load %arg3[%c0_5, %c0_6, %c0_7] : memref<1x7x8xf32, #tpu.memory_space<vmem>>, vector<1x7x8xf32>
    %5 = vector.shape_cast %4 : vector<1x7x8xf32> to vector<7x8xf32>
    %6 = vector.extract_strided_slice %1 {offsets = [0, 0], sizes = [7, 8], strides = [1, 1]} : vector<7x32xf32> to vector<7x8xf32>
    %7 = arith.truncf %6 : vector<7x8xf32> to vector<7x8xbf16>
    %8 = vector.extract_strided_slice %3 {offsets = [0, 0], sizes = [8, 8], strides = [1, 1]} : vector<8x64xf32> to vector<8x8xf32>
    %9 = arith.truncf %8 : vector<8x8xf32> to vector<8x8xbf16>
    %10 = vector.extract_strided_slice %3 {offsets = [0, 32], sizes = [8, 8], strides = [1, 1]} : vector<8x64xf32> to vector<8x8xf32>
    %11 = arith.truncf %10 : vector<8x8xf32> to vector<8x8xbf16>
    %12 = tpu.transpose %9, [1, 0] : vector<8x8xbf16> -> vector<8x8xbf16>
    %cst = arith.constant dense<0.000000e+00> : vector<7x8xf32>
    %13 = tpu.matmul %7, %12, %cst {dimension_numbers = #tpu.dot_dimension_numbers<[1], [0], [0], [1], [0, 0, 1, 1], [], []>} : vector<7x8xbf16>, vector<8x8xbf16>, vector<7x8xf32> -> vector<7x8xf32>
    %cst_8 = arith.constant 0.353553385 : f32
    %14 = vector.broadcast %cst_8 : f32 to vector<7x8xf32>
    %15 = arith.mulf %13, %14 : vector<7x8xf32>
    %16 = arith.addf %15, %5 : vector<7x8xf32>
    %cst_9 = arith.constant dense<0xFF800000> : vector<7xf32>
    %17 = vector.multi_reduction <maximumf>, %16, %cst_9 [1] : vector<7x8xf32> to vector<7xf32>
    %18 = vector.shape_cast %17 : vector<7xf32> to vector<7x1xf32>
    %19 = vector.broadcast %18 : vector<7x1xf32> to vector<7x8xf32>
    %20 = arith.subf %16, %19 : vector<7x8xf32>
    %21 = math.exp %20 : vector<7x8xf32>
    %cst_10 = arith.constant dense<0.000000e+00> : vector<7xf32>
    %22 = vector.multi_reduction <add>, %21, %cst_10 [1] : vector<7x8xf32> to vector<7xf32>
    %23 = vector.shape_cast %22 : vector<7xf32> to vector<7x1xf32>
    %24 = tpu.reciprocal %23 {approx = true} : vector<7x1xf32> -> vector<7x1xf32>
    %25 = vector.broadcast %24 : vector<7x1xf32> to vector<7x8xf32>
    %26 = arith.mulf %21, %25 : vector<7x8xf32>
    %27 = arith.truncf %26 : vector<7x8xf32> to vector<7x8xbf16>
    %cst_11 = arith.constant dense<0.000000e+00> : vector<7x8xf32>
    %28 = tpu.matmul %27, %11, %cst_11 {dimension_numbers = #tpu.dot_dimension_numbers<[1], [0], [0], [1], [0, 0, 1, 1], [], []>} : vector<7x8xbf16>, vector<8x8xbf16>, vector<7x8xf32> -> vector<7x8xf32>
    %29 = vector.extract_strided_slice %1 {offsets = [0, 8], sizes = [7, 8], strides = [1, 1]} : vector<7x32xf32> to vector<7x8xf32>
    %30 = arith.truncf %29 : vector<7x8xf32> to vector<7x8xbf16>
    %31 = vector.extract_strided_slice %3 {offsets = [0, 8], sizes = [8, 8], strides = [1, 1]} : vector<8x64xf32> to vector<8x8xf32>
    %32 = arith.truncf %31 : vector<8x8xf32> to vector<8x8xbf16>
    %33 = vector.extract_strided_slice %3 {offsets = [0, 40], sizes = [8, 8], strides = [1, 1]} : vector<8x64xf32> to vector<8x8xf32>
    %34 = arith.truncf %33 : vector<8x8xf32> to vector<8x8xbf16>
    %35 = tpu.transpose %32, [1, 0] : vector<8x8xbf16> -> vector<8x8xbf16>
    %cst_12 = arith.constant dense<0.000000e+00> : vector<7x8xf32>
    %36 = tpu.matmul %30, %35, %cst_12 {dimension_numbers = #tpu.dot_dimension_numbers<[1], [0], [0], [1], [0, 0, 1, 1], [], []>} : vector<7x8xbf16>, vector<8x8xbf16>, vector<7x8xf32> -> vector<7x8xf32>
    %cst_13 = arith.constant 0.353553385 : f32
    %37 = vector.broadcast %cst_13 : f32 to vector<7x8xf32>
    %38 = arith.mulf %36, %37 : vector<7x8xf32>
    %39 = arith.addf %38, %5 : vector<7x8xf32>
    %cst_14 = arith.constant dense<0xFF800000> : vector<7xf32>
    %40 = vector.multi_reduction <maximumf>, %39, %cst_14 [1] : vector<7x8xf32> to vector<7xf32>
    %41 = vector.shape_cast %40 : vector<7xf32> to vector<7x1xf32>
    %42 = vector.broadcast %41 : vector<7x1xf32> to vector<7x8xf32>
    %43 = arith.subf %39, %42 : vector<7x8xf32>
    %44 = math.exp %43 : vector<7x8xf32>
    %cst_15 = arith.constant dense<0.000000e+00> : vector<7xf32>
    %45 = vector.multi_reduction <add>, %44, %cst_15 [1] : vector<7x8xf32> to vector<7xf32>
    %46 = vector.shape_cast %45 : vector<7xf32> to vector<7x1xf32>
    %47 = tpu.reciprocal %46 {approx = true} : vector<7x1xf32> -> vector<7x1xf32>
    %48 = vector.broadcast %47 : vector<7x1xf32> to vector<7x8xf32>
    %49 = arith.mulf %44, %48 : vector<7x8xf32>
    %50 = arith.truncf %49 : vector<7x8xf32> to vector<7x8xbf16>
    %cst_16 = arith.constant dense<0.000000e+00> : vector<7x8xf32>
    %51 = tpu.matmul %50, %34, %cst_16 {dimension_numbers = #tpu.dot_dimension_numbers<[1], [0], [0], [1], [0, 0, 1, 1], [], []>} : vector<7x8xbf16>, vector<8x8xbf16>, vector<7x8xf32> -> vector<7x8xf32>
    %52 = vector.extract_strided_slice %1 {offsets = [0, 16], sizes = [7, 8], strides = [1, 1]} : vector<7x32xf32> to vector<7x8xf32>
    %53 = arith.truncf %52 : vector<7x8xf32> to vector<7x8xbf16>
    %54 = vector.extract_strided_slice %3 {offsets = [0, 16], sizes = [8, 8], strides = [1, 1]} : vector<8x64xf32> to vector<8x8xf32>
    %55 = arith.truncf %54 : vector<8x8xf32> to vector<8x8xbf16>
    %56 = vector.extract_strided_slice %3 {offsets = [0, 48], sizes = [8, 8], strides = [1, 1]} : vector<8x64xf32> to vector<8x8xf32>
    %57 = arith.truncf %56 : vector<8x8xf32> to vector<8x8xbf16>
    %58 = tpu.transpose %55, [1, 0] : vector<8x8xbf16> -> vector<8x8xbf16>
    %cst_17 = arith.constant dense<0.000000e+00> : vector<7x8xf32>
    %59 = tpu.matmul %53, %58, %cst_17 {dimension_numbers = #tpu.dot_dimension_numbers<[1], [0], [0], [1], [0, 0, 1, 1], [], []>} : vector<7x8xbf16>, vector<8x8xbf16>, vector<7x8xf32> -> vector<7x8xf32>
    %cst_18 = arith.constant 0.353553385 : f32
    %60 = vector.broadcast %cst_18 : f32 to vector<7x8xf32>
    %61 = arith.mulf %59, %60 : vector<7x8xf32>
    %62 = arith.addf %61, %5 : vector<7x8xf32>
    %cst_19 = arith.constant dense<0xFF800000> : vector<7xf32>
    %63 = vector.multi_reduction <maximumf>, %62, %cst_19 [1] : vector<7x8xf32> to vector<7xf32>
    %64 = vector.shape_cast %63 : vector<7xf32> to vector<7x1xf32>
    %65 = vector.broadcast %64 : vector<7x1xf32> to vector<7x8xf32>
    %66 = arith.subf %62, %65 : vector<7x8xf32>
    %67 = math.exp %66 : vector<7x8xf32>
    %cst_20 = arith.constant dense<0.000000e+00> : vector<7xf32>
    %68 = vector.multi_reduction <add>, %67, %cst_20 [1] : vector<7x8xf32> to vector<7xf32>
    %69 = vector.shape_cast %68 : vector<7xf32> to vector<7x1xf32>
    %70 = tpu.reciprocal %69 {approx = true} : vector<7x1xf32> -> vector<7x1xf32>
    %71 = vector.broadcast %70 : vector<7x1xf32> to vector<7x8xf32>
    %72 = arith.mulf %67, %71 : vector<7x8xf32>
    %73 = arith.truncf %72 : vector<7x8xf32> to vector<7x8xbf16>
    %cst_21 = arith.constant dense<0.000000e+00> : vector<7x8xf32>
    %74 = tpu.matmul %73, %57, %cst_21 {dimension_numbers = #tpu.dot_dimension_numbers<[1], [0], [0], [1], [0, 0, 1, 1], [], []>} : vector<7x8xbf16>, vector<8x8xbf16>, vector<7x8xf32> -> vector<7x8xf32>
    %75 = vector.extract_strided_slice %1 {offsets = [0, 24], sizes = [7, 8], strides = [1, 1]} : vector<7x32xf32> to vector<7x8xf32>
    %76 = arith.truncf %75 : vector<7x8xf32> to vector<7x8xbf16>
    %77 = vector.extract_strided_slice %3 {offsets = [0, 24], sizes = [8, 8], strides = [1, 1]} : vector<8x64xf32> to vector<8x8xf32>
    %78 = arith.truncf %77 : vector<8x8xf32> to vector<8x8xbf16>
    %79 = vector.extract_strided_slice %3 {offsets = [0, 56], sizes = [8, 8], strides = [1, 1]} : vector<8x64xf32> to vector<8x8xf32>
    %80 = arith.truncf %79 : vector<8x8xf32> to vector<8x8xbf16>
    %81 = tpu.transpose %78, [1, 0] : vector<8x8xbf16> -> vector<8x8xbf16>
    %cst_22 = arith.constant dense<0.000000e+00> : vector<7x8xf32>
    %82 = tpu.matmul %76, %81, %cst_22 {dimension_numbers = #tpu.dot_dimension_numbers<[1], [0], [0], [1], [0, 0, 1, 1], [], []>} : vector<7x8xbf16>, vector<8x8xbf16>, vector<7x8xf32> -> vector<7x8xf32>
    %cst_23 = arith.constant 0.353553385 : f32
    %83 = vector.broadcast %cst_23 : f32 to vector<7x8xf32>
    %84 = arith.mulf %82, %83 : vector<7x8xf32>
    %85 = arith.addf %84, %5 : vector<7x8xf32>
    %cst_24 = arith.constant dense<0xFF800000> : vector<7xf32>
    %86 = vector.multi_reduction <maximumf>, %85, %cst_24 [1] : vector<7x8xf32> to vector<7xf32>
    %87 = vector.shape_cast %86 : vector<7xf32> to vector<7x1xf32>
    %88 = vector.broadcast %87 : vector<7x1xf32> to vector<7x8xf32>
    %89 = arith.subf %85, %88 : vector<7x8xf32>
    %90 = math.exp %89 : vector<7x8xf32>
    %cst_25 = arith.constant dense<0.000000e+00> : vector<7xf32>
    %91 = vector.multi_reduction <add>, %90, %cst_25 [1] : vector<7x8xf32> to vector<7xf32>
    %92 = vector.shape_cast %91 : vector<7xf32> to vector<7x1xf32>
    %93 = tpu.reciprocal %92 {approx = true} : vector<7x1xf32> -> vector<7x1xf32>
    %94 = vector.broadcast %93 : vector<7x1xf32> to vector<7x8xf32>
    %95 = arith.mulf %90, %94 : vector<7x8xf32>
    %96 = arith.truncf %95 : vector<7x8xf32> to vector<7x8xbf16>
    %cst_26 = arith.constant dense<0.000000e+00> : vector<7x8xf32>
    %97 = tpu.matmul %96, %80, %cst_26 {dimension_numbers = #tpu.dot_dimension_numbers<[1], [0], [0], [1], [0, 0, 1, 1], [], []>} : vector<7x8xbf16>, vector<8x8xbf16>, vector<7x8xf32> -> vector<7x8xf32>
    %98 = tpu.concatenate %28, %51, %74, %97 in 1 : vector<7x8xf32>, vector<7x8xf32>, vector<7x8xf32>, vector<7x8xf32> -> vector<7x32xf32>
    %c0_27 = arith.constant 0 : index
    %c0_28 = arith.constant 0 : index
    %c0_29 = arith.constant 0 : index
    %99 = vector.load %arg4[%c0_27, %c0_28, %c0_29] : memref<1x7x32xf32, #tpu.memory_space<vmem>>, vector<1x7x32xf32>
    %100 = vector.shape_cast %99 : vector<1x7x32xf32> to vector<7x32xf32>
    %101 = vector.shape_cast %98 : vector<7x32xf32> to vector<1x7x32xf32>
    tpu.vector_store %arg4[%c0_27, %c0_28, %c0_29], %101 {strides = array<i32>} : memref<1x7x32xf32, #tpu.memory_space<vmem>>, vector<1x7x32xf32>,
    return
  }
  func.func @transform_0(%arg0: i32) -> (i32, i32, i32) {
    %c0_i32 = arith.constant 0 : i32
    %c0_i32_0 = arith.constant 0 : i32
    %c0_i32_1 = arith.constant 0 : i32
    return %arg0, %c0_i32, %c0_i32_0 : i32, i32, i32
  }
  func.func @transform_1(%arg0: i32) -> (i32, i32, i32) {
    %c0_i32 = arith.constant 0 : i32
    %c0_i32_0 = arith.constant 0 : i32
    %c0_i32_1 = arith.constant 0 : i32
    return %arg0, %c0_i32, %c0_i32_0 : i32, i32, i32
  }
  func.func @transform_2(%arg0: i32) -> (i32, i32, i32) {
    %c0_i32 = arith.constant 0 : i32
    %c0_i32_0 = arith.constant 0 : i32
    %c0_i32_1 = arith.constant 0 : i32
    return %arg0, %c0_i32, %c0_i32_0 : i32, i32, i32
  }
  func.func @transform_3(%arg0: i32) -> (i32, i32, i32) {
    %c0_i32 = arith.constant 0 : i32
    %c0_i32_0 = arith.constant 0 : i32
    %c0_i32_1 = arith.constant 0 : i32
    return %arg0, %c0_i32, %c0_i32_0 : i32, i32, i32
  }
}

module attributes {stable_mosaic.version = 11 : i64} {
  func.func @_ln_ffn_residual_kernel(%arg0: i32, %arg1: memref<14x32xf32, #tpu.memory_space<vmem>>, %arg2: memref<1x32xf32, #tpu.memory_space<vmem>>, %arg3: memref<1x32xf32, #tpu.memory_space<vmem>>, %arg4: memref<32x128xf32, #tpu.memory_space<vmem>>, %arg5: memref<1x128xf32, #tpu.memory_space<vmem>>, %arg6: memref<128x32xf32, #tpu.memory_space<vmem>>, %arg7: memref<1x32xf32, #tpu.memory_space<vmem>>, %arg8: memref<14x32xf32, #tpu.memory_space<vmem>>) attributes {dimension_semantics = [#tpu.dimension_semantics<arbitrary>], iteration_bounds = array<i64: 1>, scalar_prefetch = 0 : i64, scratch_operands = 0 : i64, tpu.core_type = #tpu.core_type<tc>, window_params = [{pipeline_mode = #tpu.pipeline_mode<synchronous>, transform_indices = @transform_0, window_bounds = array<i64: 14, 32>}, {pipeline_mode = #tpu.pipeline_mode<synchronous>, transform_indices = @transform_1, window_bounds = array<i64: 1, 32>}, {pipeline_mode = #tpu.pipeline_mode<synchronous>, transform_indices = @transform_2, window_bounds = array<i64: 1, 32>}, {pipeline_mode = #tpu.pipeline_mode<synchronous>, transform_indices = @transform_3, window_bounds = array<i64: 32, 128>}, {pipeline_mode = #tpu.pipeline_mode<synchronous>, transform_indices = @transform_4, window_bounds = array<i64: 1, 128>}, {pipeline_mode = #tpu.pipeline_mode<synchronous>, transform_indices = @transform_5, window_bounds = array<i64: 128, 32>}, {pipeline_mode = #tpu.pipeline_mode<synchronous>, transform_indices = @transform_6, window_bounds = array<i64: 1, 32>}, {pipeline_mode = #tpu.pipeline_mode<synchronous>, transform_indices = @transform_7, window_bounds = array<i64: 14, 32>}]} {
    %c0 = arith.constant 0 : index
    %c0_0 = arith.constant 0 : index
    %0 = vector.load %arg1[%c0, %c0_0] : memref<14x32xf32, #tpu.memory_space<vmem>>, vector<14x32xf32>
    %c0_1 = arith.constant 0 : index
    %c0_2 = arith.constant 0 : index
    %1 = vector.load %arg2[%c0_1, %c0_2] : memref<1x32xf32, #tpu.memory_space<vmem>>, vector<1x32xf32>
    %c0_3 = arith.constant 0 : index
    %c0_4 = arith.constant 0 : index
    %2 = vector.load %arg3[%c0_3, %c0_4] : memref<1x32xf32, #tpu.memory_space<vmem>>, vector<1x32xf32>
    %cst = arith.constant dense<0.000000e+00> : vector<14xf32>
    %3 = vector.multi_reduction <add>, %0, %cst [1] : vector<14x32xf32> to vector<14xf32>
    %4 = vector.shape_cast %3 : vector<14xf32> to vector<14x1xf32>
    %cst_5 = arith.constant 3.200000e+01 : f32
    %5 = vector.broadcast %cst_5 : f32 to vector<14x1xf32>
    %6 = arith.divf %4, %5 : vector<14x1xf32>
    %7 = vector.broadcast %6 : vector<14x1xf32> to vector<14x32xf32>
    %8 = arith.subf %0, %7 : vector<14x32xf32>
    %9 = arith.mulf %8, %8 : vector<14x32xf32>
    %cst_6 = arith.constant dense<0.000000e+00> : vector<14xf32>
    %10 = vector.multi_reduction <add>, %9, %cst_6 [1] : vector<14x32xf32> to vector<14xf32>
    %11 = vector.shape_cast %10 : vector<14xf32> to vector<14x1xf32>
    %cst_7 = arith.constant 3.200000e+01 : f32
    %12 = vector.broadcast %cst_7 : f32 to vector<14x1xf32>
    %13 = arith.divf %11, %12 : vector<14x1xf32>
    %14 = vector.broadcast %6 : vector<14x1xf32> to vector<14x32xf32>
    %15 = arith.subf %0, %14 : vector<14x32xf32>
    %cst_8 = arith.constant 9.99999974E-6 : f32
    %16 = vector.broadcast %cst_8 : f32 to vector<14x1xf32>
    %17 = arith.addf %13, %16 : vector<14x1xf32>
    %18 = math.rsqrt %17 : vector<14x1xf32>
    %19 = vector.broadcast %18 : vector<14x1xf32> to vector<14x32xf32>
    %20 = arith.mulf %15, %19 : vector<14x32xf32>
    %21 = vector.broadcast %1 : vector<1x32xf32> to vector<14x32xf32>
    %22 = arith.mulf %20, %21 : vector<14x32xf32>
    %23 = vector.broadcast %2 : vector<1x32xf32> to vector<14x32xf32>
    %24 = arith.addf %22, %23 : vector<14x32xf32>
    %c0_9 = arith.constant 0 : index
    %c0_10 = arith.constant 0 : index
    %25 = vector.load %arg4[%c0_9, %c0_10] : memref<32x128xf32, #tpu.memory_space<vmem>>, vector<32x128xf32>
    %26 = arith.truncf %24 : vector<14x32xf32> to vector<14x32xbf16>
    %27 = arith.truncf %25 : vector<32x128xf32> to vector<32x128xbf16>
    %cst_11 = arith.constant dense<0.000000e+00> : vector<14x128xf32>
    %28 = tpu.matmul %26, %27, %cst_11 {dimension_numbers = #tpu.dot_dimension_numbers<[1], [0], [0], [1], [0, 0, 1, 1], [], []>} : vector<14x32xbf16>, vector<32x128xbf16>, vector<14x128xf32> -> vector<14x128xf32>
    %c0_12 = arith.constant 0 : index
    %c0_13 = arith.constant 0 : index
    %29 = vector.load %arg5[%c0_12, %c0_13] : memref<1x128xf32, #tpu.memory_space<vmem>>, vector<1x128xf32>
    %30 = vector.broadcast %29 : vector<1x128xf32> to vector<14x128xf32>
    %31 = arith.addf %28, %30 : vector<14x128xf32>
    %cst_14 = arith.constant 0.000000e+00 : f32
    %32 = vector.broadcast %cst_14 : f32 to vector<14x128xf32>
    %33 = arith.maximumf %31, %32 : vector<14x128xf32>
    %c0_15 = arith.constant 0 : index
    %c0_16 = arith.constant 0 : index
    %34 = vector.load %arg6[%c0_15, %c0_16] : memref<128x32xf32, #tpu.memory_space<vmem>>, vector<128x32xf32>
    %35 = arith.truncf %33 : vector<14x128xf32> to vector<14x128xbf16>
    %36 = arith.truncf %34 : vector<128x32xf32> to vector<128x32xbf16>
    %cst_17 = arith.constant dense<0.000000e+00> : vector<14x32xf32>
    %37 = tpu.matmul %35, %36, %cst_17 {dimension_numbers = #tpu.dot_dimension_numbers<[1], [0], [0], [1], [0, 0, 1, 1], [], []>} : vector<14x128xbf16>, vector<128x32xbf16>, vector<14x32xf32> -> vector<14x32xf32>
    %38 = arith.addf %0, %37 : vector<14x32xf32>
    %c0_18 = arith.constant 0 : index
    %c0_19 = arith.constant 0 : index
    %39 = vector.load %arg7[%c0_18, %c0_19] : memref<1x32xf32, #tpu.memory_space<vmem>>, vector<1x32xf32>
    %40 = vector.broadcast %39 : vector<1x32xf32> to vector<14x32xf32>
    %41 = arith.addf %38, %40 : vector<14x32xf32>
    %c0_20 = arith.constant 0 : index
    %c0_21 = arith.constant 0 : index
    %42 = vector.load %arg8[%c0_20, %c0_21] : memref<14x32xf32, #tpu.memory_space<vmem>>, vector<14x32xf32>
    tpu.vector_store %arg8[%c0_20, %c0_21], %41 {strides = array<i32>} : memref<14x32xf32, #tpu.memory_space<vmem>>, vector<14x32xf32>,
    return
  }
  func.func @transform_0(%arg0: i32) -> (i32, i32) {
    %c0_i32 = arith.constant 0 : i32
    %c0_i32_0 = arith.constant 0 : i32
    %c0_i32_1 = arith.constant 0 : i32
    return %c0_i32, %c0_i32_0 : i32, i32
  }
  func.func @transform_1(%arg0: i32) -> (i32, i32) {
    %c0_i32 = arith.constant 0 : i32
    %c0_i32_0 = arith.constant 0 : i32
    %c0_i32_1 = arith.constant 0 : i32
    return %c0_i32, %c0_i32_0 : i32, i32
  }
  func.func @transform_2(%arg0: i32) -> (i32, i32) {
    %c0_i32 = arith.constant 0 : i32
    %c0_i32_0 = arith.constant 0 : i32
    %c0_i32_1 = arith.constant 0 : i32
    return %c0_i32, %c0_i32_0 : i32, i32
  }
  func.func @transform_3(%arg0: i32) -> (i32, i32) {
    %c0_i32 = arith.constant 0 : i32
    %c0_i32_0 = arith.constant 0 : i32
    %c0_i32_1 = arith.constant 0 : i32
    return %c0_i32, %c0_i32_0 : i32, i32
  }
  func.func @transform_4(%arg0: i32) -> (i32, i32) {
    %c0_i32 = arith.constant 0 : i32
    %c0_i32_0 = arith.constant 0 : i32
    %c0_i32_1 = arith.constant 0 : i32
    return %c0_i32, %c0_i32_0 : i32, i32
  }
  func.func @transform_5(%arg0: i32) -> (i32, i32) {
    %c0_i32 = arith.constant 0 : i32
    %c0_i32_0 = arith.constant 0 : i32
    %c0_i32_1 = arith.constant 0 : i32
    return %c0_i32, %c0_i32_0 : i32, i32
  }
  func.func @transform_6(%arg0: i32) -> (i32, i32) {
    %c0_i32 = arith.constant 0 : i32
    %c0_i32_0 = arith.constant 0 : i32
    %c0_i32_1 = arith.constant 0 : i32
    return %c0_i32, %c0_i32_0 : i32, i32
  }
  func.func @transform_7(%arg0: i32) -> (i32, i32) {
    %c0_i32 = arith.constant 0 : i32
    %c0_i32_0 = arith.constant 0 : i32
    %c0_i32_1 = arith.constant 0 : i32
    return %c0_i32, %c0_i32_0 : i32, i32
  }
}

</mosaic_0001>

<llo_original>
// kernel: translation_model_forward.28
$region0: #{translation_model_forward.28}
  #allocation0 [shape = 'u32[]', space=smem, size = 0x4, offset = 0x4, fixed_abs, tag = 'smem constant byte address 0x4 - core index']
  #allocation1 [shape = 'u32[144,128]{1,0:T(1,128)}', space=vmem, size = 0x12000, scoped, tag = 'internal scratch']
  %s0 = inlined_call_operand.vmem [shape: f32[16,32], index: 0, kind: input, shape index: {}]
  %s1 = inlined_call_operand.vmem [shape: f32[32,128], index: 1, kind: input, shape index: {}]
  %s2 = inlined_call_operand.vmem [shape: f32[1,128], index: 2, kind: input, shape index: {}]
  %s3 = inlined_call_operand.vmem [shape: f32[16,128], index: 3, kind: output, shape index: {}]
  %s4 = sld [smem:[#allocation0]]
  $region22: #{translation_model_forward.28} parent=0
    _
  %s6 = ssub.s32 1, %s4
  %s7 = scalar_select 0, %s6, %s4
  // Predicated region
  $region2: #{translation_model_forward.28} parent=0 // pred_check
    _
  $region3: #{translation_model_forward.28} parent=0 // pred_check_branch
    %9 = sbr.rel (0) target = $region5
  $region4: #{translation_model_forward.28} parent=0 // pred_region
    _
  $region5: #{translation_model_forward.28} parent=0 // pred_fallthru
    _
  // Predicated region
  $region6: #{translation_model_forward.28} parent=0 // pred_check
    _
  $region7: #{translation_model_forward.28} parent=0 // pred_check_branch
    %11 = sbr.rel (0) target = $region9
  $region8: #{translation_model_forward.28} parent=0 // pred_region
    _
  $region9: #{translation_model_forward.28} parent=0 // pred_fallthru
    _
  // Predicated region
  $region10: #{translation_model_forward.28} parent=0 // pred_check
    _
  $region11: #{translation_model_forward.28} parent=0 // pred_check_branch
    %13 = sbr.rel (0) target = $region13
  $region12: #{translation_model_forward.28} parent=0 // pred_region
    _
  $region13: #{translation_model_forward.28} parent=0 // pred_fallthru
    _
  %v15 = vld [vmem:[%s0] sm:$0xff]
  %v16 = vld [vmem:[%s0 + $0x8] sm:$0xff]
  %v17 = vld [vmem:[%s1] sm:$0xff]
  %v18 = vld [vmem:[%s1 + $0x8] sm:$0xff]
  %v19 = vld [vmem:[%s1 + $0x10] sm:$0xff]
  %v20 = vld [vmem:[%s1 + $0x18] sm:$0xff]
  %v21 = vpack.c.bf16 %v16, %v15
  %v22 = vpack.c.bf16 %v18, %v17
  %v23 = vpack.c.bf16 %v20, %v19
  %v24 = vld [vmem:[%s2] sm:$0x1]
  %v26 = vlaneseq
  %v27 = vshrl.u32 %v26, 7
  %v28 = vsub.s32 0, %v27
  %v29 = vrot.slane %v24, %v28
  %vm31 = vcmask 261120
  %v33 = vsel %vm31, %v21, 0
  %35 = vmatprep.subr.bf16.mxu0 0
  %36 = vmatpush1.bf16.msra.mxu0 %v22
  %37 = vmatprep.subr.bf16.mxu0 0
  %38 = vmatpush1.bf16.msra.mxu0 %v23
  %39 = vmatprep.subr.bf16.mxu0 0
  %40 = vmatpush1.bf16.msra.mxu0 0
  %41 = vmatprep.subr.bf16.mxu0 0
  %42 = vmatpush1.bf16.msra.mxu0 0
  %43 = vmatprep.subr.bf16.mxu0 0
  %44 = vmatpush1.bf16.msra.mxu0 0
  %45 = vmatprep.subr.bf16.mxu0 0
  %46 = vmatpush1.bf16.msra.mxu0 0
  %47 = vmatprep.subr.bf16.mxu0 0
  %48 = vmatpush1.bf16.msra.mxu0 0
  %49 = vmatprep.subr.bf16.mxu0 0
  %50 = vmatpush1.bf16.msra.mxu0 0
  %51 = vmatprep.subr.bf16.mxu0 0
  %52 = vmatpush1.bf16.msra.mxu0 0
  %53 = vmatprep.subr.bf16.mxu0 0
  %54 = vmatpush1.bf16.msra.mxu0 0
  %55 = vmatprep.subr.bf16.mxu0 0
  %56 = vmatpush1.bf16.msra.mxu0 0
  %57 = vmatprep.subr.bf16.mxu0 0
  %58 = vmatpush1.bf16.msra.mxu0 0
  %59 = vmatprep.subr.bf16.mxu0 0
  %60 = vmatpush1.bf16.msra.mxu0 0
  %61 = vmatprep.subr.bf16.mxu0 0
  %62 = vmatpush1.bf16.msra.mxu0 0
  %63 = vmatprep.subr.bf16.mxu0 0
  %64 = vmatpush1.bf16.msra.mxu0 0
  %65 = vmatprep.subr.bf16.mxu0 0
  %66 = vmatpush1.bf16.msra.mxu0 0
  %67 = vmatprep.mubr.bf16.mxu0 0
  %68 = vmatmul.mubr.bf16.gmra.mrb[0].mxu0 %v33
  %v69 = vpop.f32.mrb[0].mxu0
  %v70 = vadd.f32 %v29, %v69
  %v71 = vpop.f32.mrb[0].mxu0
  %v72 = vpop.f32.mrb[0].mxu0
  %v73 = vadd.f32 %v29, %v72
  %v74 = vpop.f32.mrb[0].mxu0
  %75 = vdwg.mxu0
  %76 = vst [vmem:[%s3] sm:$0xff] %v70
  %77 = vst [vmem:[%s3 + $0x8] sm:$0xff] %v73
  // Predicated region
  $region14: #{translation_model_forward.28} parent=0 // pred_check
    _
  $region15: #{translation_model_forward.28} parent=0 // pred_check_branch
    %79 = sbr.rel (0) target = $region17
  $region16: #{translation_model_forward.28} parent=0 // pred_region
    _
  $region17: #{translation_model_forward.28} parent=0 // pred_fallthru
    _
  // Predicated region
  $region18: #{translation_model_forward.28} parent=0 // pred_check
    _
  $region19: #{translation_model_forward.28} parent=0 // pred_check_branch
    %81 = sbr.rel (0) target = $region21
  $region20: #{translation_model_forward.28} parent=0 // pred_region
    _
  $region21: #{translation_model_forward.28} parent=0 // pred_fallthru
    _

// kernel: translation_model_forward.26
$region0: #{translation_model_forward.26}
  #allocation0 [shape = 'u32[]', space=smem, size = 0x4, offset = 0x4, fixed_abs, tag = 'smem constant byte address 0x4 - core index']
  #allocation1 [shape = 'u32[144,128]{1,0:T(1,128)}', space=vmem, size = 0x12000, scoped, tag = 'internal scratch']
  %s0 = inlined_call_operand.vmem [shape: f32[16,32], index: 0, kind: input, shape index: {}]
  %s1 = inlined_call_operand.vmem [shape: f32[1,32], index: 1, kind: input, shape index: {}]
  %s2 = inlined_call_operand.vmem [shape: f32[1,32], index: 2, kind: input, shape index: {}]
  %s3 = inlined_call_operand.vmem [shape: f32[32,128], index: 3, kind: input, shape index: {}]
  %s4 = inlined_call_operand.vmem [shape: f32[1,128], index: 4, kind: input, shape index: {}]
  %s5 = inlined_call_operand.vmem [shape: f32[16,128], index: 5, kind: output, shape index: {}]
  %s6 = sld [smem:[#allocation0]]
  $region30: #{translation_model_forward.26} parent=0
    _
  %s8 = ssub.s32 1, %s6
  %s9 = scalar_select 0, %s8, %s6
  // Predicated region
  $region2: #{translation_model_forward.26} parent=0 // pred_check
    _
  $region3: #{translation_model_forward.26} parent=0 // pred_check_branch
    %11 = sbr.rel (0) target = $region5
  $region4: #{translation_model_forward.26} parent=0 // pred_region
    _
  $region5: #{translation_model_forward.26} parent=0 // pred_fallthru
    _
  // Predicated region
  $region6: #{translation_model_forward.26} parent=0 // pred_check
    _
  $region7: #{translation_model_forward.26} parent=0 // pred_check_branch
    %13 = sbr.rel (0) target = $region9
  $region8: #{translation_model_forward.26} parent=0 // pred_region
    _
  $region9: #{translation_model_forward.26} parent=0 // pred_fallthru
    _
  // Predicated region
  $region10: #{translation_model_forward.26} parent=0 // pred_check
    _
  $region11: #{translation_model_forward.26} parent=0 // pred_check_branch
    %15 = sbr.rel (0) target = $region13
  $region12: #{translation_model_forward.26} parent=0 // pred_region
    _
  $region13: #{translation_model_forward.26} parent=0 // pred_fallthru
    _
  // Predicated region
  $region14: #{translation_model_forward.26} parent=0 // pred_check
    _
  $region15: #{translation_model_forward.26} parent=0 // pred_check_branch
    %17 = sbr.rel (0) target = $region17
  $region16: #{translation_model_forward.26} parent=0 // pred_region
    _
  $region17: #{translation_model_forward.26} parent=0 // pred_fallthru
    _
  // Predicated region
  $region18: #{translation_model_forward.26} parent=0 // pred_check
    _
  $region19: #{translation_model_forward.26} parent=0 // pred_check_branch
    %19 = sbr.rel (0) target = $region21
  $region20: #{translation_model_forward.26} parent=0 // pred_region
    _
  $region21: #{translation_model_forward.26} parent=0 // pred_fallthru
    _
  %v21 = vld [vmem:[%s0] sm:$0xff]
  %v22 = vld [vmem:[%s0 + $0x8] sm:$0xff]
  %v23 = vld [vmem:[%s1] sm:$0x1]
  %v24 = vld [vmem:[%s2] sm:$0x1]
  %vm25 = vcmask 261120
  %v26 = vsel %vm25, %v21, 0.0
  %27 = vadd.xlane.f32.xlu0 %v26
  %v28 = vpop.xlane.xlu0 %27
  %v29 = vsel %vm25, %v22, 0.0
  %30 = vadd.xlane.f32.xlu0 %v29
  %v31 = vpop.xlane.xlu0 %30
  %v32 = vrcp.pop 32.0
  %v33 = vmul.f32 %v28, %v32
  %v34 = vmul.f32 %v31, %v32
  %v35 = vsub.f32 %v21, %v33
  %v36 = vsub.f32 %v22, %v34
  %v37 = vmul.f32 %v35, %v35
  %v38 = vmul.f32 %v36, %v36
  %v39 = vsel %vm25, %v37, 0.0
  %40 = vadd.xlane.f32.xlu0 %v39
  %v41 = vpop.xlane.xlu0 %40
  %v42 = vsel %vm25, %v38, 0.0
  %43 = vadd.xlane.f32.xlu0 %v42
  %v44 = vpop.xlane.xlu0 %43
  %v45 = vmul.f32 %v41, %v32
  %v46 = vmul.f32 %v44, %v32
  %v47 = vadd.f32 %v45, 1e-05
  %v48 = vadd.f32 %v46, 1e-05
  %v49 = vrsqrt.pop %v47
  %v50 = vrsqrt.pop %v48
  %v51 = vmul.f32 %v35, %v49
  %v52 = vmul.f32 %v36, %v50
  %v54 = vlaneseq
  %v55 = vshrl.u32 %v54, 7
  %v56 = vsub.s32 0, %v55
  %v57 = vrot.slane %v23, %v56
  %v59 = vmul.f32 %v51, %v57
  %v60 = vmul.f32 %v52, %v57
  %v62 = vlaneseq
  %v63 = vshrl.u32 %v62, 7
  %v64 = vsub.s32 0, %v63
  %v65 = vrot.slane %v24, %v64
  %v67 = vadd.f32 %v59, %v65
  %v68 = vadd.f32 %v60, %v65
  %v69 = vld [vmem:[%s3] sm:$0xff]
  %v70 = vld [vmem:[%s3 + $0x8] sm:$0xff]
  %v71 = vld [vmem:[%s3 + $0x10] sm:$0xff]
  %v72 = vld [vmem:[%s3 + $0x18] sm:$0xff]
  %v73 = vpack.c.bf16 %v68, %v67
  %v74 = vpack.c.bf16 %v70, %v69
  %v75 = vpack.c.bf16 %v72, %v71
  %v76 = vld [vmem:[%s4] sm:$0x1]
  %v78 = vlaneseq
  %v79 = vshrl.u32 %v78, 7
  %v80 = vsub.s32 0, %v79
  %v81 = vrot.slane %v76, %v80
  %v84 = vsel %vm25, %v73, 0
  %86 = vmatprep.subr.bf16.mxu0 0
  %87 = vmatpush1.bf16.msra.mxu0 %v74
  %88 = vmatprep.subr.bf16.mxu0 0
  %89 = vmatpush1.bf16.msra.mxu0 %v75
  %90 = vmatprep.subr.bf16.mxu0 0
  %91 = vmatpush1.bf16.msra.mxu0 0
  %92 = vmatprep.subr.bf16.mxu0 0
  %93 = vmatpush1.bf16.msra.mxu0 0
  %94 = vmatprep.subr.bf16.mxu0 0
  %95 = vmatpush1.bf16.msra.mxu0 0
  %96 = vmatprep.subr.bf16.mxu0 0
  %97 = vmatpush1.bf16.msra.mxu0 0
  %98 = vmatprep.subr.bf16.mxu0 0
  %99 = vmatpush1.bf16.msra.mxu0 0
  %100 = vmatprep.subr.bf16.mxu0 0
  %101 = vmatpush1.bf16.msra.mxu0 0
  %102 = vmatprep.subr.bf16.mxu0 0
  %103 = vmatpush1.bf16.msra.mxu0 0
  %104 = vmatprep.subr.bf16.mxu0 0
  %105 = vmatpush1.bf16.msra.mxu0 0
  %106 = vmatprep.subr.bf16.mxu0 0
  %107 = vmatpush1.bf16.msra.mxu0 0
  %108 = vmatprep.subr.bf16.mxu0 0
  %109 = vmatpush1.bf16.msra.mxu0 0
  %110 = vmatprep.subr.bf16.mxu0 0
  %111 = vmatpush1.bf16.msra.mxu0 0
  %112 = vmatprep.subr.bf16.mxu0 0
  %113 = vmatpush1.bf16.msra.mxu0 0
  %114 = vmatprep.subr.bf16.mxu0 0
  %115 = vmatpush1.bf16.msra.mxu0 0
  %116 = vmatprep.subr.bf16.mxu0 0
  %117 = vmatpush1.bf16.msra.mxu0 0
  %118 = vmatprep.mubr.bf16.mxu0 0
  %119 = vmatmul.mubr.bf16.gmra.mrb[0].mxu0 %v84
  %v120 = vpop.f32.mrb[0].mxu0
  %v121 = vadd.f32 %v81, %v120
  %v122 = vpop.f32.mrb[0].mxu0
  %v123 = vpop.f32.mrb[0].mxu0
  %v124 = vadd.f32 %v81, %v123
  %v125 = vpop.f32.mrb[0].mxu0
  %126 = vdwg.mxu0
  %127 = vst [vmem:[%s5] sm:$0xff] %v121
  %128 = vst [vmem:[%s5 + $0x8] sm:$0xff] %v124
  // Predicated region
  $region22: #{translation_model_forward.26} parent=0 // pred_check
    _
  $region23: #{translation_model_forward.26} parent=0 // pred_check_branch
    %130 = sbr.rel (0) target = $region25
  $region24: #{translation_model_forward.26} parent=0 // pred_region
    _
  $region25: #{translation_model_forward.26} parent=0 // pred_fallthru
    _
  // Predicated region
  $region26: #{translation_model_forward.26} parent=0 // pred_check
    _
  $region27: #{translation_model_forward.26} parent=0 // pred_check_branch
    %132 = sbr.rel (0) target = $region29
  $region28: #{translation_model_forward.26} parent=0 // pred_region
    _
  $region29: #{translation_model_forward.26} parent=0 // pred_fallthru
    _

// kernel: translation_model_forward.27
$region0: #{translation_model_forward.27}
  #allocation0 [shape = 'u32[]', space=smem, size = 0x4, offset = 0x4, fixed_abs, tag = 'smem constant byte address 0x4 - core index']
  #allocation1 [shape = 'u32[144,128]{1,0:T(1,128)}', space=vmem, size = 0x12000, scoped, tag = 'internal scratch']
  %s0 = inlined_call_operand.vmem [shape: f32[2,8,32], index: 0, kind: input, shape index: {}]
  %s1 = inlined_call_operand.vmem [shape: f32[2,8,64], index: 1, kind: input, shape index: {}]
  %s2 = inlined_call_operand.vmem [shape: f32[2,8,8], index: 2, kind: input, shape index: {}]
  %s3 = inlined_call_operand.vmem [shape: f32[2,8,32], index: 3, kind: output, shape index: {}]
  %s4 = sld [smem:[#allocation0]]
  $region45: #{translation_model_forward.27} parent=0
    _
  %s6 = ssub.s32 1, %s4
  %s7 = scalar_select 0, %s6, %s4
  loop: start=0, step=1, limit=4
  $region2: #{translation_model_forward.27} parent=0 // loop_pre_header
    _
  $region3: #{translation_model_forward.27} parent=0 // loop_header
    %s9 = sphi 0, %s13
    %p10 = scmp.ge.s32.totalorder %s9, 4
    %s19 = sphi 0, %s21
    %s22 = sphi 0, %s19
    %s23 = sphi 0, %s22
    %s39 = sphi 0, %s23
    %s45 = sphi 0, %s47
    %s48 = sphi 0, %s45
    %s49 = sphi 0, %s48
    %s65 = sphi 0, %s49
    %s71 = sphi 0, %s73
    %s74 = sphi 0, %s71
    %s75 = sphi 0, %s74
    %s91 = sphi 0, %s75
    %s97 = sphi 0, %s99
    %s100 = sphi 0, %s97
    %s101 = sphi 0, %s100
    %s117 = sphi 0, %s101
  $region4: #{translation_model_forward.27} parent=0 // loop_header_branch
    %12 = sbr.rel (%p10) target = $region8
  $region5: #{translation_model_forward.27} parent=0 // loop_body
    %s14 = ssub.s32 %s9, 1
    %s15 = ssub.s32 %s9, 2
    %s16 = sadd.s32 %s9, 1
    %s17 = ssub.s32 %s9, %s16
    %p18 = scmp.eq.s32.totalorder %s17, 0
    %s20 = sadd.s32 %s19, 1
    %s21 = scalar_select %p18, %s19, %s20
    %p24 = pneg %p18
    %p25 = scmp.eq.s32.totalorder %s9, 1
    %p26 = por %p24, %p25
    %p27 = scmp.ne.s32.totalorder %s19, %s22
    %p28 = scmp.eq.s32.totalorder %s9, 0
    %p29 = por %p27, %p28
    %p30 = scmp.ne.s32.totalorder %s19, %s22
    %p31 = scmp.eq.s32.totalorder %s14, 1
    %p32 = por %p30, %p31
    %p33 = scmp.ne.s32.totalorder %s22, %s23
    %p34 = scmp.eq.s32.totalorder %s14, 0
    %p35 = por %p33, %p34
    %p36 = scmp.ne.s32.totalorder %s22, %s23
    %p37 = scmp.eq.s32.totalorder %s15, 1
    %p38 = por %p36, %p37
    %p40 = scmp.ne.s32.totalorder %s23, %s39
    %p41 = scmp.eq.s32.totalorder %s15, 0
    %p42 = por %p40, %p41
    %s43 = ssub.s32 %s9, %s16
    %p44 = scmp.eq.s32.totalorder %s43, 0
    %s46 = sadd.s32 %s45, 1
    %s47 = scalar_select %p44, %s45, %s46
    %p50 = pneg %p44
    %p51 = scmp.eq.s32.totalorder %s9, 1
    %p52 = por %p50, %p51
    %p53 = scmp.ne.s32.totalorder %s45, %s48
    %p54 = scmp.eq.s32.totalorder %s9, 0
    %p55 = por %p53, %p54
    %p56 = scmp.ne.s32.totalorder %s45, %s48
    %p57 = scmp.eq.s32.totalorder %s14, 1
    %p58 = por %p56, %p57
    %p59 = scmp.ne.s32.totalorder %s48, %s49
    %p60 = scmp.eq.s32.totalorder %s14, 0
    %p61 = por %p59, %p60
    %p62 = scmp.ne.s32.totalorder %s48, %s49
    %p63 = scmp.eq.s32.totalorder %s15, 1
    %p64 = por %p62, %p63
    %p66 = scmp.ne.s32.totalorder %s49, %s65
    %p67 = scmp.eq.s32.totalorder %s15, 0
    %p68 = por %p66, %p67
    %s69 = ssub.s32 %s9, %s16
    %p70 = scmp.eq.s32.totalorder %s69, 0
    %s72 = sadd.s32 %s71, 1
    %s73 = scalar_select %p70, %s71, %s72
    %p76 = pneg %p70
    %p77 = scmp.eq.s32.totalorder %s9, 1
    %p78 = por %p76, %p77
    %p79 = scmp.ne.s32.totalorder %s71, %s74
    %p80 = scmp.eq.s32.totalorder %s9, 0
    %p81 = por %p79, %p80
    %p82 = scmp.ne.s32.totalorder %s71, %s74
    %p83 = scmp.eq.s32.totalorder %s14, 1
    %p84 = por %p82, %p83
    %p85 = scmp.ne.s32.totalorder %s74, %s75
    %p86 = scmp.eq.s32.totalorder %s14, 0
    %p87 = por %p85, %p86
    %p88 = scmp.ne.s32.totalorder %s74, %s75
    %p89 = scmp.eq.s32.totalorder %s15, 1
    %p90 = por %p88, %p89
    %p92 = scmp.ne.s32.totalorder %s75, %s91
    %p93 = scmp.eq.s32.totalorder %s15, 0
    %p94 = por %p92, %p93
    %s95 = ssub.s32 %s9, %s16
    %p96 = scmp.eq.s32.totalorder %s95, 0
    %s98 = sadd.s32 %s97, 1
    %s99 = scalar_select %p96, %s97, %s98
    %p102 = pneg %p96
    %p103 = scmp.eq.s32.totalorder %s9, 1
    %p104 = por %p102, %p103
    %p105 = scmp.ne.s32.totalorder %s97, %s100
    %p106 = scmp.eq.s32.totalorder %s9, 0
    %p107 = por %p105, %p106
    %p108 = scmp.ne.s32.totalorder %s97, %s100
    %p109 = scmp.eq.s32.totalorder %s14, 1
    %p110 = por %p108, %p109
    %p111 = scmp.ne.s32.totalorder %s100, %s101
    %p112 = scmp.eq.s32.totalorder %s14, 0
    %p113 = por %p111, %p112
    %p114 = scmp.ne.s32.totalorder %s100, %s101
    %p115 = scmp.eq.s32.totalorder %s15, 1
    %p116 = por %p114, %p115
    %p118 = scmp.ne.s32.totalorder %s101, %s117
    %p119 = scmp.eq.s32.totalorder %s15, 0
    %p120 = por %p118, %p119
    %p121 = scmp.le.s32.totalorder 1, %s9
    %p122 = scmp.lt.s32.totalorder %s9, 3
    %p123 = pnand %p121, %p122
    %p124 = pneg %p123
    // Predicated region
    $region9: #{translation_model_forward.27} parent=5 // pred_check
      _
    $region10: #{translation_model_forward.27} parent=5 // pred_check_branch
      %126 = sbr.rel (%p123) target = $region12
    $region11: #{translation_model_forward.27} parent=5 // pred_region
      %s127 = ssub.s32 %s9, 1
    $region12: #{translation_model_forward.27} parent=5 // pred_fallthru
      _
    %p128 = scmp.lt.s32.totalorder %s9, 2
    // Predicated region
    $region13: #{translation_model_forward.27} parent=5 // pred_check
      %p129 = pneg %p128
    $region14: #{translation_model_forward.27} parent=5 // pred_check_branch
      %131 = sbr.rel (%p129) target = $region16
    $region15: #{translation_model_forward.27} parent=5 // pred_region
      // Predicated region
      $region17: #{translation_model_forward.27} parent=15 // pred_check
        %p132 = pneg %p29
      $region18: #{translation_model_forward.27} parent=15 // pred_check_branch
        %134 = sbr.rel (%p132) target = $region20
      $region19: #{translation_model_forward.27} parent=15 // pred_region
        %p135 = scmp.lt.s32.totalorder %s9, 1
        %s136 = scalar_select %p135, %s9, 1
        %s137 = smul.addr %s136, 8
        %s138 = scalar_lea.vmem %s0, %s137
      $region20: #{translation_model_forward.27} parent=15 // pred_fallthru
        _
      // Predicated region
      $region21: #{translation_model_forward.27} parent=15 // pred_check
        %p139 = pneg %p55
      $region22: #{translation_model_forward.27} parent=15 // pred_check_branch
        %141 = sbr.rel (%p139) target = $region24
      $region23: #{translation_model_forward.27} parent=15 // pred_region
        %p142 = scmp.lt.s32.totalorder %s9, 1
        %s143 = scalar_select %p142, %s9, 1
        %s144 = smul.addr %s143, 8
        %s145 = scalar_lea.vmem %s1, %s144
      $region24: #{translation_model_forward.27} parent=15 // pred_fallthru
        _
      // Predicated region
      $region25: #{translation_model_forward.27} parent=15 // pred_check
        %p146 = pneg %p81
      $region26: #{translation_model_forward.27} parent=15 // pred_check_branch
        %148 = sbr.rel (%p146) target = $region28
      $region27: #{translation_model_forward.27} parent=15 // pred_region
        %p149 = scmp.lt.s32.totalorder %s9, 1
        %s150 = scalar_select %p149, %s9, 1
        %s151 = smul.addr %s150, 8
        %s152 = scalar_lea.vmem %s2, %s151
      $region28: #{translation_model_forward.27} parent=15 // pred_fallthru
        _
    $region16: #{translation_model_forward.27} parent=5 // pred_fallthru
      _
    %p153 = scmp.le.s32.totalorder 1, %s9
    %p154 = scmp.lt.s32.totalorder %s9, 3
    %p155 = pnand %p153, %p154
    %p156 = pneg %p155
    // Predicated region
    $region29: #{translation_model_forward.27} parent=5 // pred_check
      _
    $region30: #{translation_model_forward.27} parent=5 // pred_check_branch
      %158 = sbr.rel (%p155) target = $region32
    $region31: #{translation_model_forward.27} parent=5 // pred_region
      %s159 = ssub.s32 %s9, 1
      %p160 = scmp.lt.s32.totalorder %s14, 1
      %s161 = scalar_select %p160, %s14, 1
      %s162 = smul.addr %s161, 8
      %s163 = scalar_lea.vmem %s0, %s162
      %p164 = pneg %p35
      %p165 = pneg %p32
      %p166 = scmp.lt.s32.totalorder %s14, 1
      %s167 = scalar_select %p166, %s14, 1
      %s168 = smul.addr %s167, 8
      %s169 = scalar_lea.vmem %s1, %s168
      %p170 = pneg %p61
      %p171 = pneg %p58
      %p172 = scmp.lt.s32.totalorder %s14, 1
      %s173 = scalar_select %p172, %s14, 1
      %s174 = smul.addr %s173, 8
      %s175 = scalar_lea.vmem %s2, %s174
      %p176 = pneg %p87
      %p177 = pneg %p84
      %p178 = pneg %p113
      %p179 = pneg %p110
      %p180 = scmp.lt.s32.totalorder %s14, 1
      %s181 = scalar_select %p180, %s14, 1
      %s182 = smul.addr %s181, 8
      %s183 = scalar_lea.vmem %s3, %s182
      %p184 = scmp.lt.s32.totalorder %s14, 1
      %s185 = scalar_select %p184, %s14, 1
      %s186 = smul.addr %s185, 8
      %s187 = scalar_lea.vmem %s0, %s186
      %p188 = scmp.lt.s32.totalorder %s14, 1
      %s189 = scalar_select %p188, %s14, 1
      %s190 = smul.addr %s189, 8
      %s191 = scalar_lea.vmem %s1, %s190
      %p192 = scmp.lt.s32.totalorder %s14, 1
      %s193 = scalar_select %p192, %s14, 1
      %s194 = smul.addr %s193, 8
      %s195 = scalar_lea.vmem %s2, %s194
      %p196 = scmp.lt.s32.totalorder %s14, 1
      %s197 = scalar_select %p196, %s14, 1
      %s198 = smul.addr %s197, 8
      %s199 = scalar_lea.vmem %s3, %s198
      %v201 = vld [vmem:[%s187] sm:$0xff]
      %v202 = vld [vmem:[%s191] sm:$0xff]
      %v203 = vld [vmem:[%s195] sm:$0xff]
      %v204 = vpack.c.bf16 %v201, %v201
      %v205 = vpack.c.bf16 %v202, %v202
      %vm206 = vcmask 64512
      %v208 = vsel %vm206, %v204, 0
      %v211 = vsel %vm206, %v205, 0
      %213 = vmatprep.subr.bf16.mxu0 0
      %214 = vmatpush1.bf16.xpose.msra.mxu0 %v211
      %215 = vmatprep.subr.bf16.mxu0 0
      %216 = vmatpush1.bf16.xpose.msra.mxu0 0
      %217 = vmatprep.subr.bf16.mxu0 0
      %218 = vmatpush1.bf16.xpose.msra.mxu0 0
      %219 = vmatprep.subr.bf16.mxu0 0
      %220 = vmatpush1.bf16.xpose.msra.mxu0 0
      %221 = vmatprep.subr.bf16.mxu0 0
      %222 = vmatpush1.bf16.xpose.msra.mxu0 0
      %223 = vmatprep.subr.bf16.mxu0 0
      %224 = vmatpush1.bf16.xpose.msra.mxu0 0
      %225 = vmatprep.subr.bf16.mxu0 0
      %226 = vmatpush1.bf16.xpose.msra.mxu0 0
      %227 = vmatprep.subr.bf16.mxu0 0
      %228 = vmatpush1.bf16.xpose.msra.mxu0 0
      %229 = vmatprep.subr.bf16.mxu0 0
      %230 = vmatpush1.bf16.xpose.msra.mxu0 0
      %231 = vmatprep.subr.bf16.mxu0 0
      %232 = vmatpush1.bf16.xpose.msra.mxu0 0
      %233 = vmatprep.subr.bf16.mxu0 0
      %234 = vmatpush1.bf16.xpose.msra.mxu0 0
      %235 = vmatprep.subr.bf16.mxu0 0
      %236 = vmatpush1.bf16.xpose.msra.mxu0 0
      %237 = vmatprep.subr.bf16.mxu0 0
      %238 = vmatpush1.bf16.xpose.msra.mxu0 0
      %239 = vmatprep.subr.bf16.mxu0 0
      %240 = vmatpush1.bf16.xpose.msra.mxu0 0
      %241 = vmatprep.subr.bf16.mxu0 0
      %242 = vmatpush1.bf16.xpose.msra.mxu0 0
      %243 = vmatprep.subr.bf16.mxu0 0
      %244 = vmatpush1.bf16.xpose.msra.mxu0 0
      %245 = vmatprep.mubr.bf16.mxu0 0
      %246 = vmatmul.mubr.bf16.gmra.mrb[0].mxu0 %v208
      %v247 = vpop.f32.mrb[0].mxu0
      %v248 = vadd.f32 0.0, %v247
      %v249 = vpop.f32.mrb[0].mxu0
      %v250 = vpop.f32.mrb[0].mxu0
      %v251 = vpop.f32.mrb[0].mxu0
      %252 = vdwg.mxu0
      %v253 = vmul.f32 %v248, 0.35355338
      %v254 = vadd.f32 %v253, %v203
      %v255 = vsel %vm206, %v254, -inf
      %256 = vmax.xlane.f32.xlu0 %v255
      %v257 = vpop.xlane.xlu0 %256
      %v258 = vsub.f32 %v254, %v257
      %v259 = vmul.f32 %v258, 1.442695
      %v260 = vpow.pop %v259
      %v261 = vsel %vm206, %v260, 0.0
      %262 = vadd.xlane.f32.xlu0 %v261
      %v263 = vpop.xlane.xlu0 %262
      %v264 = vrcp.pop %v263
      %v265 = vmul.f32 %v260, %v264
      %v266 = vpack.c.bf16 %v265, %v265
      %268 = vrot.lane.b32.xlu0 %v205, 96
      %v269 = vpop.permute.xlu0 %268
      %v271 = vsel %vm206, %v266, 0
      %vm273 = vcmask 1043456
      %v275 = vsel %vm273, %v269, 0
      %277 = vmatprep.subr.bf16.mxu0 0
      %278 = vmatpush1.bf16.msra.mxu0 %v275
      %279 = vmatprep.subr.bf16.mxu0 0
      %280 = vmatpush1.bf16.msra.mxu0 0
      %281 = vmatprep.subr.bf16.mxu0 0
      %282 = vmatpush1.bf16.msra.mxu0 0
      %283 = vmatprep.subr.bf16.mxu0 0
      %284 = vmatpush1.bf16.msra.mxu0 0
      %285 = vmatprep.subr.bf16.mxu0 0
      %286 = vmatpush1.bf16.msra.mxu0 0
      %287 = vmatprep.subr.bf16.mxu0 0
      %288 = vmatpush1.bf16.msra.mxu0 0
      %289 = vmatprep.subr.bf16.mxu0 0
      %290 = vmatpush1.bf16.msra.mxu0 0
      %291 = vmatprep.subr.bf16.mxu0 0
      %292 = vmatpush1.bf16.msra.mxu0 0
      %293 = vmatprep.subr.bf16.mxu0 0
      %294 = vmatpush1.bf16.msra.mxu0 0
      %295 = vmatprep.subr.bf16.mxu0 0
      %296 = vmatpush1.bf16.msra.mxu0 0
      %297 = vmatprep.subr.bf16.mxu0 0
      %298 = vmatpush1.bf16.msra.mxu0 0
      %299 = vmatprep.subr.bf16.mxu0 0
      %300 = vmatpush1.bf16.msra.mxu0 0
      %301 = vmatprep.subr.bf16.mxu0 0
      %302 = vmatpush1.bf16.msra.mxu0 0
      %303 = vmatprep.subr.bf16.mxu0 0
      %304 = vmatpush1.bf16.msra.mxu0 0
      %305 = vmatprep.subr.bf16.mxu0 0
      %306 = vmatpush1.bf16.msra.mxu0 0
      %307 = vmatprep.subr.bf16.mxu0 0
      %308 = vmatpush1.bf16.msra.mxu0 0
      %309 = vmatprep.mubr.bf16.mxu0 0
      %310 = vmatmul.mubr.bf16.gmra.mrb[0].mxu0 %v271
      %v311 = vpop.f32.mrb[0].mxu0
      %v312 = vadd.f32 0.0, %v311
      %v313 = vpop.f32.mrb[0].mxu0
      %v314 = vpop.f32.mrb[0].mxu0
      %v315 = vpop.f32.mrb[0].mxu0
      %316 = vdwg.mxu0
      %318 = vrot.lane.b32.xlu0 %v204, 120
      %v319 = vpop.permute.xlu0 %318
      %320 = vrot.lane.b32.xlu0 %v205, 120
      %v321 = vpop.permute.xlu0 %320
      %v323 = vsel %vm206, %v319, 0
      %v326 = vsel %vm206, %v321, 0
      %328 = vmatprep.subr.bf16.mxu0 0
      %329 = vmatpush1.bf16.xpose.msra.mxu0 %v326
      %330 = vmatprep.subr.bf16.mxu0 0
      %331 = vmatpush1.bf16.xpose.msra.mxu0 0
      %332 = vmatprep.subr.bf16.mxu0 0
      %333 = vmatpush1.bf16.xpose.msra.mxu0 0
      %334 = vmatprep.subr.bf16.mxu0 0
      %335 = vmatpush1.bf16.xpose.msra.mxu0 0
      %336 = vmatprep.subr.bf16.mxu0 0
      %337 = vmatpush1.bf16.xpose.msra.mxu0 0
      %338 = vmatprep.subr.bf16.mxu0 0
      %339 = vmatpush1.bf16.xpose.msra.mxu0 0
      %340 = vmatprep.subr.bf16.mxu0 0
      %341 = vmatpush1.bf16.xpose.msra.mxu0 0
      %342 = vmatprep.subr.bf16.mxu0 0
      %343 = vmatpush1.bf16.xpose.msra.mxu0 0
      %344 = vmatprep.subr.bf16.mxu0 0
      %345 = vmatpush1.bf16.xpose.msra.mxu0 0
      %346 = vmatprep.subr.bf16.mxu0 0
      %347 = vmatpush1.bf16.xpose.msra.mxu0 0
      %348 = vmatprep.subr.bf16.mxu0 0
      %349 = vmatpush1.bf16.xpose.msra.mxu0 0
      %350 = vmatprep.subr.bf16.mxu0 0
      %351 = vmatpush1.bf16.xpose.msra.mxu0 0
      %352 = vmatprep.subr.bf16.mxu0 0
      %353 = vmatpush1.bf16.xpose.msra.mxu0 0
      %354 = vmatprep.subr.bf16.mxu0 0
      %355 = vmatpush1.bf16.xpose.msra.mxu0 0
      %356 = vmatprep.subr.bf16.mxu0 0
      %357 = vmatpush1.bf16.xpose.msra.mxu0 0
      %358 = vmatprep.subr.bf16.mxu0 0
      %359 = vmatpush1.bf16.xpose.msra.mxu0 0
      %360 = vmatprep.mubr.bf16.mxu0 0
      %361 = vmatmul.mubr.bf16.gmra.mrb[0].mxu0 %v323
      %v362 = vpop.f32.mrb[0].mxu0
      %v363 = vadd.f32 0.0, %v362
      %v364 = vpop.f32.mrb[0].mxu0
      %v365 = vpop.f32.mrb[0].mxu0
      %v366 = vpop.f32.mrb[0].mxu0
      %367 = vdwg.mxu0
      %v368 = vmul.f32 %v363, 0.35355338
      %v369 = vadd.f32 %v368, %v203
      %v370 = vsel %vm206, %v369, -inf
      %371 = vmax.xlane.f32.xlu0 %v370
      %v372 = vpop.xlane.xlu0 %371
      %v373 = vsub.f32 %v369, %v372
      %v374 = vmul.f32 %v373, 1.442695
      %v375 = vpow.pop %v374
      %v376 = vsel %vm206, %v375, 0.0
      %377 = vadd.xlane.f32.xlu0 %v376
      %v378 = vpop.xlane.xlu0 %377
      %v379 = vrcp.pop %v378
      %v380 = vmul.f32 %v375, %v379
      %v381 = vpack.c.bf16 %v380, %v380
      %382 = vrot.lane.b32.xlu0 %v205, 88
      %v383 = vpop.permute.xlu0 %382
      %v385 = vsel %vm206, %v381, 0
      %v388 = vsel %vm273, %v383, 0
      %390 = vmatprep.subr.bf16.mxu0 0
      %391 = vmatpush1.bf16.msra.mxu0 %v388
      %392 = vmatprep.subr.bf16.mxu0 0
      %393 = vmatpush1.bf16.msra.mxu0 0
      %394 = vmatprep.subr.bf16.mxu0 0
      %395 = vmatpush1.bf16.msra.mxu0 0
      %396 = vmatprep.subr.bf16.mxu0 0
      %397 = vmatpush1.bf16.msra.mxu0 0
      %398 = vmatprep.subr.bf16.mxu0 0
      %399 = vmatpush1.bf16.msra.mxu0 0
      %400 = vmatprep.subr.bf16.mxu0 0
      %401 = vmatpush1.bf16.msra.mxu0 0
      %402 = vmatprep.subr.bf16.mxu0 0
      %403 = vmatpush1.bf16.msra.mxu0 0
      %404 = vmatprep.subr.bf16.mxu0 0
      %405 = vmatpush1.bf16.msra.mxu0 0
      %406 = vmatprep.subr.bf16.mxu0 0
      %407 = vmatpush1.bf16.msra.mxu0 0
      %408 = vmatprep.subr.bf16.mxu0 0
      %409 = vmatpush1.bf16.msra.mxu0 0
      %410 = vmatprep.subr.bf16.mxu0 0
      %411 = vmatpush1.bf16.msra.mxu0 0
      %412 = vmatprep.subr.bf16.mxu0 0
      %413 = vmatpush1.bf16.msra.mxu0 0
      %414 = vmatprep.subr.bf16.mxu0 0
      %415 = vmatpush1.bf16.msra.mxu0 0
      %416 = vmatprep.subr.bf16.mxu0 0
      %417 = vmatpush1.bf16.msra.mxu0 0
      %418 = vmatprep.subr.bf16.mxu0 0
      %419 = vmatpush1.bf16.msra.mxu0 0
      %420 = vmatprep.subr.bf16.mxu0 0
      %421 = vmatpush1.bf16.msra.mxu0 0
      %422 = vmatprep.mubr.bf16.mxu0 0
      %423 = vmatmul.mubr.bf16.gmra.mrb[0].mxu0 %v385
      %v424 = vpop.f32.mrb[0].mxu0
      %v425 = vadd.f32 0.0, %v424
      %v426 = vpop.f32.mrb[0].mxu0
      %v427 = vpop.f32.mrb[0].mxu0
      %v428 = vpop.f32.mrb[0].mxu0
      %429 = vdwg.mxu0
      %430 = vrot.lane.b32.xlu0 %v204, 112
      %v431 = vpop.permute.xlu0 %430
      %432 = vrot.lane.b32.xlu0 %v205, 112
      %v433 = vpop.permute.xlu0 %432
      %v435 = vsel %vm206, %v431, 0
      %v438 = vsel %vm206, %v433, 0
      %440 = vmatprep.subr.bf16.mxu0 0
      %441 = vmatpush1.bf16.xpose.msra.mxu0 %v438
      %442 = vmatprep.subr.bf16.mxu0 0
      %443 = vmatpush1.bf16.xpose.msra.mxu0 0
      %444 = vmatprep.subr.bf16.mxu0 0
      %445 = vmatpush1.bf16.xpose.msra.mxu0 0
      %446 = vmatprep.subr.bf16.mxu0 0
      %447 = vmatpush1.bf16.xpose.msra.mxu0 0
      %448 = vmatprep.subr.bf16.mxu0 0
      %449 = vmatpush1.bf16.xpose.msra.mxu0 0
      %450 = vmatprep.subr.bf16.mxu0 0
      %451 = vmatpush1.bf16.xpose.msra.mxu0 0
      %452 = vmatprep.subr.bf16.mxu0 0
      %453 = vmatpush1.bf16.xpose.msra.mxu0 0
      %454 = vmatprep.subr.bf16.mxu0 0
      %455 = vmatpush1.bf16.xpose.msra.mxu0 0
      %456 = vmatprep.subr.bf16.mxu0 0
      %457 = vmatpush1.bf16.xpose.msra.mxu0 0
      %458 = vmatprep.subr.bf16.mxu0 0
      %459 = vmatpush1.bf16.xpose.msra.mxu0 0
      %460 = vmatprep.subr.bf16.mxu0 0
      %461 = vmatpush1.bf16.xpose.msra.mxu0 0
      %462 = vmatprep.subr.bf16.mxu0 0
      %463 = vmatpush1.bf16.xpose.msra.mxu0 0
      %464 = vmatprep.subr.bf16.mxu0 0
      %465 = vmatpush1.bf16.xpose.msra.mxu0 0
      %466 = vmatprep.subr.bf16.mxu0 0
      %467 = vmatpush1.bf16.xpose.msra.mxu0 0
      %468 = vmatprep.subr.bf16.mxu0 0
      %469 = vmatpush1.bf16.xpose.msra.mxu0 0
      %470 = vmatprep.subr.bf16.mxu0 0
      %471 = vmatpush1.bf16.xpose.msra.mxu0 0
      %472 = vmatprep.mubr.bf16.mxu0 0
      %473 = vmatmul.mubr.bf16.gmra.mrb[0].mxu0 %v435
      %v474 = vpop.f32.mrb[0].mxu0
      %v475 = vadd.f32 0.0, %v474
      %v476 = vpop.f32.mrb[0].mxu0
      %v477 = vpop.f32.mrb[0].mxu0
      %v478 = vpop.f32.mrb[0].mxu0
      %479 = vdwg.mxu0
      %v480 = vmul.f32 %v475, 0.35355338
      %v481 = vadd.f32 %v480, %v203
      %v482 = vsel %vm206, %v481, -inf
      %483 = vmax.xlane.f32.xlu0 %v482
      %v484 = vpop.xlane.xlu0 %483
      %v485 = vsub.f32 %v481, %v484
      %v486 = vmul.f32 %v485, 1.442695
      %v487 = vpow.pop %v486
      %v488 = vsel %vm206, %v487, 0.0
      %489 = vadd.xlane.f32.xlu0 %v488
      %v490 = vpop.xlane.xlu0 %489
      %v491 = vrcp.pop %v490
      %v492 = vmul.f32 %v487, %v491
      %v493 = vpack.c.bf16 %v492, %v492
      %494 = vrot.lane.b32.xlu0 %v205, 80
      %v495 = vpop.permute.xlu0 %494
      %v497 = vsel %vm206, %v493, 0
      %v500 = vsel %vm273, %v495, 0
      %502 = vmatprep.subr.bf16.mxu0 0
      %503 = vmatpush1.bf16.msra.mxu0 %v500
      %504 = vmatprep.subr.bf16.mxu0 0
      %505 = vmatpush1.bf16.msra.mxu0 0
      %506 = vmatprep.subr.bf16.mxu0 0
      %507 = vmatpush1.bf16.msra.mxu0 0
      %508 = vmatprep.subr.bf16.mxu0 0
      %509 = vmatpush1.bf16.msra.mxu0 0
      %510 = vmatprep.subr.bf16.mxu0 0
      %511 = vmatpush1.bf16.msra.mxu0 0
      %512 = vmatprep.subr.bf16.mxu0 0
      %513 = vmatpush1.bf16.msra.mxu0 0
      %514 = vmatprep.subr.bf16.mxu0 0
      %515 = vmatpush1.bf16.msra.mxu0 0
      %516 = vmatprep.subr.bf16.mxu0 0
      %517 = vmatpush1.bf16.msra.mxu0 0
      %518 = vmatprep.subr.bf16.mxu0 0
      %519 = vmatpush1.bf16.msra.mxu0 0
      %520 = vmatprep.subr.bf16.mxu0 0
      %521 = vmatpush1.bf16.msra.mxu0 0
      %522 = vmatprep.subr.bf16.mxu0 0
      %523 = vmatpush1.bf16.msra.mxu0 0
      %524 = vmatprep.subr.bf16.mxu0 0
      %525 = vmatpush1.bf16.msra.mxu0 0
      %526 = vmatprep.subr.bf16.mxu0 0
      %527 = vmatpush1.bf16.msra.mxu0 0
      %528 = vmatprep.subr.bf16.mxu0 0
      %529 = vmatpush1.bf16.msra.mxu0 0
      %530 = vmatprep.subr.bf16.mxu0 0
      %531 = vmatpush1.bf16.msra.mxu0 0
      %532 = vmatprep.subr.bf16.mxu0 0
      %533 = vmatpush1.bf16.msra.mxu0 0
      %534 = vmatprep.mubr.bf16.mxu0 0
      %535 = vmatmul.mubr.bf16.gmra.mrb[0].mxu0 %v497
      %v536 = vpop.f32.mrb[0].mxu0
      %v537 = vadd.f32 0.0, %v536
      %v538 = vpop.f32.mrb[0].mxu0
      %v539 = vpop.f32.mrb[0].mxu0
      %v540 = vpop.f32.mrb[0].mxu0
      %541 = vdwg.mxu0
      %542 = vrot.lane.b32.xlu0 %v204, 104
      %v543 = vpop.permute.xlu0 %542
      %544 = vrot.lane.b32.xlu0 %v205, 104
      %v545 = vpop.permute.xlu0 %544
      %v547 = vsel %vm206, %v543, 0
      %v550 = vsel %vm206, %v545, 0
      %552 = vmatprep.subr.bf16.mxu0 0
      %553 = vmatpush1.bf16.xpose.msra.mxu0 %v550
      %554 = vmatprep.subr.bf16.mxu0 0
      %555 = vmatpush1.bf16.xpose.msra.mxu0 0
      %556 = vmatprep.subr.bf16.mxu0 0
      %557 = vmatpush1.bf16.xpose.msra.mxu0 0
      %558 = vmatprep.subr.bf16.mxu0 0
      %559 = vmatpush1.bf16.xpose.msra.mxu0 0
      %560 = vmatprep.subr.bf16.mxu0 0
      %561 = vmatpush1.bf16.xpose.msra.mxu0 0
      %562 = vmatprep.subr.bf16.mxu0 0
      %563 = vmatpush1.bf16.xpose.msra.mxu0 0
      %564 = vmatprep.subr.bf16.mxu0 0
      %565 = vmatpush1.bf16.xpose.msra.mxu0 0
      %566 = vmatprep.subr.bf16.mxu0 0
      %567 = vmatpush1.bf16.xpose.msra.mxu0 0
      %568 = vmatprep.subr.bf16.mxu0 0
      %569 = vmatpush1.bf16.xpose.msra.mxu0 0
      %570 = vmatprep.subr.bf16.mxu0 0
      %571 = vmatpush1.bf16.xpose.msra.mxu0 0
      %572 = vmatprep.subr.bf16.mxu0 0
      %573 = vmatpush1.bf16.xpose.msra.mxu0 0
      %574 = vmatprep.subr.bf16.mxu0 0
      %575 = vmatpush1.bf16.xpose.msra.mxu0 0
      %576 = vmatprep.subr.bf16.mxu0 0
      %577 = vmatpush1.bf16.xpose.msra.mxu0 0
      %578 = vmatprep.subr.bf16.mxu0 0
      %579 = vmatpush1.bf16.xpose.msra.mxu0 0
      %580 = vmatprep.subr.bf16.mxu0 0
      %581 = vmatpush1.bf16.xpose.msra.mxu0 0
      %582 = vmatprep.subr.bf16.mxu0 0
      %583 = vmatpush1.bf16.xpose.msra.mxu0 0
      %584 = vmatprep.mubr.bf16.mxu0 0
      %585 = vmatmul.mubr.bf16.gmra.mrb[0].mxu0 %v547
      %v586 = vpop.f32.mrb[0].mxu0
      %v587 = vadd.f32 0.0, %v586
      %v588 = vpop.f32.mrb[0].mxu0
      %v589 = vpop.f32.mrb[0].mxu0
      %v590 = vpop.f32.mrb[0].mxu0
      %591 = vdwg.mxu0
      %v592 = vmul.f32 %v587, 0.35355338
      %v593 = vadd.f32 %v592, %v203
      %v594 = vsel %vm206, %v593, -inf
      %595 = vmax.xlane.f32.xlu0 %v594
      %v596 = vpop.xlane.xlu0 %595
      %v597 = vsub.f32 %v593, %v596
      %v598 = vmul.f32 %v597, 1.442695
      %v599 = vpow.pop %v598
      %v600 = vsel %vm206, %v599, 0.0
      %601 = vadd.xlane.f32.xlu0 %v600
      %v602 = vpop.xlane.xlu0 %601
      %v603 = vrcp.pop %v602
      %v604 = vmul.f32 %v599, %v603
      %v605 = vpack.c.bf16 %v604, %v604
      %606 = vrot.lane.b32.xlu0 %v205, 72
      %v607 = vpop.permute.xlu0 %606
      %v609 = vsel %vm206, %v605, 0
      %v612 = vsel %vm273, %v607, 0
      %614 = vmatprep.subr.bf16.mxu0 0
      %615 = vmatpush1.bf16.msra.mxu0 %v612
      %616 = vmatprep.subr.bf16.mxu0 0
      %617 = vmatpush1.bf16.msra.mxu0 0
      %618 = vmatprep.subr.bf16.mxu0 0
      %619 = vmatpush1.bf16.msra.mxu0 0
      %620 = vmatprep.subr.bf16.mxu0 0
      %621 = vmatpush1.bf16.msra.mxu0 0
      %622 = vmatprep.subr.bf16.mxu0 0
      %623 = vmatpush1.bf16.msra.mxu0 0
      %624 = vmatprep.subr.bf16.mxu0 0
      %625 = vmatpush1.bf16.msra.mxu0 0
      %626 = vmatprep.subr.bf16.mxu0 0
      %627 = vmatpush1.bf16.msra.mxu0 0
      %628 = vmatprep.subr.bf16.mxu0 0
      %629 = vmatpush1.bf16.msra.mxu0 0
      %630 = vmatprep.subr.bf16.mxu0 0
      %631 = vmatpush1.bf16.msra.mxu0 0
      %632 = vmatprep.subr.bf16.mxu0 0
      %633 = vmatpush1.bf16.msra.mxu0 0
      %634 = vmatprep.subr.bf16.mxu0 0
      %635 = vmatpush1.bf16.msra.mxu0 0
      %636 = vmatprep.subr.bf16.mxu0 0
      %637 = vmatpush1.bf16.msra.mxu0 0
      %638 = vmatprep.subr.bf16.mxu0 0
      %639 = vmatpush1.bf16.msra.mxu0 0
      %640 = vmatprep.subr.bf16.mxu0 0
      %641 = vmatpush1.bf16.msra.mxu0 0
      %642 = vmatprep.subr.bf16.mxu0 0
      %643 = vmatpush1.bf16.msra.mxu0 0
      %644 = vmatprep.subr.bf16.mxu0 0
      %645 = vmatpush1.bf16.msra.mxu0 0
      %646 = vmatprep.mubr.bf16.mxu0 0
      %647 = vmatmul.mubr.bf16.gmra.mrb[0].mxu0 %v609
      %v648 = vpop.f32.mrb[0].mxu0
      %v649 = vadd.f32 0.0, %v648
      %v650 = vpop.f32.mrb[0].mxu0
      %v651 = vpop.f32.mrb[0].mxu0
      %v652 = vpop.f32.mrb[0].mxu0
      %653 = vdwg.mxu0
      %655 = vrot.lane.b32.xlu0 %v425, 8
      %v656 = vpop.permute.xlu0 %655
      %659 = vrot.lane.b32.xlu0 %v537, 16
      %v660 = vpop.permute.xlu0 %659
      %663 = vrot.lane.b32.xlu0 %v649, 24
      %v664 = vpop.permute.xlu0 %663
      %v666 = vsel %vm206, %v312, %v656
      %vm667 = vcmask 130048
      %v668 = vsel %vm667, %v666, %v660
      %vm669 = vcmask 195584
      %v670 = vsel %vm669, %v668, %v664
      %vm671 = vcmask 261120
      %672 = vst.msk [vmem:[%s199] sm:$0xff] %vm671, %v670
      %p673 = scmp.lt.s32.totalorder %s14, 1
      %s674 = scalar_select %p673, %s14, 1
      %s675 = smul.addr %s674, 8
      %s676 = scalar_lea.vmem %s3, %s675
      // Predicated region
      $region33: #{translation_model_forward.27} parent=31 // pred_check
        %p677 = pneg %p110
      $region34: #{translation_model_forward.27} parent=31 // pred_check_branch
        %679 = sbr.rel (%p677) target = $region36
      $region35: #{translation_model_forward.27} parent=31 // pred_region
        _
      $region36: #{translation_model_forward.27} parent=31 // pred_fallthru
        _
    $region32: #{translation_model_forward.27} parent=5 // pred_fallthru
      _
    %p680 = scmp.le.s32.totalorder 2, %s9
    // Predicated region
    $region37: #{translation_model_forward.27} parent=5 // pred_check
      %p681 = pneg %p680
    $region38: #{translation_model_forward.27} parent=5 // pred_check_branch
      %683 = sbr.rel (%p681) target = $region40
    $region39: #{translation_model_forward.27} parent=5 // pred_region
      %s684 = ssub.s32 %s9, 2
      // Predicated region
      $region41: #{translation_model_forward.27} parent=39 // pred_check
        %p685 = pneg %p116
      $region42: #{translation_model_forward.27} parent=39 // pred_check_branch
        %687 = sbr.rel (%p685) target = $region44
      $region43: #{translation_model_forward.27} parent=39 // pred_region
        %p688 = scmp.lt.s32.totalorder %s15, 1
        %s689 = scalar_select %p688, %s15, 1
        %s690 = smul.addr %s689, 8
        %s691 = scalar_lea.vmem %s3, %s690
      $region44: #{translation_model_forward.27} parent=39 // pred_fallthru
        _
    $region40: #{translation_model_forward.27} parent=5 // pred_fallthru
      _
  $region6: #{translation_model_forward.27} parent=0 // loop_footer
    %s13 = sadd.s32 1, %s9
  $region7: #{translation_model_forward.27} parent=0 // loop_footer_branch
    %8 = sbr.rel target = $region3
  $region8: #{translation_model_forward.27} parent=0 // loop_exit
    _

// kernel: translation_model_forward.29
$region0: #{translation_model_forward.29}
  #allocation0 [shape = 'u32[]', space=smem, size = 0x4, offset = 0x4, fixed_abs, tag = 'smem constant byte address 0x4 - core index']
  #allocation1 [shape = 'u32[144,128]{1,0:T(1,128)}', space=vmem, size = 0x12000, scoped, tag = 'internal scratch']
  %s0 = inlined_call_operand.vmem [shape: f32[16,32], index: 0, kind: input, shape index: {}]
  %s1 = inlined_call_operand.vmem [shape: f32[1,32], index: 1, kind: input, shape index: {}]
  %s2 = inlined_call_operand.vmem [shape: f32[1,32], index: 2, kind: input, shape index: {}]
  %s3 = inlined_call_operand.vmem [shape: f32[32,128], index: 3, kind: input, shape index: {}]
  %s4 = inlined_call_operand.vmem [shape: f32[1,128], index: 4, kind: input, shape index: {}]
  %s5 = inlined_call_operand.vmem [shape: f32[128,32], index: 5, kind: input, shape index: {}]
  %s6 = inlined_call_operand.vmem [shape: f32[1,32], index: 6, kind: input, shape index: {}]
  %s7 = inlined_call_operand.vmem [shape: f32[16,32], index: 7, kind: output, shape index: {}]
  %s8 = sld [smem:[#allocation0]]
  $region38: #{translation_model_forward.29} parent=0
    _
  %s10 = ssub.s32 1, %s8
  %s11 = scalar_select 0, %s10, %s8
  // Predicated region
  $region2: #{translation_model_forward.29} parent=0 // pred_check
    _
  $region3: #{translation_model_forward.29} parent=0 // pred_check_branch
    %13 = sbr.rel (0) target = $region5
  $region4: #{translation_model_forward.29} parent=0 // pred_region
    _
  $region5: #{translation_model_forward.29} parent=0 // pred_fallthru
    _
  // Predicated region
  $region6: #{translation_model_forward.29} parent=0 // pred_check
    _
  $region7: #{translation_model_forward.29} parent=0 // pred_check_branch
    %15 = sbr.rel (0) target = $region9
  $region8: #{translation_model_forward.29} parent=0 // pred_region
    _
  $region9: #{translation_model_forward.29} parent=0 // pred_fallthru
    _
  // Predicated region
  $region10: #{translation_model_forward.29} parent=0 // pred_check
    _
  $region11: #{translation_model_forward.29} parent=0 // pred_check_branch
    %17 = sbr.rel (0) target = $region13
  $region12: #{translation_model_forward.29} parent=0 // pred_region
    _
  $region13: #{translation_model_forward.29} parent=0 // pred_fallthru
    _
  // Predicated region
  $region14: #{translation_model_forward.29} parent=0 // pred_check
    _
  $region15: #{translation_model_forward.29} parent=0 // pred_check_branch
    %19 = sbr.rel (0) target = $region17
  $region16: #{translation_model_forward.29} parent=0 // pred_region
    _
  $region17: #{translation_model_forward.29} parent=0 // pred_fallthru
    _
  // Predicated region
  $region18: #{translation_model_forward.29} parent=0 // pred_check
    _
  $region19: #{translation_model_forward.29} parent=0 // pred_check_branch
    %21 = sbr.rel (0) target = $region21
  $region20: #{translation_model_forward.29} parent=0 // pred_region
    _
  $region21: #{translation_model_forward.29} parent=0 // pred_fallthru
    _
  // Predicated region
  $region22: #{translation_model_forward.29} parent=0 // pred_check
    _
  $region23: #{translation_model_forward.29} parent=0 // pred_check_branch
    %23 = sbr.rel (0) target = $region25
  $region24: #{translation_model_forward.29} parent=0 // pred_region
    _
  $region25: #{translation_model_forward.29} parent=0 // pred_fallthru
    _
  // Predicated region
  $region26: #{translation_model_forward.29} parent=0 // pred_check
    _
  $region27: #{translation_model_forward.29} parent=0 // pred_check_branch
    %25 = sbr.rel (0) target = $region29
  $region28: #{translation_model_forward.29} parent=0 // pred_region
    _
  $region29: #{translation_model_forward.29} parent=0 // pred_fallthru
    _
  %v27 = vld [vmem:[%s0] sm:$0xff]
  %v28 = vld [vmem:[%s0 + $0x8] sm:$0xff]
  %v29 = vld [vmem:[%s1] sm:$0x1]
  %v30 = vld [vmem:[%s2] sm:$0x1]
  %vm31 = vcmask 261120
  %v32 = vsel %vm31, %v27, 0.0
  %33 = vadd.xlane.f32.xlu0 %v32
  %v34 = vpop.xlane.xlu0 %33
  %v35 = vsel %vm31, %v28, 0.0
  %36 = vadd.xlane.f32.xlu0 %v35
  %v37 = vpop.xlane.xlu0 %36
  %v38 = vrcp.pop 32.0
  %v39 = vmul.f32 %v34, %v38
  %v40 = vmul.f32 %v37, %v38
  %v41 = vsub.f32 %v27, %v39
  %v42 = vsub.f32 %v28, %v40
  %v43 = vmul.f32 %v41, %v41
  %v44 = vmul.f32 %v42, %v42
  %v45 = vsel %vm31, %v43, 0.0
  %46 = vadd.xlane.f32.xlu0 %v45
  %v47 = vpop.xlane.xlu0 %46
  %v48 = vsel %vm31, %v44, 0.0
  %49 = vadd.xlane.f32.xlu0 %v48
  %v50 = vpop.xlane.xlu0 %49
  %v51 = vmul.f32 %v47, %v38
  %v52 = vmul.f32 %v50, %v38
  %v53 = vadd.f32 %v51, 1e-05
  %v54 = vadd.f32 %v52, 1e-05
  %v55 = vrsqrt.pop %v53
  %v56 = vrsqrt.pop %v54
  %v57 = vmul.f32 %v41, %v55
  %v58 = vmul.f32 %v42, %v56
  %v60 = vlaneseq
  %v61 = vshrl.u32 %v60, 7
  %v62 = vsub.s32 0, %v61
  %v63 = vrot.slane %v29, %v62
  %v65 = vmul.f32 %v57, %v63
  %v66 = vmul.f32 %v58, %v63
  %v68 = vlaneseq
  %v69 = vshrl.u32 %v68, 7
  %v70 = vsub.s32 0, %v69
  %v71 = vrot.slane %v30, %v70
  %v73 = vadd.f32 %v65, %v71
  %v74 = vadd.f32 %v66, %v71
  %v75 = vld [vmem:[%s3] sm:$0xff]
  %v76 = vld [vmem:[%s3 + $0x8] sm:$0xff]
  %v77 = vld [vmem:[%s3 + $0x10] sm:$0xff]
  %v78 = vld [vmem:[%s3 + $0x18] sm:$0xff]
  %v79 = vpack.c.bf16 %v74, %v73
  %v80 = vpack.c.bf16 %v76, %v75
  %v81 = vpack.c.bf16 %v78, %v77
  %v82 = vld [vmem:[%s4] sm:$0x1]
  %v84 = vlaneseq
  %v85 = vshrl.u32 %v84, 7
  %v86 = vsub.s32 0, %v85
  %v87 = vrot.slane %v82, %v86
  %v90 = vsel %vm31, %v79, 0
  %92 = vmatprep.subr.bf16.mxu0 0
  %93 = vmatpush1.bf16.msra.mxu0 %v80
  %94 = vmatprep.subr.bf16.mxu0 0
  %95 = vmatpush1.bf16.msra.mxu0 %v81
  %96 = vmatprep.subr.bf16.mxu0 0
  %97 = vmatpush1.bf16.msra.mxu0 0
  %98 = vmatprep.subr.bf16.mxu0 0
  %99 = vmatpush1.bf16.msra.mxu0 0
  %100 = vmatprep.subr.bf16.mxu0 0
  %101 = vmatpush1.bf16.msra.mxu0 0
  %102 = vmatprep.subr.bf16.mxu0 0
  %103 = vmatpush1.bf16.msra.mxu0 0
  %104 = vmatprep.subr.bf16.mxu0 0
  %105 = vmatpush1.bf16.msra.mxu0 0
  %106 = vmatprep.subr.bf16.mxu0 0
  %107 = vmatpush1.bf16.msra.mxu0 0
  %108 = vmatprep.subr.bf16.mxu0 0
  %109 = vmatpush1.bf16.msra.mxu0 0
  %110 = vmatprep.subr.bf16.mxu0 0
  %111 = vmatpush1.bf16.msra.mxu0 0
  %112 = vmatprep.subr.bf16.mxu0 0
  %113 = vmatpush1.bf16.msra.mxu0 0
  %114 = vmatprep.subr.bf16.mxu0 0
  %115 = vmatpush1.bf16.msra.mxu0 0
  %116 = vmatprep.subr.bf16.mxu0 0
  %117 = vmatpush1.bf16.msra.mxu0 0
  %118 = vmatprep.subr.bf16.mxu0 0
  %119 = vmatpush1.bf16.msra.mxu0 0
  %120 = vmatprep.subr.bf16.mxu0 0
  %121 = vmatpush1.bf16.msra.mxu0 0
  %122 = vmatprep.subr.bf16.mxu0 0
  %123 = vmatpush1.bf16.msra.mxu0 0
  %124 = vmatprep.mubr.bf16.mxu0 0
  %125 = vmatmul.mubr.bf16.gmra.mrb[0].mxu0 %v90
  %v126 = vpop.f32.mrb[0].mxu0
  %v127 = vadd.f32 %v87, %v126
  %v128 = vpop.f32.mrb[0].mxu0
  %v129 = vpop.f32.mrb[0].mxu0
  %v130 = vadd.f32 %v87, %v129
  %v131 = vpop.f32.mrb[0].mxu0
  %132 = vdwg.mxu0
  %v133 = vmax.f32 %v127, 0.0
  %v134 = vmax.f32 %v130, 0.0
  %v135 = vld [vmem:[%s5] sm:$0xff]
  %v136 = vld [vmem:[%s5 + $0x8] sm:$0xff]
  %v137 = vld [vmem:[%s5 + $0x10] sm:$0xff]
  %v138 = vld [vmem:[%s5 + $0x18] sm:$0xff]
  %v139 = vld [vmem:[%s5 + $0x20] sm:$0xff]
  %v140 = vld [vmem:[%s5 + $0x28] sm:$0xff]
  %v141 = vld [vmem:[%s5 + $0x30] sm:$0xff]
  %v142 = vld [vmem:[%s5 + $0x38] sm:$0xff]
  %v143 = vld [vmem:[%s5 + $0x40] sm:$0xff]
  %v144 = vld [vmem:[%s5 + $0x48] sm:$0xff]
  %v145 = vld [vmem:[%s5 + $0x50] sm:$0xff]
  %v146 = vld [vmem:[%s5 + $0x58] sm:$0xff]
  %v147 = vld [vmem:[%s5 + $0x60] sm:$0xff]
  %v148 = vld [vmem:[%s5 + $0x68] sm:$0xff]
  %v149 = vld [vmem:[%s5 + $0x70] sm:$0xff]
  %v150 = vld [vmem:[%s5 + $0x78] sm:$0xff]
  %v151 = vpack.c.bf16 %v134, %v133
  %v152 = vpack.c.bf16 %v136, %v135
  %v153 = vpack.c.bf16 %v138, %v137
  %v154 = vpack.c.bf16 %v140, %v139
  %v155 = vpack.c.bf16 %v142, %v141
  %v156 = vpack.c.bf16 %v144, %v143
  %v157 = vpack.c.bf16 %v146, %v145
  %v158 = vpack.c.bf16 %v148, %v147
  %v159 = vpack.c.bf16 %v150, %v149
  %160 = vmatprep.subr.bf16.mxu0 0
  %161 = vmatpush1.bf16.msra.mxu0 %v152
  %162 = vmatprep.subr.bf16.mxu0 0
  %163 = vmatpush1.bf16.msra.mxu0 %v153
  %164 = vmatprep.subr.bf16.mxu0 0
  %165 = vmatpush1.bf16.msra.mxu0 %v154
  %166 = vmatprep.subr.bf16.mxu0 0
  %167 = vmatpush1.bf16.msra.mxu0 %v155
  %168 = vmatprep.subr.bf16.mxu0 0
  %169 = vmatpush1.bf16.msra.mxu0 %v156
  %170 = vmatprep.subr.bf16.mxu0 0
  %171 = vmatpush1.bf16.msra.mxu0 %v157
  %172 = vmatprep.subr.bf16.mxu0 0
  %173 = vmatpush1.bf16.msra.mxu0 %v158
  %174 = vmatprep.subr.bf16.mxu0 0
  %175 = vmatpush1.bf16.msra.mxu0 %v159
  %176 = vmatprep.subr.bf16.mxu0 0
  %177 = vmatpush1.bf16.msra.mxu0 0
  %178 = vmatprep.subr.bf16.mxu0 0
  %179 = vmatpush1.bf16.msra.mxu0 0
  %180 = vmatprep.subr.bf16.mxu0 0
  %181 = vmatpush1.bf16.msra.mxu0 0
  %182 = vmatprep.subr.bf16.mxu0 0
  %183 = vmatpush1.bf16.msra.mxu0 0
  %184 = vmatprep.subr.bf16.mxu0 0
  %185 = vmatpush1.bf16.msra.mxu0 0
  %186 = vmatprep.subr.bf16.mxu0 0
  %187 = vmatpush1.bf16.msra.mxu0 0
  %188 = vmatprep.subr.bf16.mxu0 0
  %189 = vmatpush1.bf16.msra.mxu0 0
  %190 = vmatprep.subr.bf16.mxu0 0
  %191 = vmatpush1.bf16.msra.mxu0 0
  %192 = vmatprep.mubr.bf16.mxu0 0
  %193 = vmatmul.mubr.bf16.gmra.mrb[0].mxu0 %v151
  %v194 = vpop.f32.mrb[0].mxu0
  %v195 = vadd.f32 0.0, %v194
  %v196 = vpop.f32.mrb[0].mxu0
  %v197 = vpop.f32.mrb[0].mxu0
  %v198 = vadd.f32 0.0, %v197
  %v199 = vpop.f32.mrb[0].mxu0
  %200 = vdwg.mxu0
  %v201 = vadd.f32 %v27, %v195
  %v202 = vadd.f32 %v28, %v198
  %v203 = vld [vmem:[%s6] sm:$0x1]
  %v205 = vlaneseq
  %v206 = vshrl.u32 %v205, 7
  %v207 = vsub.s32 0, %v206
  %v208 = vrot.slane %v203, %v207
  %v210 = vadd.f32 %v201, %v208
  %v211 = vadd.f32 %v202, %v208
  %212 = vst.msk [vmem:[%s7] sm:$0xff] %vm31, %v210
  %213 = vst.msk [vmem:[%s7 + $0x8] sm:$0xff] %vm31, %v211
  // Predicated region
  $region30: #{translation_model_forward.29} parent=0 // pred_check
    _
  $region31: #{translation_model_forward.29} parent=0 // pred_check_branch
    %215 = sbr.rel (0) target = $region33
  $region32: #{translation_model_forward.29} parent=0 // pred_region
    _
  $region33: #{translation_model_forward.29} parent=0 // pred_fallthru
    _
  // Predicated region
  $region34: #{translation_model_forward.29} parent=0 // pred_check
    _
  $region35: #{translation_model_forward.29} parent=0 // pred_check_branch
    %217 = sbr.rel (0) target = $region37
  $region36: #{translation_model_forward.29} parent=0 // pred_region
    _
  $region37: #{translation_model_forward.29} parent=0 // pred_fallthru
    _

// kernel: translation_model_forward.34
$region0: #{translation_model_forward.34}
  #allocation0 [shape = 'u32[]', space=smem, size = 0x4, offset = 0x4, fixed_abs, tag = 'smem constant byte address 0x4 - core index']
  #allocation1 [shape = 'u32[144,128]{1,0:T(1,128)}', space=vmem, size = 0x12000, scoped, tag = 'internal scratch']
  %s0 = inlined_call_operand.vmem [shape: f32[16,32], index: 0, kind: input, shape index: {}]
  %s1 = inlined_call_operand.vmem [shape: f32[1,32], index: 1, kind: input, shape index: {}]
  %s2 = inlined_call_operand.vmem [shape: f32[1,32], index: 2, kind: input, shape index: {}]
  %s3 = inlined_call_operand.vmem [shape: f32[16,32], index: 3, kind: output, shape index: {}]
  %s4 = sld [smem:[#allocation0]]
  $region22: #{translation_model_forward.34} parent=0
    _
  %s6 = ssub.s32 1, %s4
  %s7 = scalar_select 0, %s6, %s4
  // Predicated region
  $region2: #{translation_model_forward.34} parent=0 // pred_check
    _
  $region3: #{translation_model_forward.34} parent=0 // pred_check_branch
    %9 = sbr.rel (0) target = $region5
  $region4: #{translation_model_forward.34} parent=0 // pred_region
    _
  $region5: #{translation_model_forward.34} parent=0 // pred_fallthru
    _
  // Predicated region
  $region6: #{translation_model_forward.34} parent=0 // pred_check
    _
  $region7: #{translation_model_forward.34} parent=0 // pred_check_branch
    %11 = sbr.rel (0) target = $region9
  $region8: #{translation_model_forward.34} parent=0 // pred_region
    _
  $region9: #{translation_model_forward.34} parent=0 // pred_fallthru
    _
  // Predicated region
  $region10: #{translation_model_forward.34} parent=0 // pred_check
    _
  $region11: #{translation_model_forward.34} parent=0 // pred_check_branch
    %13 = sbr.rel (0) target = $region13
  $region12: #{translation_model_forward.34} parent=0 // pred_region
    _
  $region13: #{translation_model_forward.34} parent=0 // pred_fallthru
    _
  %v14 = vld [vmem:[%s0] sm:$0xff]
  %v15 = vld [vmem:[%s0 + $0x8] sm:$0xff]
  %v16 = vld [vmem:[%s1] sm:$0x1]
  %v17 = vld [vmem:[%s2] sm:$0x1]
  %vm18 = vcmask 261120
  %v19 = vsel %vm18, %v14, 0.0
  %20 = vadd.xlane.f32.xlu0 %v19
  %v21 = vpop.xlane.xlu0 %20
  %v22 = vsel %vm18, %v15, 0.0
  %23 = vadd.xlane.f32.xlu0 %v22
  %v24 = vpop.xlane.xlu0 %23
  %v25 = vrcp.pop 32.0
  %v26 = vmul.f32 %v21, %v25
  %v27 = vmul.f32 %v24, %v25
  %v28 = vsub.f32 %v14, %v26
  %v29 = vsub.f32 %v15, %v27
  %v30 = vmul.f32 %v28, %v28
  %v31 = vmul.f32 %v29, %v29
  %v32 = vsel %vm18, %v30, 0.0
  %33 = vadd.xlane.f32.xlu0 %v32
  %v34 = vpop.xlane.xlu0 %33
  %v35 = vsel %vm18, %v31, 0.0
  %36 = vadd.xlane.f32.xlu0 %v35
  %v37 = vpop.xlane.xlu0 %36
  %v38 = vmul.f32 %v34, %v25
  %v39 = vmul.f32 %v37, %v25
  %v40 = vadd.f32 %v38, 1e-05
  %v41 = vadd.f32 %v39, 1e-05
  %v42 = vrsqrt.pop %v40
  %v43 = vrsqrt.pop %v41
  %v44 = vmul.f32 %v28, %v42
  %v45 = vmul.f32 %v29, %v43
  %v47 = vlaneseq
  %v48 = vshrl.u32 %v47, 7
  %v49 = vsub.s32 0, %v48
  %v50 = vrot.slane %v16, %v49
  %v52 = vmul.f32 %v44, %v50
  %v53 = vmul.f32 %v45, %v50
  %v55 = vlaneseq
  %v56 = vshrl.u32 %v55, 7
  %v57 = vsub.s32 0, %v56
  %v58 = vrot.slane %v17, %v57
  %v60 = vadd.f32 %v52, %v58
  %v61 = vadd.f32 %v53, %v58
  %62 = vst.msk [vmem:[%s3] sm:$0xff] %vm18, %v60
  %63 = vst.msk [vmem:[%s3 + $0x8] sm:$0xff] %vm18, %v61
  // Predicated region
  $region14: #{translation_model_forward.34} parent=0 // pred_check
    _
  $region15: #{translation_model_forward.34} parent=0 // pred_check_branch
    %65 = sbr.rel (0) target = $region17
  $region16: #{translation_model_forward.34} parent=0 // pred_region
    _
  $region17: #{translation_model_forward.34} parent=0 // pred_fallthru
    _
  // Predicated region
  $region18: #{translation_model_forward.34} parent=0 // pred_check
    _
  $region19: #{translation_model_forward.34} parent=0 // pred_check_branch
    %67 = sbr.rel (0) target = $region21
  $region20: #{translation_model_forward.34} parent=0 // pred_region
    _
  $region21: #{translation_model_forward.34} parent=0 // pred_fallthru
    _

// kernel: translation_model_forward.35
$region0: #{translation_model_forward.35}
  #allocation0 [shape = 'u32[]', space=smem, size = 0x4, offset = 0x4, fixed_abs, tag = 'smem constant byte address 0x4 - core index']
  #allocation1 [shape = 'u32[144,128]{1,0:T(1,128)}', space=vmem, size = 0x12000, scoped, tag = 'internal scratch']
  %s0 = inlined_call_operand.vmem [shape: f32[14,32], index: 0, kind: input, shape index: {}]
  %s1 = inlined_call_operand.vmem [shape: f32[1,32], index: 1, kind: input, shape index: {}]
  %s2 = inlined_call_operand.vmem [shape: f32[1,32], index: 2, kind: input, shape index: {}]
  %s3 = inlined_call_operand.vmem [shape: f32[32,128], index: 3, kind: input, shape index: {}]
  %s4 = inlined_call_operand.vmem [shape: f32[1,128], index: 4, kind: input, shape index: {}]
  %s5 = inlined_call_operand.vmem [shape: f32[14,128], index: 5, kind: output, shape index: {}]
  %s6 = sld [smem:[#allocation0]]
  $region30: #{translation_model_forward.35} parent=0
    _
  %s8 = ssub.s32 1, %s6
  %s9 = scalar_select 0, %s8, %s6
  // Predicated region
  $region2: #{translation_model_forward.35} parent=0 // pred_check
    _
  $region3: #{translation_model_forward.35} parent=0 // pred_check_branch
    %11 = sbr.rel (0) target = $region5
  $region4: #{translation_model_forward.35} parent=0 // pred_region
    _
  $region5: #{translation_model_forward.35} parent=0 // pred_fallthru
    _
  // Predicated region
  $region6: #{translation_model_forward.35} parent=0 // pred_check
    _
  $region7: #{translation_model_forward.35} parent=0 // pred_check_branch
    %13 = sbr.rel (0) target = $region9
  $region8: #{translation_model_forward.35} parent=0 // pred_region
    _
  $region9: #{translation_model_forward.35} parent=0 // pred_fallthru
    _
  // Predicated region
  $region10: #{translation_model_forward.35} parent=0 // pred_check
    _
  $region11: #{translation_model_forward.35} parent=0 // pred_check_branch
    %15 = sbr.rel (0) target = $region13
  $region12: #{translation_model_forward.35} parent=0 // pred_region
    _
  $region13: #{translation_model_forward.35} parent=0 // pred_fallthru
    _
  // Predicated region
  $region14: #{translation_model_forward.35} parent=0 // pred_check
    _
  $region15: #{translation_model_forward.35} parent=0 // pred_check_branch
    %17 = sbr.rel (0) target = $region17
  $region16: #{translation_model_forward.35} parent=0 // pred_region
    _
  $region17: #{translation_model_forward.35} parent=0 // pred_fallthru
    _
  // Predicated region
  $region18: #{translation_model_forward.35} parent=0 // pred_check
    _
  $region19: #{translation_model_forward.35} parent=0 // pred_check_branch
    %19 = sbr.rel (0) target = $region21
  $region20: #{translation_model_forward.35} parent=0 // pred_region
    _
  $region21: #{translation_model_forward.35} parent=0 // pred_fallthru
    _
  %v21 = vld [vmem:[%s0] sm:$0xff]
  %v22 = vld [vmem:[%s0 + $0x8] sm:$0x3f]
  %v23 = vld [vmem:[%s1] sm:$0x1]
  %v24 = vld [vmem:[%s2] sm:$0x1]
  %vm25 = vcmask 261120
  %v26 = vsel %vm25, %v21, 0.0
  %27 = vadd.xlane.f32.xlu0 %v26
  %v28 = vpop.xlane.xlu0 %27
  %vm29 = vcmask 259072
  %v30 = vsel %vm29, %v22, 0.0
  %31 = vadd.xlane.f32.xlu0 %v30
  %v32 = vpop.xlane.xlu0 %31
  %v33 = vrcp.pop 32.0
  %v34 = vmul.f32 %v28, %v33
  %v35 = vmul.f32 %v32, %v33
  %v36 = vsub.f32 %v21, %v34
  %v37 = vsub.f32 %v22, %v35
  %v38 = vmul.f32 %v36, %v36
  %v39 = vmul.f32 %v37, %v37
  %v40 = vsel %vm25, %v38, 0.0
  %41 = vadd.xlane.f32.xlu0 %v40
  %v42 = vpop.xlane.xlu0 %41
  %v43 = vsel %vm29, %v39, 0.0
  %44 = vadd.xlane.f32.xlu0 %v43
  %v45 = vpop.xlane.xlu0 %44
  %v46 = vmul.f32 %v42, %v33
  %v47 = vmul.f32 %v45, %v33
  %v48 = vadd.f32 %v46, 1e-05
  %v49 = vadd.f32 %v47, 1e-05
  %v50 = vrsqrt.pop %v48
  %v51 = vrsqrt.pop %v49
  %v52 = vmul.f32 %v36, %v50
  %v53 = vmul.f32 %v37, %v51
  %v55 = vlaneseq
  %v56 = vshrl.u32 %v55, 7
  %v57 = vsub.s32 0, %v56
  %v58 = vrot.slane %v23, %v57
  %v60 = vmul.f32 %v52, %v58
  %v61 = vmul.f32 %v53, %v58
  %v63 = vlaneseq
  %v64 = vshrl.u32 %v63, 7
  %v65 = vsub.s32 0, %v64
  %v66 = vrot.slane %v24, %v65
  %v68 = vadd.f32 %v60, %v66
  %v69 = vadd.f32 %v61, %v66
  %v70 = vld [vmem:[%s3] sm:$0xff]
  %v71 = vld [vmem:[%s3 + $0x8] sm:$0xff]
  %v72 = vld [vmem:[%s3 + $0x10] sm:$0xff]
  %v73 = vld [vmem:[%s3 + $0x18] sm:$0xff]
  %v74 = vpack.c.bf16 %v69, %v68
  %v75 = vpack.c.bf16 %v71, %v70
  %v76 = vpack.c.bf16 %v73, %v72
  %v77 = vld [vmem:[%s4] sm:$0x1]
  %v79 = vlaneseq
  %v80 = vshrl.u32 %v79, 7
  %v81 = vsub.s32 0, %v80
  %v82 = vrot.slane %v77, %v81
  %v85 = vsel %vm25, %v74, 0
  %87 = vmatprep.subr.bf16.mxu0 0
  %88 = vmatpush1.bf16.msra.mxu0 %v75
  %89 = vmatprep.subr.bf16.mxu0 0
  %90 = vmatpush1.bf16.msra.mxu0 %v76
  %91 = vmatprep.subr.bf16.mxu0 0
  %92 = vmatpush1.bf16.msra.mxu0 0
  %93 = vmatprep.subr.bf16.mxu0 0
  %94 = vmatpush1.bf16.msra.mxu0 0
  %95 = vmatprep.subr.bf16.mxu0 0
  %96 = vmatpush1.bf16.msra.mxu0 0
  %97 = vmatprep.subr.bf16.mxu0 0
  %98 = vmatpush1.bf16.msra.mxu0 0
  %99 = vmatprep.subr.bf16.mxu0 0
  %100 = vmatpush1.bf16.msra.mxu0 0
  %101 = vmatprep.subr.bf16.mxu0 0
  %102 = vmatpush1.bf16.msra.mxu0 0
  %103 = vmatprep.subr.bf16.mxu0 0
  %104 = vmatpush1.bf16.msra.mxu0 0
  %105 = vmatprep.subr.bf16.mxu0 0
  %106 = vmatpush1.bf16.msra.mxu0 0
  %107 = vmatprep.subr.bf16.mxu0 0
  %108 = vmatpush1.bf16.msra.mxu0 0
  %109 = vmatprep.subr.bf16.mxu0 0
  %110 = vmatpush1.bf16.msra.mxu0 0
  %111 = vmatprep.subr.bf16.mxu0 0
  %112 = vmatpush1.bf16.msra.mxu0 0
  %113 = vmatprep.subr.bf16.mxu0 0
  %114 = vmatpush1.bf16.msra.mxu0 0
  %115 = vmatprep.subr.bf16.mxu0 0
  %116 = vmatpush1.bf16.msra.mxu0 0
  %117 = vmatprep.subr.bf16.mxu0 0
  %118 = vmatpush1.bf16.msra.mxu0 0
  %119 = vmatprep.mubr.bf16.mxu0 0
  %120 = vmatmul.mubr.bf16.gmra.mrb[0].mxu0 %v85
  %v121 = vpop.f32.mrb[0].mxu0
  %v122 = vadd.f32 %v82, %v121
  %v123 = vpop.f32.mrb[0].mxu0
  %v124 = vpop.f32.mrb[0].mxu0
  %v125 = vadd.f32 %v82, %v124
  %v126 = vpop.f32.mrb[0].mxu0
  %127 = vdwg.mxu0
  %128 = vst [vmem:[%s5] sm:$0xff] %v122
  %129 = vst [vmem:[%s5 + $0x8] sm:$0x3f] %v125
  // Predicated region
  $region22: #{translation_model_forward.35} parent=0 // pred_check
    _
  $region23: #{translation_model_forward.35} parent=0 // pred_check_branch
    %131 = sbr.rel (0) target = $region25
  $region24: #{translation_model_forward.35} parent=0 // pred_region
    _
  $region25: #{translation_model_forward.35} parent=0 // pred_fallthru
    _
  // Predicated region
  $region26: #{translation_model_forward.35} parent=0 // pred_check
    _
  $region27: #{translation_model_forward.35} parent=0 // pred_check_branch
    %133 = sbr.rel (0) target = $region29
  $region28: #{translation_model_forward.35} parent=0 // pred_region
    _
  $region29: #{translation_model_forward.35} parent=0 // pred_fallthru
    _

// kernel: translation_model_forward.37
$region0: #{translation_model_forward.37}
  #allocation0 [shape = 'u32[]', space=smem, size = 0x4, offset = 0x4, fixed_abs, tag = 'smem constant byte address 0x4 - core index']
  #allocation1 [shape = 'u32[144,128]{1,0:T(1,128)}', space=vmem, size = 0x12000, scoped, tag = 'internal scratch']
  %s0 = inlined_call_operand.vmem [shape: f32[14,32], index: 0, kind: input, shape index: {}]
  %s1 = inlined_call_operand.vmem [shape: f32[32,128], index: 1, kind: input, shape index: {}]
  %s2 = inlined_call_operand.vmem [shape: f32[1,128], index: 2, kind: input, shape index: {}]
  %s3 = inlined_call_operand.vmem [shape: f32[14,128], index: 3, kind: output, shape index: {}]
  %s4 = sld [smem:[#allocation0]]
  $region22: #{translation_model_forward.37} parent=0
    _
  %s6 = ssub.s32 1, %s4
  %s7 = scalar_select 0, %s6, %s4
  // Predicated region
  $region2: #{translation_model_forward.37} parent=0 // pred_check
    _
  $region3: #{translation_model_forward.37} parent=0 // pred_check_branch
    %9 = sbr.rel (0) target = $region5
  $region4: #{translation_model_forward.37} parent=0 // pred_region
    _
  $region5: #{translation_model_forward.37} parent=0 // pred_fallthru
    _
  // Predicated region
  $region6: #{translation_model_forward.37} parent=0 // pred_check
    _
  $region7: #{translation_model_forward.37} parent=0 // pred_check_branch
    %11 = sbr.rel (0) target = $region9
  $region8: #{translation_model_forward.37} parent=0 // pred_region
    _
  $region9: #{translation_model_forward.37} parent=0 // pred_fallthru
    _
  // Predicated region
  $region10: #{translation_model_forward.37} parent=0 // pred_check
    _
  $region11: #{translation_model_forward.37} parent=0 // pred_check_branch
    %13 = sbr.rel (0) target = $region13
  $region12: #{translation_model_forward.37} parent=0 // pred_region
    _
  $region13: #{translation_model_forward.37} parent=0 // pred_fallthru
    _
  %v15 = vld [vmem:[%s0] sm:$0xff]
  %v16 = vld [vmem:[%s0 + $0x8] sm:$0x3f]
  %v17 = vld [vmem:[%s1] sm:$0xff]
  %v18 = vld [vmem:[%s1 + $0x8] sm:$0xff]
  %v19 = vld [vmem:[%s1 + $0x10] sm:$0xff]
  %v20 = vld [vmem:[%s1 + $0x18] sm:$0xff]
  %v21 = vpack.c.bf16 %v16, %v15
  %v22 = vpack.c.bf16 %v18, %v17
  %v23 = vpack.c.bf16 %v20, %v19
  %v24 = vld [vmem:[%s2] sm:$0x1]
  %v26 = vlaneseq
  %v27 = vshrl.u32 %v26, 7
  %v28 = vsub.s32 0, %v27
  %v29 = vrot.slane %v24, %v28
  %vm31 = vcmask 261120
  %v33 = vsel %vm31, %v21, 0
  %35 = vmatprep.subr.bf16.mxu0 0
  %36 = vmatpush1.bf16.msra.mxu0 %v22
  %37 = vmatprep.subr.bf16.mxu0 0
  %38 = vmatpush1.bf16.msra.mxu0 %v23
  %39 = vmatprep.subr.bf16.mxu0 0
  %40 = vmatpush1.bf16.msra.mxu0 0
  %41 = vmatprep.subr.bf16.mxu0 0
  %42 = vmatpush1.bf16.msra.mxu0 0
  %43 = vmatprep.subr.bf16.mxu0 0
  %44 = vmatpush1.bf16.msra.mxu0 0
  %45 = vmatprep.subr.bf16.mxu0 0
  %46 = vmatpush1.bf16.msra.mxu0 0
  %47 = vmatprep.subr.bf16.mxu0 0
  %48 = vmatpush1.bf16.msra.mxu0 0
  %49 = vmatprep.subr.bf16.mxu0 0
  %50 = vmatpush1.bf16.msra.mxu0 0
  %51 = vmatprep.subr.bf16.mxu0 0
  %52 = vmatpush1.bf16.msra.mxu0 0
  %53 = vmatprep.subr.bf16.mxu0 0
  %54 = vmatpush1.bf16.msra.mxu0 0
  %55 = vmatprep.subr.bf16.mxu0 0
  %56 = vmatpush1.bf16.msra.mxu0 0
  %57 = vmatprep.subr.bf16.mxu0 0
  %58 = vmatpush1.bf16.msra.mxu0 0
  %59 = vmatprep.subr.bf16.mxu0 0
  %60 = vmatpush1.bf16.msra.mxu0 0
  %61 = vmatprep.subr.bf16.mxu0 0
  %62 = vmatpush1.bf16.msra.mxu0 0
  %63 = vmatprep.subr.bf16.mxu0 0
  %64 = vmatpush1.bf16.msra.mxu0 0
  %65 = vmatprep.subr.bf16.mxu0 0
  %66 = vmatpush1.bf16.msra.mxu0 0
  %67 = vmatprep.mubr.bf16.mxu0 0
  %68 = vmatmul.mubr.bf16.gmra.mrb[0].mxu0 %v33
  %v69 = vpop.f32.mrb[0].mxu0
  %v70 = vadd.f32 %v29, %v69
  %v71 = vpop.f32.mrb[0].mxu0
  %v72 = vpop.f32.mrb[0].mxu0
  %v73 = vadd.f32 %v29, %v72
  %v74 = vpop.f32.mrb[0].mxu0
  %75 = vdwg.mxu0
  %76 = vst [vmem:[%s3] sm:$0xff] %v70
  %77 = vst [vmem:[%s3 + $0x8] sm:$0x3f] %v73
  // Predicated region
  $region14: #{translation_model_forward.37} parent=0 // pred_check
    _
  $region15: #{translation_model_forward.37} parent=0 // pred_check_branch
    %79 = sbr.rel (0) target = $region17
  $region16: #{translation_model_forward.37} parent=0 // pred_region
    _
  $region17: #{translation_model_forward.37} parent=0 // pred_fallthru
    _
  // Predicated region
  $region18: #{translation_model_forward.37} parent=0 // pred_check
    _
  $region19: #{translation_model_forward.37} parent=0 // pred_check_branch
    %81 = sbr.rel (0) target = $region21
  $region20: #{translation_model_forward.37} parent=0 // pred_region
    _
  $region21: #{translation_model_forward.37} parent=0 // pred_fallthru
    _

// kernel: translation_model_forward.36
$region0: #{translation_model_forward.36}
  #allocation0 [shape = 'u32[]', space=smem, size = 0x4, offset = 0x4, fixed_abs, tag = 'smem constant byte address 0x4 - core index']
  #allocation1 [shape = 'u32[144,128]{1,0:T(1,128)}', space=vmem, size = 0x12000, scoped, tag = 'internal scratch']
  %s0 = inlined_call_operand.vmem [shape: f32[2,7,32], index: 0, kind: input, shape index: {}]
  %s1 = inlined_call_operand.vmem [shape: f32[2,7,64], index: 1, kind: input, shape index: {}]
  %s2 = inlined_call_operand.vmem [shape: f32[2,7,7], index: 2, kind: input, shape index: {}]
  %s3 = inlined_call_operand.vmem [shape: f32[2,7,32], index: 3, kind: output, shape index: {}]
  %s4 = sld [smem:[#allocation0]]
  $region45: #{translation_model_forward.36} parent=0
    _
  %s6 = ssub.s32 1, %s4
  %s7 = scalar_select 0, %s6, %s4
  loop: start=0, step=1, limit=4
  $region2: #{translation_model_forward.36} parent=0 // loop_pre_header
    _
  $region3: #{translation_model_forward.36} parent=0 // loop_header
    %s9 = sphi 0, %s13
    %p10 = scmp.ge.s32.totalorder %s9, 4
    %s19 = sphi 0, %s21
    %s22 = sphi 0, %s19
    %s23 = sphi 0, %s22
    %s39 = sphi 0, %s23
    %s45 = sphi 0, %s47
    %s48 = sphi 0, %s45
    %s49 = sphi 0, %s48
    %s65 = sphi 0, %s49
    %s71 = sphi 0, %s73
    %s74 = sphi 0, %s71
    %s75 = sphi 0, %s74
    %s91 = sphi 0, %s75
    %s97 = sphi 0, %s99
    %s100 = sphi 0, %s97
    %s101 = sphi 0, %s100
    %s117 = sphi 0, %s101
  $region4: #{translation_model_forward.36} parent=0 // loop_header_branch
    %12 = sbr.rel (%p10) target = $region8
  $region5: #{translation_model_forward.36} parent=0 // loop_body
    %s14 = ssub.s32 %s9, 1
    %s15 = ssub.s32 %s9, 2
    %s16 = sadd.s32 %s9, 1
    %s17 = ssub.s32 %s9, %s16
    %p18 = scmp.eq.s32.totalorder %s17, 0
    %s20 = sadd.s32 %s19, 1
    %s21 = scalar_select %p18, %s19, %s20
    %p24 = pneg %p18
    %p25 = scmp.eq.s32.totalorder %s9, 1
    %p26 = por %p24, %p25
    %p27 = scmp.ne.s32.totalorder %s19, %s22
    %p28 = scmp.eq.s32.totalorder %s9, 0
    %p29 = por %p27, %p28
    %p30 = scmp.ne.s32.totalorder %s19, %s22
    %p31 = scmp.eq.s32.totalorder %s14, 1
    %p32 = por %p30, %p31
    %p33 = scmp.ne.s32.totalorder %s22, %s23
    %p34 = scmp.eq.s32.totalorder %s14, 0
    %p35 = por %p33, %p34
    %p36 = scmp.ne.s32.totalorder %s22, %s23
    %p37 = scmp.eq.s32.totalorder %s15, 1
    %p38 = por %p36, %p37
    %p40 = scmp.ne.s32.totalorder %s23, %s39
    %p41 = scmp.eq.s32.totalorder %s15, 0
    %p42 = por %p40, %p41
    %s43 = ssub.s32 %s9, %s16
    %p44 = scmp.eq.s32.totalorder %s43, 0
    %s46 = sadd.s32 %s45, 1
    %s47 = scalar_select %p44, %s45, %s46
    %p50 = pneg %p44
    %p51 = scmp.eq.s32.totalorder %s9, 1
    %p52 = por %p50, %p51
    %p53 = scmp.ne.s32.totalorder %s45, %s48
    %p54 = scmp.eq.s32.totalorder %s9, 0
    %p55 = por %p53, %p54
    %p56 = scmp.ne.s32.totalorder %s45, %s48
    %p57 = scmp.eq.s32.totalorder %s14, 1
    %p58 = por %p56, %p57
    %p59 = scmp.ne.s32.totalorder %s48, %s49
    %p60 = scmp.eq.s32.totalorder %s14, 0
    %p61 = por %p59, %p60
    %p62 = scmp.ne.s32.totalorder %s48, %s49
    %p63 = scmp.eq.s32.totalorder %s15, 1
    %p64 = por %p62, %p63
    %p66 = scmp.ne.s32.totalorder %s49, %s65
    %p67 = scmp.eq.s32.totalorder %s15, 0
    %p68 = por %p66, %p67
    %s69 = ssub.s32 %s9, %s16
    %p70 = scmp.eq.s32.totalorder %s69, 0
    %s72 = sadd.s32 %s71, 1
    %s73 = scalar_select %p70, %s71, %s72
    %p76 = pneg %p70
    %p77 = scmp.eq.s32.totalorder %s9, 1
    %p78 = por %p76, %p77
    %p79 = scmp.ne.s32.totalorder %s71, %s74
    %p80 = scmp.eq.s32.totalorder %s9, 0
    %p81 = por %p79, %p80
    %p82 = scmp.ne.s32.totalorder %s71, %s74
    %p83 = scmp.eq.s32.totalorder %s14, 1
    %p84 = por %p82, %p83
    %p85 = scmp.ne.s32.totalorder %s74, %s75
    %p86 = scmp.eq.s32.totalorder %s14, 0
    %p87 = por %p85, %p86
    %p88 = scmp.ne.s32.totalorder %s74, %s75
    %p89 = scmp.eq.s32.totalorder %s15, 1
    %p90 = por %p88, %p89
    %p92 = scmp.ne.s32.totalorder %s75, %s91
    %p93 = scmp.eq.s32.totalorder %s15, 0
    %p94 = por %p92, %p93
    %s95 = ssub.s32 %s9, %s16
    %p96 = scmp.eq.s32.totalorder %s95, 0
    %s98 = sadd.s32 %s97, 1
    %s99 = scalar_select %p96, %s97, %s98
    %p102 = pneg %p96
    %p103 = scmp.eq.s32.totalorder %s9, 1
    %p104 = por %p102, %p103
    %p105 = scmp.ne.s32.totalorder %s97, %s100
    %p106 = scmp.eq.s32.totalorder %s9, 0
    %p107 = por %p105, %p106
    %p108 = scmp.ne.s32.totalorder %s97, %s100
    %p109 = scmp.eq.s32.totalorder %s14, 1
    %p110 = por %p108, %p109
    %p111 = scmp.ne.s32.totalorder %s100, %s101
    %p112 = scmp.eq.s32.totalorder %s14, 0
    %p113 = por %p111, %p112
    %p114 = scmp.ne.s32.totalorder %s100, %s101
    %p115 = scmp.eq.s32.totalorder %s15, 1
    %p116 = por %p114, %p115
    %p118 = scmp.ne.s32.totalorder %s101, %s117
    %p119 = scmp.eq.s32.totalorder %s15, 0
    %p120 = por %p118, %p119
    %p121 = scmp.le.s32.totalorder 1, %s9
    %p122 = scmp.lt.s32.totalorder %s9, 3
    %p123 = pnand %p121, %p122
    %p124 = pneg %p123
    // Predicated region
    $region9: #{translation_model_forward.36} parent=5 // pred_check
      _
    $region10: #{translation_model_forward.36} parent=5 // pred_check_branch
      %126 = sbr.rel (%p123) target = $region12
    $region11: #{translation_model_forward.36} parent=5 // pred_region
      %s127 = ssub.s32 %s9, 1
    $region12: #{translation_model_forward.36} parent=5 // pred_fallthru
      _
    %p128 = scmp.lt.s32.totalorder %s9, 2
    // Predicated region
    $region13: #{translation_model_forward.36} parent=5 // pred_check
      %p129 = pneg %p128
    $region14: #{translation_model_forward.36} parent=5 // pred_check_branch
      %131 = sbr.rel (%p129) target = $region16
    $region15: #{translation_model_forward.36} parent=5 // pred_region
      // Predicated region
      $region17: #{translation_model_forward.36} parent=15 // pred_check
        %p132 = pneg %p29
      $region18: #{translation_model_forward.36} parent=15 // pred_check_branch
        %134 = sbr.rel (%p132) target = $region20
      $region19: #{translation_model_forward.36} parent=15 // pred_region
        %p135 = scmp.lt.s32.totalorder %s9, 1
        %s136 = scalar_select %p135, %s9, 1
        %s137 = smul.addr %s136, 8
        %s138 = scalar_lea.vmem %s0, %s137
      $region20: #{translation_model_forward.36} parent=15 // pred_fallthru
        _
      // Predicated region
      $region21: #{translation_model_forward.36} parent=15 // pred_check
        %p139 = pneg %p55
      $region22: #{translation_model_forward.36} parent=15 // pred_check_branch
        %141 = sbr.rel (%p139) target = $region24
      $region23: #{translation_model_forward.36} parent=15 // pred_region
        %p142 = scmp.lt.s32.totalorder %s9, 1
        %s143 = scalar_select %p142, %s9, 1
        %s144 = smul.addr %s143, 8
        %s145 = scalar_lea.vmem %s1, %s144
      $region24: #{translation_model_forward.36} parent=15 // pred_fallthru
        _
      // Predicated region
      $region25: #{translation_model_forward.36} parent=15 // pred_check
        %p146 = pneg %p81
      $region26: #{translation_model_forward.36} parent=15 // pred_check_branch
        %148 = sbr.rel (%p146) target = $region28
      $region27: #{translation_model_forward.36} parent=15 // pred_region
        %p149 = scmp.lt.s32.totalorder %s9, 1
        %s150 = scalar_select %p149, %s9, 1
        %s151 = smul.addr %s150, 8
        %s152 = scalar_lea.vmem %s2, %s151
      $region28: #{translation_model_forward.36} parent=15 // pred_fallthru
        _
    $region16: #{translation_model_forward.36} parent=5 // pred_fallthru
      _
    %p153 = scmp.le.s32.totalorder 1, %s9
    %p154 = scmp.lt.s32.totalorder %s9, 3
    %p155 = pnand %p153, %p154
    %p156 = pneg %p155
    // Predicated region
    $region29: #{translation_model_forward.36} parent=5 // pred_check
      _
    $region30: #{translation_model_forward.36} parent=5 // pred_check_branch
      %158 = sbr.rel (%p155) target = $region32
    $region31: #{translation_model_forward.36} parent=5 // pred_region
      %s159 = ssub.s32 %s9, 1
      %p160 = scmp.lt.s32.totalorder %s14, 1
      %s161 = scalar_select %p160, %s14, 1
      %s162 = smul.addr %s161, 8
      %s163 = scalar_lea.vmem %s0, %s162
      %p164 = pneg %p35
      %p165 = pneg %p32
      %p166 = scmp.lt.s32.totalorder %s14, 1
      %s167 = scalar_select %p166, %s14, 1
      %s168 = smul.addr %s167, 8
      %s169 = scalar_lea.vmem %s1, %s168
      %p170 = pneg %p61
      %p171 = pneg %p58
      %p172 = scmp.lt.s32.totalorder %s14, 1
      %s173 = scalar_select %p172, %s14, 1
      %s174 = smul.addr %s173, 8
      %s175 = scalar_lea.vmem %s2, %s174
      %p176 = pneg %p87
      %p177 = pneg %p84
      %p178 = pneg %p113
      %p179 = pneg %p110
      %p180 = scmp.lt.s32.totalorder %s14, 1
      %s181 = scalar_select %p180, %s14, 1
      %s182 = smul.addr %s181, 8
      %s183 = scalar_lea.vmem %s3, %s182
      %p184 = scmp.lt.s32.totalorder %s14, 1
      %s185 = scalar_select %p184, %s14, 1
      %s186 = smul.addr %s185, 8
      %s187 = scalar_lea.vmem %s0, %s186
      %p188 = scmp.lt.s32.totalorder %s14, 1
      %s189 = scalar_select %p188, %s14, 1
      %s190 = smul.addr %s189, 8
      %s191 = scalar_lea.vmem %s1, %s190
      %p192 = scmp.lt.s32.totalorder %s14, 1
      %s193 = scalar_select %p192, %s14, 1
      %s194 = smul.addr %s193, 8
      %s195 = scalar_lea.vmem %s2, %s194
      %p196 = scmp.lt.s32.totalorder %s14, 1
      %s197 = scalar_select %p196, %s14, 1
      %s198 = smul.addr %s197, 8
      %s199 = scalar_lea.vmem %s3, %s198
      %v201 = vld [vmem:[%s187] sm:$0x7f]
      %v202 = vld [vmem:[%s191] sm:$0x7f]
      %v203 = vld [vmem:[%s195] sm:$0x7f]
      %v204 = vpack.c.bf16 %v201, %v201
      %v205 = vpack.c.bf16 %v202, %v202
      %vm206 = vcmask 64512
      %v208 = vsel %vm206, %v204, 0
      %v211 = vsel %vm206, %v205, 0
      %213 = vmatprep.subr.bf16.mxu0 0
      %214 = vmatpush1.bf16.xpose.msra.mxu0 %v211
      %215 = vmatprep.subr.bf16.mxu0 0
      %216 = vmatpush1.bf16.xpose.msra.mxu0 0
      %217 = vmatprep.subr.bf16.mxu0 0
      %218 = vmatpush1.bf16.xpose.msra.mxu0 0
      %219 = vmatprep.subr.bf16.mxu0 0
      %220 = vmatpush1.bf16.xpose.msra.mxu0 0
      %221 = vmatprep.subr.bf16.mxu0 0
      %222 = vmatpush1.bf16.xpose.msra.mxu0 0
      %223 = vmatprep.subr.bf16.mxu0 0
      %224 = vmatpush1.bf16.xpose.msra.mxu0 0
      %225 = vmatprep.subr.bf16.mxu0 0
      %226 = vmatpush1.bf16.xpose.msra.mxu0 0
      %227 = vmatprep.subr.bf16.mxu0 0
      %228 = vmatpush1.bf16.xpose.msra.mxu0 0
      %229 = vmatprep.subr.bf16.mxu0 0
      %230 = vmatpush1.bf16.xpose.msra.mxu0 0
      %231 = vmatprep.subr.bf16.mxu0 0
      %232 = vmatpush1.bf16.xpose.msra.mxu0 0
      %233 = vmatprep.subr.bf16.mxu0 0
      %234 = vmatpush1.bf16.xpose.msra.mxu0 0
      %235 = vmatprep.subr.bf16.mxu0 0
      %236 = vmatpush1.bf16.xpose.msra.mxu0 0
      %237 = vmatprep.subr.bf16.mxu0 0
      %238 = vmatpush1.bf16.xpose.msra.mxu0 0
      %239 = vmatprep.subr.bf16.mxu0 0
      %240 = vmatpush1.bf16.xpose.msra.mxu0 0
      %241 = vmatprep.subr.bf16.mxu0 0
      %242 = vmatpush1.bf16.xpose.msra.mxu0 0
      %243 = vmatprep.subr.bf16.mxu0 0
      %244 = vmatpush1.bf16.xpose.msra.mxu0 0
      %245 = vmatprep.mubr.bf16.mxu0 0
      %246 = vmatmul.mubr.bf16.gmra.mrb[0].mxu0 %v208
      %v247 = vpop.f32.mrb[0].mxu0
      %v248 = vadd.f32 0.0, %v247
      %v249 = vpop.f32.mrb[0].mxu0
      %v250 = vpop.f32.mrb[0].mxu0
      %v251 = vpop.f32.mrb[0].mxu0
      %252 = vdwg.mxu0
      %v253 = vmul.f32 %v248, 0.35355338
      %v254 = vadd.f32 %v253, %v203
      %vm255 = vcmask 55296
      %v256 = vsel %vm255, %v254, -inf
      %257 = vmax.xlane.f32.xlu0 %v256
      %v258 = vpop.xlane.xlu0 %257
      %v259 = vsub.f32 %v254, %v258
      %v260 = vmul.f32 %v259, 1.442695
      %v261 = vpow.pop %v260
      %v262 = vsel %vm255, %v261, 0.0
      %263 = vadd.xlane.f32.xlu0 %v262
      %v264 = vpop.xlane.xlu0 %263
      %v265 = vrcp.pop %v264
      %v266 = vmul.f32 %v261, %v265
      %v267 = vpack.c.bf16 %v266, %v266
      %269 = vrot.lane.b32.xlu0 %v205, 96
      %v270 = vpop.permute.xlu0 %269
      %vm271 = vcmask 56320
      %v273 = vsel %vm271, %v267, 0
      %vm275 = vcmask 1042432
      %vm276 = vcmask 1043456
      %v277 = vsel %vm275, 4294967295, 65535
      %v278 = vsel %vm276, %v277, 0
      %v280 = vand.u32 %v270, %v278
      %282 = vmatprep.subr.bf16.mxu0 0
      %283 = vmatpush1.bf16.msra.mxu0 %v280
      %284 = vmatprep.subr.bf16.mxu0 0
      %285 = vmatpush1.bf16.msra.mxu0 0
      %286 = vmatprep.subr.bf16.mxu0 0
      %287 = vmatpush1.bf16.msra.mxu0 0
      %288 = vmatprep.subr.bf16.mxu0 0
      %289 = vmatpush1.bf16.msra.mxu0 0
      %290 = vmatprep.subr.bf16.mxu0 0
      %291 = vmatpush1.bf16.msra.mxu0 0
      %292 = vmatprep.subr.bf16.mxu0 0
      %293 = vmatpush1.bf16.msra.mxu0 0
      %294 = vmatprep.subr.bf16.mxu0 0
      %295 = vmatpush1.bf16.msra.mxu0 0
      %296 = vmatprep.subr.bf16.mxu0 0
      %297 = vmatpush1.bf16.msra.mxu0 0
      %298 = vmatprep.subr.bf16.mxu0 0
      %299 = vmatpush1.bf16.msra.mxu0 0
      %300 = vmatprep.subr.bf16.mxu0 0
      %301 = vmatpush1.bf16.msra.mxu0 0
      %302 = vmatprep.subr.bf16.mxu0 0
      %303 = vmatpush1.bf16.msra.mxu0 0
      %304 = vmatprep.subr.bf16.mxu0 0
      %305 = vmatpush1.bf16.msra.mxu0 0
      %306 = vmatprep.subr.bf16.mxu0 0
      %307 = vmatpush1.bf16.msra.mxu0 0
      %308 = vmatprep.subr.bf16.mxu0 0
      %309 = vmatpush1.bf16.msra.mxu0 0
      %310 = vmatprep.subr.bf16.mxu0 0
      %311 = vmatpush1.bf16.msra.mxu0 0
      %312 = vmatprep.subr.bf16.mxu0 0
      %313 = vmatpush1.bf16.msra.mxu0 0
      %314 = vmatprep.mubr.bf16.mxu0 0
      %315 = vmatmul.mubr.bf16.gmra.mrb[0].mxu0 %v273
      %v316 = vpop.f32.mrb[0].mxu0
      %v317 = vadd.f32 0.0, %v316
      %v318 = vpop.f32.mrb[0].mxu0
      %v319 = vpop.f32.mrb[0].mxu0
      %v320 = vpop.f32.mrb[0].mxu0
      %321 = vdwg.mxu0
      %323 = vrot.lane.b32.xlu0 %v204, 120
      %v324 = vpop.permute.xlu0 %323
      %325 = vrot.lane.b32.xlu0 %v205, 120
      %v326 = vpop.permute.xlu0 %325
      %v328 = vsel %vm206, %v324, 0
      %v331 = vsel %vm206, %v326, 0
      %333 = vmatprep.subr.bf16.mxu0 0
      %334 = vmatpush1.bf16.xpose.msra.mxu0 %v331
      %335 = vmatprep.subr.bf16.mxu0 0
      %336 = vmatpush1.bf16.xpose.msra.mxu0 0
      %337 = vmatprep.subr.bf16.mxu0 0
      %338 = vmatpush1.bf16.xpose.msra.mxu0 0
      %339 = vmatprep.subr.bf16.mxu0 0
      %340 = vmatpush1.bf16.xpose.msra.mxu0 0
      %341 = vmatprep.subr.bf16.mxu0 0
      %342 = vmatpush1.bf16.xpose.msra.mxu0 0
      %343 = vmatprep.subr.bf16.mxu0 0
      %344 = vmatpush1.bf16.xpose.msra.mxu0 0
      %345 = vmatprep.subr.bf16.mxu0 0
      %346 = vmatpush1.bf16.xpose.msra.mxu0 0
      %347 = vmatprep.subr.bf16.mxu0 0
      %348 = vmatpush1.bf16.xpose.msra.mxu0 0
      %349 = vmatprep.subr.bf16.mxu0 0
      %350 = vmatpush1.bf16.xpose.msra.mxu0 0
      %351 = vmatprep.subr.bf16.mxu0 0
      %352 = vmatpush1.bf16.xpose.msra.mxu0 0
      %353 = vmatprep.subr.bf16.mxu0 0
      %354 = vmatpush1.bf16.xpose.msra.mxu0 0
      %355 = vmatprep.subr.bf16.mxu0 0
      %356 = vmatpush1.bf16.xpose.msra.mxu0 0
      %357 = vmatprep.subr.bf16.mxu0 0
      %358 = vmatpush1.bf16.xpose.msra.mxu0 0
      %359 = vmatprep.subr.bf16.mxu0 0
      %360 = vmatpush1.bf16.xpose.msra.mxu0 0
      %361 = vmatprep.subr.bf16.mxu0 0
      %362 = vmatpush1.bf16.xpose.msra.mxu0 0
      %363 = vmatprep.subr.bf16.mxu0 0
      %364 = vmatpush1.bf16.xpose.msra.mxu0 0
      %365 = vmatprep.mubr.bf16.mxu0 0
      %366 = vmatmul.mubr.bf16.gmra.mrb[0].mxu0 %v328
      %v367 = vpop.f32.mrb[0].mxu0
      %v368 = vadd.f32 0.0, %v367
      %v369 = vpop.f32.mrb[0].mxu0
      %v370 = vpop.f32.mrb[0].mxu0
      %v371 = vpop.f32.mrb[0].mxu0
      %372 = vdwg.mxu0
      %v373 = vmul.f32 %v368, 0.35355338
      %v374 = vadd.f32 %v373, %v203
      %v375 = vsel %vm255, %v374, -inf
      %376 = vmax.xlane.f32.xlu0 %v375
      %v377 = vpop.xlane.xlu0 %376
      %v378 = vsub.f32 %v374, %v377
      %v379 = vmul.f32 %v378, 1.442695
      %v380 = vpow.pop %v379
      %v381 = vsel %vm255, %v380, 0.0
      %382 = vadd.xlane.f32.xlu0 %v381
      %v383 = vpop.xlane.xlu0 %382
      %v384 = vrcp.pop %v383
      %v385 = vmul.f32 %v380, %v384
      %v386 = vpack.c.bf16 %v385, %v385
      %387 = vrot.lane.b32.xlu0 %v205, 88
      %v388 = vpop.permute.xlu0 %387
      %v390 = vsel %vm271, %v386, 0
      %v393 = vand.u32 %v388, %v278
      %395 = vmatprep.subr.bf16.mxu0 0
      %396 = vmatpush1.bf16.msra.mxu0 %v393
      %397 = vmatprep.subr.bf16.mxu0 0
      %398 = vmatpush1.bf16.msra.mxu0 0
      %399 = vmatprep.subr.bf16.mxu0 0
      %400 = vmatpush1.bf16.msra.mxu0 0
      %401 = vmatprep.subr.bf16.mxu0 0
      %402 = vmatpush1.bf16.msra.mxu0 0
      %403 = vmatprep.subr.bf16.mxu0 0
      %404 = vmatpush1.bf16.msra.mxu0 0
      %405 = vmatprep.subr.bf16.mxu0 0
      %406 = vmatpush1.bf16.msra.mxu0 0
      %407 = vmatprep.subr.bf16.mxu0 0
      %408 = vmatpush1.bf16.msra.mxu0 0
      %409 = vmatprep.subr.bf16.mxu0 0
      %410 = vmatpush1.bf16.msra.mxu0 0
      %411 = vmatprep.subr.bf16.mxu0 0
      %412 = vmatpush1.bf16.msra.mxu0 0
      %413 = vmatprep.subr.bf16.mxu0 0
      %414 = vmatpush1.bf16.msra.mxu0 0
      %415 = vmatprep.subr.bf16.mxu0 0
      %416 = vmatpush1.bf16.msra.mxu0 0
      %417 = vmatprep.subr.bf16.mxu0 0
      %418 = vmatpush1.bf16.msra.mxu0 0
      %419 = vmatprep.subr.bf16.mxu0 0
      %420 = vmatpush1.bf16.msra.mxu0 0
      %421 = vmatprep.subr.bf16.mxu0 0
      %422 = vmatpush1.bf16.msra.mxu0 0
      %423 = vmatprep.subr.bf16.mxu0 0
      %424 = vmatpush1.bf16.msra.mxu0 0
      %425 = vmatprep.subr.bf16.mxu0 0
      %426 = vmatpush1.bf16.msra.mxu0 0
      %427 = vmatprep.mubr.bf16.mxu0 0
      %428 = vmatmul.mubr.bf16.gmra.mrb[0].mxu0 %v390
      %v429 = vpop.f32.mrb[0].mxu0
      %v430 = vadd.f32 0.0, %v429
      %v431 = vpop.f32.mrb[0].mxu0
      %v432 = vpop.f32.mrb[0].mxu0
      %v433 = vpop.f32.mrb[0].mxu0
      %434 = vdwg.mxu0
      %435 = vrot.lane.b32.xlu0 %v204, 112
      %v436 = vpop.permute.xlu0 %435
      %437 = vrot.lane.b32.xlu0 %v205, 112
      %v438 = vpop.permute.xlu0 %437
      %v440 = vsel %vm206, %v436, 0
      %v443 = vsel %vm206, %v438, 0
      %445 = vmatprep.subr.bf16.mxu0 0
      %446 = vmatpush1.bf16.xpose.msra.mxu0 %v443
      %447 = vmatprep.subr.bf16.mxu0 0
      %448 = vmatpush1.bf16.xpose.msra.mxu0 0
      %449 = vmatprep.subr.bf16.mxu0 0
      %450 = vmatpush1.bf16.xpose.msra.mxu0 0
      %451 = vmatprep.subr.bf16.mxu0 0
      %452 = vmatpush1.bf16.xpose.msra.mxu0 0
      %453 = vmatprep.subr.bf16.mxu0 0
      %454 = vmatpush1.bf16.xpose.msra.mxu0 0
      %455 = vmatprep.subr.bf16.mxu0 0
      %456 = vmatpush1.bf16.xpose.msra.mxu0 0
      %457 = vmatprep.subr.bf16.mxu0 0
      %458 = vmatpush1.bf16.xpose.msra.mxu0 0
      %459 = vmatprep.subr.bf16.mxu0 0
      %460 = vmatpush1.bf16.xpose.msra.mxu0 0
      %461 = vmatprep.subr.bf16.mxu0 0
      %462 = vmatpush1.bf16.xpose.msra.mxu0 0
      %463 = vmatprep.subr.bf16.mxu0 0
      %464 = vmatpush1.bf16.xpose.msra.mxu0 0
      %465 = vmatprep.subr.bf16.mxu0 0
      %466 = vmatpush1.bf16.xpose.msra.mxu0 0
      %467 = vmatprep.subr.bf16.mxu0 0
      %468 = vmatpush1.bf16.xpose.msra.mxu0 0
      %469 = vmatprep.subr.bf16.mxu0 0
      %470 = vmatpush1.bf16.xpose.msra.mxu0 0
      %471 = vmatprep.subr.bf16.mxu0 0
      %472 = vmatpush1.bf16.xpose.msra.mxu0 0
      %473 = vmatprep.subr.bf16.mxu0 0
      %474 = vmatpush1.bf16.xpose.msra.mxu0 0
      %475 = vmatprep.subr.bf16.mxu0 0
      %476 = vmatpush1.bf16.xpose.msra.mxu0 0
      %477 = vmatprep.mubr.bf16.mxu0 0
      %478 = vmatmul.mubr.bf16.gmra.mrb[0].mxu0 %v440
      %v479 = vpop.f32.mrb[0].mxu0
      %v480 = vadd.f32 0.0, %v479
      %v481 = vpop.f32.mrb[0].mxu0
      %v482 = vpop.f32.mrb[0].mxu0
      %v483 = vpop.f32.mrb[0].mxu0
      %484 = vdwg.mxu0
      %v485 = vmul.f32 %v480, 0.35355338
      %v486 = vadd.f32 %v485, %v203
      %v487 = vsel %vm255, %v486, -inf
      %488 = vmax.xlane.f32.xlu0 %v487
      %v489 = vpop.xlane.xlu0 %488
      %v490 = vsub.f32 %v486, %v489
      %v491 = vmul.f32 %v490, 1.442695
      %v492 = vpow.pop %v491
      %v493 = vsel %vm255, %v492, 0.0
      %494 = vadd.xlane.f32.xlu0 %v493
      %v495 = vpop.xlane.xlu0 %494
      %v496 = vrcp.pop %v495
      %v497 = vmul.f32 %v492, %v496
      %v498 = vpack.c.bf16 %v497, %v497
      %499 = vrot.lane.b32.xlu0 %v205, 80
      %v500 = vpop.permute.xlu0 %499
      %v502 = vsel %vm271, %v498, 0
      %v505 = vand.u32 %v500, %v278
      %507 = vmatprep.subr.bf16.mxu0 0
      %508 = vmatpush1.bf16.msra.mxu0 %v505
      %509 = vmatprep.subr.bf16.mxu0 0
      %510 = vmatpush1.bf16.msra.mxu0 0
      %511 = vmatprep.subr.bf16.mxu0 0
      %512 = vmatpush1.bf16.msra.mxu0 0
      %513 = vmatprep.subr.bf16.mxu0 0
      %514 = vmatpush1.bf16.msra.mxu0 0
      %515 = vmatprep.subr.bf16.mxu0 0
      %516 = vmatpush1.bf16.msra.mxu0 0
      %517 = vmatprep.subr.bf16.mxu0 0
      %518 = vmatpush1.bf16.msra.mxu0 0
      %519 = vmatprep.subr.bf16.mxu0 0
      %520 = vmatpush1.bf16.msra.mxu0 0
      %521 = vmatprep.subr.bf16.mxu0 0
      %522 = vmatpush1.bf16.msra.mxu0 0
      %523 = vmatprep.subr.bf16.mxu0 0
      %524 = vmatpush1.bf16.msra.mxu0 0
      %525 = vmatprep.subr.bf16.mxu0 0
      %526 = vmatpush1.bf16.msra.mxu0 0
      %527 = vmatprep.subr.bf16.mxu0 0
      %528 = vmatpush1.bf16.msra.mxu0 0
      %529 = vmatprep.subr.bf16.mxu0 0
      %530 = vmatpush1.bf16.msra.mxu0 0
      %531 = vmatprep.subr.bf16.mxu0 0
      %532 = vmatpush1.bf16.msra.mxu0 0
      %533 = vmatprep.subr.bf16.mxu0 0
      %534 = vmatpush1.bf16.msra.mxu0 0
      %535 = vmatprep.subr.bf16.mxu0 0
      %536 = vmatpush1.bf16.msra.mxu0 0
      %537 = vmatprep.subr.bf16.mxu0 0
      %538 = vmatpush1.bf16.msra.mxu0 0
      %539 = vmatprep.mubr.bf16.mxu0 0
      %540 = vmatmul.mubr.bf16.gmra.mrb[0].mxu0 %v502
      %v541 = vpop.f32.mrb[0].mxu0
      %v542 = vadd.f32 0.0, %v541
      %v543 = vpop.f32.mrb[0].mxu0
      %v544 = vpop.f32.mrb[0].mxu0
      %v545 = vpop.f32.mrb[0].mxu0
      %546 = vdwg.mxu0
      %547 = vrot.lane.b32.xlu0 %v204, 104
      %v548 = vpop.permute.xlu0 %547
      %549 = vrot.lane.b32.xlu0 %v205, 104
      %v550 = vpop.permute.xlu0 %549
      %v552 = vsel %vm206, %v548, 0
      %v555 = vsel %vm206, %v550, 0
      %557 = vmatprep.subr.bf16.mxu0 0
      %558 = vmatpush1.bf16.xpose.msra.mxu0 %v555
      %559 = vmatprep.subr.bf16.mxu0 0
      %560 = vmatpush1.bf16.xpose.msra.mxu0 0
      %561 = vmatprep.subr.bf16.mxu0 0
      %562 = vmatpush1.bf16.xpose.msra.mxu0 0
      %563 = vmatprep.subr.bf16.mxu0 0
      %564 = vmatpush1.bf16.xpose.msra.mxu0 0
      %565 = vmatprep.subr.bf16.mxu0 0
      %566 = vmatpush1.bf16.xpose.msra.mxu0 0
      %567 = vmatprep.subr.bf16.mxu0 0
      %568 = vmatpush1.bf16.xpose.msra.mxu0 0
      %569 = vmatprep.subr.bf16.mxu0 0
      %570 = vmatpush1.bf16.xpose.msra.mxu0 0
      %571 = vmatprep.subr.bf16.mxu0 0
      %572 = vmatpush1.bf16.xpose.msra.mxu0 0
      %573 = vmatprep.subr.bf16.mxu0 0
      %574 = vmatpush1.bf16.xpose.msra.mxu0 0
      %575 = vmatprep.subr.bf16.mxu0 0
      %576 = vmatpush1.bf16.xpose.msra.mxu0 0
      %577 = vmatprep.subr.bf16.mxu0 0
      %578 = vmatpush1.bf16.xpose.msra.mxu0 0
      %579 = vmatprep.subr.bf16.mxu0 0
      %580 = vmatpush1.bf16.xpose.msra.mxu0 0
      %581 = vmatprep.subr.bf16.mxu0 0
      %582 = vmatpush1.bf16.xpose.msra.mxu0 0
      %583 = vmatprep.subr.bf16.mxu0 0
      %584 = vmatpush1.bf16.xpose.msra.mxu0 0
      %585 = vmatprep.subr.bf16.mxu0 0
      %586 = vmatpush1.bf16.xpose.msra.mxu0 0
      %587 = vmatprep.subr.bf16.mxu0 0
      %588 = vmatpush1.bf16.xpose.msra.mxu0 0
      %589 = vmatprep.mubr.bf16.mxu0 0
      %590 = vmatmul.mubr.bf16.gmra.mrb[0].mxu0 %v552
      %v591 = vpop.f32.mrb[0].mxu0
      %v592 = vadd.f32 0.0, %v591
      %v593 = vpop.f32.mrb[0].mxu0
      %v594 = vpop.f32.mrb[0].mxu0
      %v595 = vpop.f32.mrb[0].mxu0
      %596 = vdwg.mxu0
      %v597 = vmul.f32 %v592, 0.35355338
      %v598 = vadd.f32 %v597, %v203
      %v599 = vsel %vm255, %v598, -inf
      %600 = vmax.xlane.f32.xlu0 %v599
      %v601 = vpop.xlane.xlu0 %600
      %v602 = vsub.f32 %v598, %v601
      %v603 = vmul.f32 %v602, 1.442695
      %v604 = vpow.pop %v603
      %v605 = vsel %vm255, %v604, 0.0
      %606 = vadd.xlane.f32.xlu0 %v605
      %v607 = vpop.xlane.xlu0 %606
      %v608 = vrcp.pop %v607
      %v609 = vmul.f32 %v604, %v608
      %v610 = vpack.c.bf16 %v609, %v609
      %611 = vrot.lane.b32.xlu0 %v205, 72
      %v612 = vpop.permute.xlu0 %611
      %v614 = vsel %vm271, %v610, 0
      %v617 = vand.u32 %v612, %v278
      %619 = vmatprep.subr.bf16.mxu0 0
      %620 = vmatpush1.bf16.msra.mxu0 %v617
      %621 = vmatprep.subr.bf16.mxu0 0
      %622 = vmatpush1.bf16.msra.mxu0 0
      %623 = vmatprep.subr.bf16.mxu0 0
      %624 = vmatpush1.bf16.msra.mxu0 0
      %625 = vmatprep.subr.bf16.mxu0 0
      %626 = vmatpush1.bf16.msra.mxu0 0
      %627 = vmatprep.subr.bf16.mxu0 0
      %628 = vmatpush1.bf16.msra.mxu0 0
      %629 = vmatprep.subr.bf16.mxu0 0
      %630 = vmatpush1.bf16.msra.mxu0 0
      %631 = vmatprep.subr.bf16.mxu0 0
      %632 = vmatpush1.bf16.msra.mxu0 0
      %633 = vmatprep.subr.bf16.mxu0 0
      %634 = vmatpush1.bf16.msra.mxu0 0
      %635 = vmatprep.subr.bf16.mxu0 0
      %636 = vmatpush1.bf16.msra.mxu0 0
      %637 = vmatprep.subr.bf16.mxu0 0
      %638 = vmatpush1.bf16.msra.mxu0 0
      %639 = vmatprep.subr.bf16.mxu0 0
      %640 = vmatpush1.bf16.msra.mxu0 0
      %641 = vmatprep.subr.bf16.mxu0 0
      %642 = vmatpush1.bf16.msra.mxu0 0
      %643 = vmatprep.subr.bf16.mxu0 0
      %644 = vmatpush1.bf16.msra.mxu0 0
      %645 = vmatprep.subr.bf16.mxu0 0
      %646 = vmatpush1.bf16.msra.mxu0 0
      %647 = vmatprep.subr.bf16.mxu0 0
      %648 = vmatpush1.bf16.msra.mxu0 0
      %649 = vmatprep.subr.bf16.mxu0 0
      %650 = vmatpush1.bf16.msra.mxu0 0
      %651 = vmatprep.mubr.bf16.mxu0 0
      %652 = vmatmul.mubr.bf16.gmra.mrb[0].mxu0 %v614
      %v653 = vpop.f32.mrb[0].mxu0
      %v654 = vadd.f32 0.0, %v653
      %v655 = vpop.f32.mrb[0].mxu0
      %v656 = vpop.f32.mrb[0].mxu0
      %v657 = vpop.f32.mrb[0].mxu0
      %658 = vdwg.mxu0
      %660 = vrot.lane.b32.xlu0 %v430, 8
      %v661 = vpop.permute.xlu0 %660
      %664 = vrot.lane.b32.xlu0 %v542, 16
      %v665 = vpop.permute.xlu0 %664
      %668 = vrot.lane.b32.xlu0 %v654, 24
      %v669 = vpop.permute.xlu0 %668
      %v671 = vsel %vm206, %v317, %v661
      %vm672 = vcmask 130048
      %v673 = vsel %vm672, %v671, %v665
      %vm674 = vcmask 195584
      %v675 = vsel %vm674, %v673, %v669
      %vm676 = vcmask 260096
      %677 = vst.msk [vmem:[%s199] sm:$0x7f] %vm676, %v675
      %p678 = scmp.lt.s32.totalorder %s14, 1
      %s679 = scalar_select %p678, %s14, 1
      %s680 = smul.addr %s679, 8
      %s681 = scalar_lea.vmem %s3, %s680
      // Predicated region
      $region33: #{translation_model_forward.36} parent=31 // pred_check
        %p682 = pneg %p110
      $region34: #{translation_model_forward.36} parent=31 // pred_check_branch
        %684 = sbr.rel (%p682) target = $region36
      $region35: #{translation_model_forward.36} parent=31 // pred_region
        _
      $region36: #{translation_model_forward.36} parent=31 // pred_fallthru
        _
    $region32: #{translation_model_forward.36} parent=5 // pred_fallthru
      _
    %p685 = scmp.le.s32.totalorder 2, %s9
    // Predicated region
    $region37: #{translation_model_forward.36} parent=5 // pred_check
      %p686 = pneg %p685
    $region38: #{translation_model_forward.36} parent=5 // pred_check_branch
      %688 = sbr.rel (%p686) target = $region40
    $region39: #{translation_model_forward.36} parent=5 // pred_region
      %s689 = ssub.s32 %s9, 2
      // Predicated region
      $region41: #{translation_model_forward.36} parent=39 // pred_check
        %p690 = pneg %p116
      $region42: #{translation_model_forward.36} parent=39 // pred_check_branch
        %692 = sbr.rel (%p690) target = $region44
      $region43: #{translation_model_forward.36} parent=39 // pred_region
        %p693 = scmp.lt.s32.totalorder %s15, 1
        %s694 = scalar_select %p693, %s15, 1
        %s695 = smul.addr %s694, 8
        %s696 = scalar_lea.vmem %s3, %s695
      $region44: #{translation_model_forward.36} parent=39 // pred_fallthru
        _
    $region40: #{translation_model_forward.36} parent=5 // pred_fallthru
      _
  $region6: #{translation_model_forward.36} parent=0 // loop_footer
    %s13 = sadd.s32 1, %s9
  $region7: #{translation_model_forward.36} parent=0 // loop_footer_branch
    %8 = sbr.rel target = $region3
  $region8: #{translation_model_forward.36} parent=0 // loop_exit
    _

// kernel: translation_model_forward.42
$region0: #{translation_model_forward.42}
  #allocation0 [shape = 'u32[]', space=smem, size = 0x4, offset = 0x4, fixed_abs, tag = 'smem constant byte address 0x4 - core index']
  #allocation1 [shape = 'u32[144,128]{1,0:T(1,128)}', space=vmem, size = 0x12000, scoped, tag = 'internal scratch']
  %s0 = inlined_call_operand.vmem [shape: f32[14,32], index: 0, kind: input, shape index: {}]
  %s1 = inlined_call_operand.vmem [shape: f32[1,32], index: 1, kind: input, shape index: {}]
  %s2 = inlined_call_operand.vmem [shape: f32[1,32], index: 2, kind: input, shape index: {}]
  %s3 = inlined_call_operand.vmem [shape: f32[32,128], index: 3, kind: input, shape index: {}]
  %s4 = inlined_call_operand.vmem [shape: f32[1,128], index: 4, kind: input, shape index: {}]
  %s5 = inlined_call_operand.vmem [shape: f32[128,32], index: 5, kind: input, shape index: {}]
  %s6 = inlined_call_operand.vmem [shape: f32[1,32], index: 6, kind: input, shape index: {}]
  %s7 = inlined_call_operand.vmem [shape: f32[14,32], index: 7, kind: output, shape index: {}]
  %s8 = sld [smem:[#allocation0]]
  $region38: #{translation_model_forward.42} parent=0
    _
  %s10 = ssub.s32 1, %s8
  %s11 = scalar_select 0, %s10, %s8
  // Predicated region
  $region2: #{translation_model_forward.42} parent=0 // pred_check
    _
  $region3: #{translation_model_forward.42} parent=0 // pred_check_branch
    %13 = sbr.rel (0) target = $region5
  $region4: #{translation_model_forward.42} parent=0 // pred_region
    _
  $region5: #{translation_model_forward.42} parent=0 // pred_fallthru
    _
  // Predicated region
  $region6: #{translation_model_forward.42} parent=0 // pred_check
    _
  $region7: #{translation_model_forward.42} parent=0 // pred_check_branch
    %15 = sbr.rel (0) target = $region9
  $region8: #{translation_model_forward.42} parent=0 // pred_region
    _
  $region9: #{translation_model_forward.42} parent=0 // pred_fallthru
    _
  // Predicated region
  $region10: #{translation_model_forward.42} parent=0 // pred_check
    _
  $region11: #{translation_model_forward.42} parent=0 // pred_check_branch
    %17 = sbr.rel (0) target = $region13
  $region12: #{translation_model_forward.42} parent=0 // pred_region
    _
  $region13: #{translation_model_forward.42} parent=0 // pred_fallthru
    _
  // Predicated region
  $region14: #{translation_model_forward.42} parent=0 // pred_check
    _
  $region15: #{translation_model_forward.42} parent=0 // pred_check_branch
    %19 = sbr.rel (0) target = $region17
  $region16: #{translation_model_forward.42} parent=0 // pred_region
    _
  $region17: #{translation_model_forward.42} parent=0 // pred_fallthru
    _
  // Predicated region
  $region18: #{translation_model_forward.42} parent=0 // pred_check
    _
  $region19: #{translation_model_forward.42} parent=0 // pred_check_branch
    %21 = sbr.rel (0) target = $region21
  $region20: #{translation_model_forward.42} parent=0 // pred_region
    _
  $region21: #{translation_model_forward.42} parent=0 // pred_fallthru
    _
  // Predicated region
  $region22: #{translation_model_forward.42} parent=0 // pred_check
    _
  $region23: #{translation_model_forward.42} parent=0 // pred_check_branch
    %23 = sbr.rel (0) target = $region25
  $region24: #{translation_model_forward.42} parent=0 // pred_region
    _
  $region25: #{translation_model_forward.42} parent=0 // pred_fallthru
    _
  // Predicated region
  $region26: #{translation_model_forward.42} parent=0 // pred_check
    _
  $region27: #{translation_model_forward.42} parent=0 // pred_check_branch
    %25 = sbr.rel (0) target = $region29
  $region28: #{translation_model_forward.42} parent=0 // pred_region
    _
  $region29: #{translation_model_forward.42} parent=0 // pred_fallthru
    _
  %v27 = vld [vmem:[%s0] sm:$0xff]
  %v28 = vld [vmem:[%s0 + $0x8] sm:$0x3f]
  %v29 = vld [vmem:[%s1] sm:$0x1]
  %v30 = vld [vmem:[%s2] sm:$0x1]
  %vm31 = vcmask 261120
  %v32 = vsel %vm31, %v27, 0.0
  %33 = vadd.xlane.f32.xlu0 %v32
  %v34 = vpop.xlane.xlu0 %33
  %vm35 = vcmask 259072
  %v36 = vsel %vm35, %v28, 0.0
  %37 = vadd.xlane.f32.xlu0 %v36
  %v38 = vpop.xlane.xlu0 %37
  %v39 = vrcp.pop 32.0
  %v40 = vmul.f32 %v34, %v39
  %v41 = vmul.f32 %v38, %v39
  %v42 = vsub.f32 %v27, %v40
  %v43 = vsub.f32 %v28, %v41
  %v44 = vmul.f32 %v42, %v42
  %v45 = vmul.f32 %v43, %v43
  %v46 = vsel %vm31, %v44, 0.0
  %47 = vadd.xlane.f32.xlu0 %v46
  %v48 = vpop.xlane.xlu0 %47
  %v49 = vsel %vm35, %v45, 0.0
  %50 = vadd.xlane.f32.xlu0 %v49
  %v51 = vpop.xlane.xlu0 %50
  %v52 = vmul.f32 %v48, %v39
  %v53 = vmul.f32 %v51, %v39
  %v54 = vadd.f32 %v52, 1e-05
  %v55 = vadd.f32 %v53, 1e-05
  %v56 = vrsqrt.pop %v54
  %v57 = vrsqrt.pop %v55
  %v58 = vmul.f32 %v42, %v56
  %v59 = vmul.f32 %v43, %v57
  %v61 = vlaneseq
  %v62 = vshrl.u32 %v61, 7
  %v63 = vsub.s32 0, %v62
  %v64 = vrot.slane %v29, %v63
  %v66 = vmul.f32 %v58, %v64
  %v67 = vmul.f32 %v59, %v64
  %v69 = vlaneseq
  %v70 = vshrl.u32 %v69, 7
  %v71 = vsub.s32 0, %v70
  %v72 = vrot.slane %v30, %v71
  %v74 = vadd.f32 %v66, %v72
  %v75 = vadd.f32 %v67, %v72
  %v76 = vld [vmem:[%s3] sm:$0xff]
  %v77 = vld [vmem:[%s3 + $0x8] sm:$0xff]
  %v78 = vld [vmem:[%s3 + $0x10] sm:$0xff]
  %v79 = vld [vmem:[%s3 + $0x18] sm:$0xff]
  %v80 = vpack.c.bf16 %v75, %v74
  %v81 = vpack.c.bf16 %v77, %v76
  %v82 = vpack.c.bf16 %v79, %v78
  %v83 = vld [vmem:[%s4] sm:$0x1]
  %v85 = vlaneseq
  %v86 = vshrl.u32 %v85, 7
  %v87 = vsub.s32 0, %v86
  %v88 = vrot.slane %v83, %v87
  %v91 = vsel %vm31, %v80, 0
  %93 = vmatprep.subr.bf16.mxu0 0
  %94 = vmatpush1.bf16.msra.mxu0 %v81
  %95 = vmatprep.subr.bf16.mxu0 0
  %96 = vmatpush1.bf16.msra.mxu0 %v82
  %97 = vmatprep.subr.bf16.mxu0 0
  %98 = vmatpush1.bf16.msra.mxu0 0
  %99 = vmatprep.subr.bf16.mxu0 0
  %100 = vmatpush1.bf16.msra.mxu0 0
  %101 = vmatprep.subr.bf16.mxu0 0
  %102 = vmatpush1.bf16.msra.mxu0 0
  %103 = vmatprep.subr.bf16.mxu0 0
  %104 = vmatpush1.bf16.msra.mxu0 0
  %105 = vmatprep.subr.bf16.mxu0 0
  %106 = vmatpush1.bf16.msra.mxu0 0
  %107 = vmatprep.subr.bf16.mxu0 0
  %108 = vmatpush1.bf16.msra.mxu0 0
  %109 = vmatprep.subr.bf16.mxu0 0
  %110 = vmatpush1.bf16.msra.mxu0 0
  %111 = vmatprep.subr.bf16.mxu0 0
  %112 = vmatpush1.bf16.msra.mxu0 0
  %113 = vmatprep.subr.bf16.mxu0 0
  %114 = vmatpush1.bf16.msra.mxu0 0
  %115 = vmatprep.subr.bf16.mxu0 0
  %116 = vmatpush1.bf16.msra.mxu0 0
  %117 = vmatprep.subr.bf16.mxu0 0
  %118 = vmatpush1.bf16.msra.mxu0 0
  %119 = vmatprep.subr.bf16.mxu0 0
  %120 = vmatpush1.bf16.msra.mxu0 0
  %121 = vmatprep.subr.bf16.mxu0 0
  %122 = vmatpush1.bf16.msra.mxu0 0
  %123 = vmatprep.subr.bf16.mxu0 0
  %124 = vmatpush1.bf16.msra.mxu0 0
  %125 = vmatprep.mubr.bf16.mxu0 0
  %126 = vmatmul.mubr.bf16.gmra.mrb[0].mxu0 %v91
  %v127 = vpop.f32.mrb[0].mxu0
  %v128 = vadd.f32 %v88, %v127
  %v129 = vpop.f32.mrb[0].mxu0
  %v130 = vpop.f32.mrb[0].mxu0
  %v131 = vadd.f32 %v88, %v130
  %v132 = vpop.f32.mrb[0].mxu0
  %133 = vdwg.mxu0
  %v134 = vmax.f32 %v128, 0.0
  %v135 = vmax.f32 %v131, 0.0
  %v136 = vld [vmem:[%s5] sm:$0xff]
  %v137 = vld [vmem:[%s5 + $0x8] sm:$0xff]
  %v138 = vld [vmem:[%s5 + $0x10] sm:$0xff]
  %v139 = vld [vmem:[%s5 + $0x18] sm:$0xff]
  %v140 = vld [vmem:[%s5 + $0x20] sm:$0xff]
  %v141 = vld [vmem:[%s5 + $0x28] sm:$0xff]
  %v142 = vld [vmem:[%s5 + $0x30] sm:$0xff]
  %v143 = vld [vmem:[%s5 + $0x38] sm:$0xff]
  %v144 = vld [vmem:[%s5 + $0x40] sm:$0xff]
  %v145 = vld [vmem:[%s5 + $0x48] sm:$0xff]
  %v146 = vld [vmem:[%s5 + $0x50] sm:$0xff]
  %v147 = vld [vmem:[%s5 + $0x58] sm:$0xff]
  %v148 = vld [vmem:[%s5 + $0x60] sm:$0xff]
  %v149 = vld [vmem:[%s5 + $0x68] sm:$0xff]
  %v150 = vld [vmem:[%s5 + $0x70] sm:$0xff]
  %v151 = vld [vmem:[%s5 + $0x78] sm:$0xff]
  %v152 = vpack.c.bf16 %v135, %v134
  %v153 = vpack.c.bf16 %v137, %v136
  %v154 = vpack.c.bf16 %v139, %v138
  %v155 = vpack.c.bf16 %v141, %v140
  %v156 = vpack.c.bf16 %v143, %v142
  %v157 = vpack.c.bf16 %v145, %v144
  %v158 = vpack.c.bf16 %v147, %v146
  %v159 = vpack.c.bf16 %v149, %v148
  %v160 = vpack.c.bf16 %v151, %v150
  %161 = vmatprep.subr.bf16.mxu0 0
  %162 = vmatpush1.bf16.msra.mxu0 %v153
  %163 = vmatprep.subr.bf16.mxu0 0
  %164 = vmatpush1.bf16.msra.mxu0 %v154
  %165 = vmatprep.subr.bf16.mxu0 0
  %166 = vmatpush1.bf16.msra.mxu0 %v155
  %167 = vmatprep.subr.bf16.mxu0 0
  %168 = vmatpush1.bf16.msra.mxu0 %v156
  %169 = vmatprep.subr.bf16.mxu0 0
  %170 = vmatpush1.bf16.msra.mxu0 %v157
  %171 = vmatprep.subr.bf16.mxu0 0
  %172 = vmatpush1.bf16.msra.mxu0 %v158
  %173 = vmatprep.subr.bf16.mxu0 0
  %174 = vmatpush1.bf16.msra.mxu0 %v159
  %175 = vmatprep.subr.bf16.mxu0 0
  %176 = vmatpush1.bf16.msra.mxu0 %v160
  %177 = vmatprep.subr.bf16.mxu0 0
  %178 = vmatpush1.bf16.msra.mxu0 0
  %179 = vmatprep.subr.bf16.mxu0 0
  %180 = vmatpush1.bf16.msra.mxu0 0
  %181 = vmatprep.subr.bf16.mxu0 0
  %182 = vmatpush1.bf16.msra.mxu0 0
  %183 = vmatprep.subr.bf16.mxu0 0
  %184 = vmatpush1.bf16.msra.mxu0 0
  %185 = vmatprep.subr.bf16.mxu0 0
  %186 = vmatpush1.bf16.msra.mxu0 0
  %187 = vmatprep.subr.bf16.mxu0 0
  %188 = vmatpush1.bf16.msra.mxu0 0
  %189 = vmatprep.subr.bf16.mxu0 0
  %190 = vmatpush1.bf16.msra.mxu0 0
  %191 = vmatprep.subr.bf16.mxu0 0
  %192 = vmatpush1.bf16.msra.mxu0 0
  %193 = vmatprep.mubr.bf16.mxu0 0
  %194 = vmatmul.mubr.bf16.gmra.mrb[0].mxu0 %v152
  %v195 = vpop.f32.mrb[0].mxu0
  %v196 = vadd.f32 0.0, %v195
  %v197 = vpop.f32.mrb[0].mxu0
  %v198 = vpop.f32.mrb[0].mxu0
  %v199 = vadd.f32 0.0, %v198
  %v200 = vpop.f32.mrb[0].mxu0
  %201 = vdwg.mxu0
  %v202 = vadd.f32 %v27, %v196
  %v203 = vadd.f32 %v28, %v199
  %v204 = vld [vmem:[%s6] sm:$0x1]
  %v206 = vlaneseq
  %v207 = vshrl.u32 %v206, 7
  %v208 = vsub.s32 0, %v207
  %v209 = vrot.slane %v204, %v208
  %v211 = vadd.f32 %v202, %v209
  %v212 = vadd.f32 %v203, %v209
  %213 = vst.msk [vmem:[%s7] sm:$0xff] %vm31, %v211
  %214 = vst.msk [vmem:[%s7 + $0x8] sm:$0x3f] %vm35, %v212
  // Predicated region
  $region30: #{translation_model_forward.42} parent=0 // pred_check
    _
  $region31: #{translation_model_forward.42} parent=0 // pred_check_branch
    %216 = sbr.rel (0) target = $region33
  $region32: #{translation_model_forward.42} parent=0 // pred_region
    _
  $region33: #{translation_model_forward.42} parent=0 // pred_fallthru
    _
  // Predicated region
  $region34: #{translation_model_forward.42} parent=0 // pred_check
    _
  $region35: #{translation_model_forward.42} parent=0 // pred_check_branch
    %218 = sbr.rel (0) target = $region37
  $region36: #{translation_model_forward.42} parent=0 // pred_region
    _
  $region37: #{translation_model_forward.42} parent=0 // pred_fallthru
    _

// kernel: translation_model_forward.40
$region0: #{translation_model_forward.40}
  #allocation0 [shape = 'u32[]', space=smem, size = 0x4, offset = 0x4, fixed_abs, tag = 'smem constant byte address 0x4 - core index']
  #allocation1 [shape = 'u32[144,128]{1,0:T(1,128)}', space=vmem, size = 0x12000, scoped, tag = 'internal scratch']
  %s0 = inlined_call_operand.vmem [shape: f32[2,7,32], index: 0, kind: input, shape index: {}]
  %s1 = inlined_call_operand.vmem [shape: f32[2,8,64], index: 1, kind: input, shape index: {}]
  %s2 = inlined_call_operand.vmem [shape: f32[2,7,8], index: 2, kind: input, shape index: {}]
  %s3 = inlined_call_operand.vmem [shape: f32[2,7,32], index: 3, kind: output, shape index: {}]
  %s4 = sld [smem:[#allocation0]]
  $region45: #{translation_model_forward.40} parent=0
    _
  %s6 = ssub.s32 1, %s4
  %s7 = scalar_select 0, %s6, %s4
  loop: start=0, step=1, limit=4
  $region2: #{translation_model_forward.40} parent=0 // loop_pre_header
    _
  $region3: #{translation_model_forward.40} parent=0 // loop_header
    %s9 = sphi 0, %s13
    %p10 = scmp.ge.s32.totalorder %s9, 4
    %s19 = sphi 0, %s21
    %s22 = sphi 0, %s19
    %s23 = sphi 0, %s22
    %s39 = sphi 0, %s23
    %s45 = sphi 0, %s47
    %s48 = sphi 0, %s45
    %s49 = sphi 0, %s48
    %s65 = sphi 0, %s49
    %s71 = sphi 0, %s73
    %s74 = sphi 0, %s71
    %s75 = sphi 0, %s74
    %s91 = sphi 0, %s75
    %s97 = sphi 0, %s99
    %s100 = sphi 0, %s97
    %s101 = sphi 0, %s100
    %s117 = sphi 0, %s101
  $region4: #{translation_model_forward.40} parent=0 // loop_header_branch
    %12 = sbr.rel (%p10) target = $region8
  $region5: #{translation_model_forward.40} parent=0 // loop_body
    %s14 = ssub.s32 %s9, 1
    %s15 = ssub.s32 %s9, 2
    %s16 = sadd.s32 %s9, 1
    %s17 = ssub.s32 %s9, %s16
    %p18 = scmp.eq.s32.totalorder %s17, 0
    %s20 = sadd.s32 %s19, 1
    %s21 = scalar_select %p18, %s19, %s20
    %p24 = pneg %p18
    %p25 = scmp.eq.s32.totalorder %s9, 1
    %p26 = por %p24, %p25
    %p27 = scmp.ne.s32.totalorder %s19, %s22
    %p28 = scmp.eq.s32.totalorder %s9, 0
    %p29 = por %p27, %p28
    %p30 = scmp.ne.s32.totalorder %s19, %s22
    %p31 = scmp.eq.s32.totalorder %s14, 1
    %p32 = por %p30, %p31
    %p33 = scmp.ne.s32.totalorder %s22, %s23
    %p34 = scmp.eq.s32.totalorder %s14, 0
    %p35 = por %p33, %p34
    %p36 = scmp.ne.s32.totalorder %s22, %s23
    %p37 = scmp.eq.s32.totalorder %s15, 1
    %p38 = por %p36, %p37
    %p40 = scmp.ne.s32.totalorder %s23, %s39
    %p41 = scmp.eq.s32.totalorder %s15, 0
    %p42 = por %p40, %p41
    %s43 = ssub.s32 %s9, %s16
    %p44 = scmp.eq.s32.totalorder %s43, 0
    %s46 = sadd.s32 %s45, 1
    %s47 = scalar_select %p44, %s45, %s46
    %p50 = pneg %p44
    %p51 = scmp.eq.s32.totalorder %s9, 1
    %p52 = por %p50, %p51
    %p53 = scmp.ne.s32.totalorder %s45, %s48
    %p54 = scmp.eq.s32.totalorder %s9, 0
    %p55 = por %p53, %p54
    %p56 = scmp.ne.s32.totalorder %s45, %s48
    %p57 = scmp.eq.s32.totalorder %s14, 1
    %p58 = por %p56, %p57
    %p59 = scmp.ne.s32.totalorder %s48, %s49
    %p60 = scmp.eq.s32.totalorder %s14, 0
    %p61 = por %p59, %p60
    %p62 = scmp.ne.s32.totalorder %s48, %s49
    %p63 = scmp.eq.s32.totalorder %s15, 1
    %p64 = por %p62, %p63
    %p66 = scmp.ne.s32.totalorder %s49, %s65
    %p67 = scmp.eq.s32.totalorder %s15, 0
    %p68 = por %p66, %p67
    %s69 = ssub.s32 %s9, %s16
    %p70 = scmp.eq.s32.totalorder %s69, 0
    %s72 = sadd.s32 %s71, 1
    %s73 = scalar_select %p70, %s71, %s72
    %p76 = pneg %p70
    %p77 = scmp.eq.s32.totalorder %s9, 1
    %p78 = por %p76, %p77
    %p79 = scmp.ne.s32.totalorder %s71, %s74
    %p80 = scmp.eq.s32.totalorder %s9, 0
    %p81 = por %p79, %p80
    %p82 = scmp.ne.s32.totalorder %s71, %s74
    %p83 = scmp.eq.s32.totalorder %s14, 1
    %p84 = por %p82, %p83
    %p85 = scmp.ne.s32.totalorder %s74, %s75
    %p86 = scmp.eq.s32.totalorder %s14, 0
    %p87 = por %p85, %p86
    %p88 = scmp.ne.s32.totalorder %s74, %s75
    %p89 = scmp.eq.s32.totalorder %s15, 1
    %p90 = por %p88, %p89
    %p92 = scmp.ne.s32.totalorder %s75, %s91
    %p93 = scmp.eq.s32.totalorder %s15, 0
    %p94 = por %p92, %p93
    %s95 = ssub.s32 %s9, %s16
    %p96 = scmp.eq.s32.totalorder %s95, 0
    %s98 = sadd.s32 %s97, 1
    %s99 = scalar_select %p96, %s97, %s98
    %p102 = pneg %p96
    %p103 = scmp.eq.s32.totalorder %s9, 1
    %p104 = por %p102, %p103
    %p105 = scmp.ne.s32.totalorder %s97, %s100
    %p106 = scmp.eq.s32.totalorder %s9, 0
    %p107 = por %p105, %p106
    %p108 = scmp.ne.s32.totalorder %s97, %s100
    %p109 = scmp.eq.s32.totalorder %s14, 1
    %p110 = por %p108, %p109
    %p111 = scmp.ne.s32.totalorder %s100, %s101
    %p112 = scmp.eq.s32.totalorder %s14, 0
    %p113 = por %p111, %p112
    %p114 = scmp.ne.s32.totalorder %s100, %s101
    %p115 = scmp.eq.s32.totalorder %s15, 1
    %p116 = por %p114, %p115
    %p118 = scmp.ne.s32.totalorder %s101, %s117
    %p119 = scmp.eq.s32.totalorder %s15, 0
    %p120 = por %p118, %p119
    %p121 = scmp.le.s32.totalorder 1, %s9
    %p122 = scmp.lt.s32.totalorder %s9, 3
    %p123 = pnand %p121, %p122
    %p124 = pneg %p123
    // Predicated region
    $region9: #{translation_model_forward.40} parent=5 // pred_check
      _
    $region10: #{translation_model_forward.40} parent=5 // pred_check_branch
      %126 = sbr.rel (%p123) target = $region12
    $region11: #{translation_model_forward.40} parent=5 // pred_region
      %s127 = ssub.s32 %s9, 1
    $region12: #{translation_model_forward.40} parent=5 // pred_fallthru
      _
    %p128 = scmp.lt.s32.totalorder %s9, 2
    // Predicated region
    $region13: #{translation_model_forward.40} parent=5 // pred_check
      %p129 = pneg %p128
    $region14: #{translation_model_forward.40} parent=5 // pred_check_branch
      %131 = sbr.rel (%p129) target = $region16
    $region15: #{translation_model_forward.40} parent=5 // pred_region
      // Predicated region
      $region17: #{translation_model_forward.40} parent=15 // pred_check
        %p132 = pneg %p29
      $region18: #{translation_model_forward.40} parent=15 // pred_check_branch
        %134 = sbr.rel (%p132) target = $region20
      $region19: #{translation_model_forward.40} parent=15 // pred_region
        %p135 = scmp.lt.s32.totalorder %s9, 1
        %s136 = scalar_select %p135, %s9, 1
        %s137 = smul.addr %s136, 8
        %s138 = scalar_lea.vmem %s0, %s137
      $region20: #{translation_model_forward.40} parent=15 // pred_fallthru
        _
      // Predicated region
      $region21: #{translation_model_forward.40} parent=15 // pred_check
        %p139 = pneg %p55
      $region22: #{translation_model_forward.40} parent=15 // pred_check_branch
        %141 = sbr.rel (%p139) target = $region24
      $region23: #{translation_model_forward.40} parent=15 // pred_region
        %p142 = scmp.lt.s32.totalorder %s9, 1
        %s143 = scalar_select %p142, %s9, 1
        %s144 = smul.addr %s143, 8
        %s145 = scalar_lea.vmem %s1, %s144
      $region24: #{translation_model_forward.40} parent=15 // pred_fallthru
        _
      // Predicated region
      $region25: #{translation_model_forward.40} parent=15 // pred_check
        %p146 = pneg %p81
      $region26: #{translation_model_forward.40} parent=15 // pred_check_branch
        %148 = sbr.rel (%p146) target = $region28
      $region27: #{translation_model_forward.40} parent=15 // pred_region
        %p149 = scmp.lt.s32.totalorder %s9, 1
        %s150 = scalar_select %p149, %s9, 1
        %s151 = smul.addr %s150, 8
        %s152 = scalar_lea.vmem %s2, %s151
      $region28: #{translation_model_forward.40} parent=15 // pred_fallthru
        _
    $region16: #{translation_model_forward.40} parent=5 // pred_fallthru
      _
    %p153 = scmp.le.s32.totalorder 1, %s9
    %p154 = scmp.lt.s32.totalorder %s9, 3
    %p155 = pnand %p153, %p154
    %p156 = pneg %p155
    // Predicated region
    $region29: #{translation_model_forward.40} parent=5 // pred_check
      _
    $region30: #{translation_model_forward.40} parent=5 // pred_check_branch
      %158 = sbr.rel (%p155) target = $region32
    $region31: #{translation_model_forward.40} parent=5 // pred_region
      %s159 = ssub.s32 %s9, 1
      %p160 = scmp.lt.s32.totalorder %s14, 1
      %s161 = scalar_select %p160, %s14, 1
      %s162 = smul.addr %s161, 8
      %s163 = scalar_lea.vmem %s0, %s162
      %p164 = pneg %p35
      %p165 = pneg %p32
      %p166 = scmp.lt.s32.totalorder %s14, 1
      %s167 = scalar_select %p166, %s14, 1
      %s168 = smul.addr %s167, 8
      %s169 = scalar_lea.vmem %s1, %s168
      %p170 = pneg %p61
      %p171 = pneg %p58
      %p172 = scmp.lt.s32.totalorder %s14, 1
      %s173 = scalar_select %p172, %s14, 1
      %s174 = smul.addr %s173, 8
      %s175 = scalar_lea.vmem %s2, %s174
      %p176 = pneg %p87
      %p177 = pneg %p84
      %p178 = pneg %p113
      %p179 = pneg %p110
      %p180 = scmp.lt.s32.totalorder %s14, 1
      %s181 = scalar_select %p180, %s14, 1
      %s182 = smul.addr %s181, 8
      %s183 = scalar_lea.vmem %s3, %s182
      %p184 = scmp.lt.s32.totalorder %s14, 1
      %s185 = scalar_select %p184, %s14, 1
      %s186 = smul.addr %s185, 8
      %s187 = scalar_lea.vmem %s0, %s186
      %p188 = scmp.lt.s32.totalorder %s14, 1
      %s189 = scalar_select %p188, %s14, 1
      %s190 = smul.addr %s189, 8
      %s191 = scalar_lea.vmem %s1, %s190
      %p192 = scmp.lt.s32.totalorder %s14, 1
      %s193 = scalar_select %p192, %s14, 1
      %s194 = smul.addr %s193, 8
      %s195 = scalar_lea.vmem %s2, %s194
      %p196 = scmp.lt.s32.totalorder %s14, 1
      %s197 = scalar_select %p196, %s14, 1
      %s198 = smul.addr %s197, 8
      %s199 = scalar_lea.vmem %s3, %s198
      %v201 = vld [vmem:[%s187] sm:$0x7f]
      %v202 = vld [vmem:[%s191] sm:$0xff]
      %v203 = vld [vmem:[%s195] sm:$0x7f]
      %v204 = vpack.c.bf16 %v201, %v201
      %v205 = vpack.c.bf16 %v202, %v202
      %vm206 = vcmask 64512
      %v208 = vsel %vm206, %v204, 0
      %v211 = vsel %vm206, %v205, 0
      %213 = vmatprep.subr.bf16.mxu0 0
      %214 = vmatpush1.bf16.xpose.msra.mxu0 %v211
      %215 = vmatprep.subr.bf16.mxu0 0
      %216 = vmatpush1.bf16.xpose.msra.mxu0 0
      %217 = vmatprep.subr.bf16.mxu0 0
      %218 = vmatpush1.bf16.xpose.msra.mxu0 0
      %219 = vmatprep.subr.bf16.mxu0 0
      %220 = vmatpush1.bf16.xpose.msra.mxu0 0
      %221 = vmatprep.subr.bf16.mxu0 0
      %222 = vmatpush1.bf16.xpose.msra.mxu0 0
      %223 = vmatprep.subr.bf16.mxu0 0
      %224 = vmatpush1.bf16.xpose.msra.mxu0 0
      %225 = vmatprep.subr.bf16.mxu0 0
      %226 = vmatpush1.bf16.xpose.msra.mxu0 0
      %227 = vmatprep.subr.bf16.mxu0 0
      %228 = vmatpush1.bf16.xpose.msra.mxu0 0
      %229 = vmatprep.subr.bf16.mxu0 0
      %230 = vmatpush1.bf16.xpose.msra.mxu0 0
      %231 = vmatprep.subr.bf16.mxu0 0
      %232 = vmatpush1.bf16.xpose.msra.mxu0 0
      %233 = vmatprep.subr.bf16.mxu0 0
      %234 = vmatpush1.bf16.xpose.msra.mxu0 0
      %235 = vmatprep.subr.bf16.mxu0 0
      %236 = vmatpush1.bf16.xpose.msra.mxu0 0
      %237 = vmatprep.subr.bf16.mxu0 0
      %238 = vmatpush1.bf16.xpose.msra.mxu0 0
      %239 = vmatprep.subr.bf16.mxu0 0
      %240 = vmatpush1.bf16.xpose.msra.mxu0 0
      %241 = vmatprep.subr.bf16.mxu0 0
      %242 = vmatpush1.bf16.xpose.msra.mxu0 0
      %243 = vmatprep.subr.bf16.mxu0 0
      %244 = vmatpush1.bf16.xpose.msra.mxu0 0
      %245 = vmatprep.mubr.bf16.mxu0 0
      %246 = vmatmul.mubr.bf16.gmra.mrb[0].mxu0 %v208
      %v247 = vpop.f32.mrb[0].mxu0
      %v248 = vadd.f32 0.0, %v247
      %v249 = vpop.f32.mrb[0].mxu0
      %v250 = vpop.f32.mrb[0].mxu0
      %v251 = vpop.f32.mrb[0].mxu0
      %252 = vdwg.mxu0
      %v253 = vmul.f32 %v248, 0.35355338
      %v254 = vadd.f32 %v253, %v203
      %vm255 = vcmask 63488
      %v256 = vsel %vm255, %v254, -inf
      %257 = vmax.xlane.f32.xlu0 %v256
      %v258 = vpop.xlane.xlu0 %257
      %v259 = vsub.f32 %v254, %v258
      %v260 = vmul.f32 %v259, 1.442695
      %v261 = vpow.pop %v260
      %v262 = vsel %vm255, %v261, 0.0
      %263 = vadd.xlane.f32.xlu0 %v262
      %v264 = vpop.xlane.xlu0 %263
      %v265 = vrcp.pop %v264
      %v266 = vmul.f32 %v261, %v265
      %v267 = vpack.c.bf16 %v266, %v266
      %269 = vrot.lane.b32.xlu0 %v205, 96
      %v270 = vpop.permute.xlu0 %269
      %v272 = vsel %vm206, %v267, 0
      %vm274 = vcmask 1043456
      %v276 = vsel %vm274, %v270, 0
      %278 = vmatprep.subr.bf16.mxu0 0
      %279 = vmatpush1.bf16.msra.mxu0 %v276
      %280 = vmatprep.subr.bf16.mxu0 0
      %281 = vmatpush1.bf16.msra.mxu0 0
      %282 = vmatprep.subr.bf16.mxu0 0
      %283 = vmatpush1.bf16.msra.mxu0 0
      %284 = vmatprep.subr.bf16.mxu0 0
      %285 = vmatpush1.bf16.msra.mxu0 0
      %286 = vmatprep.subr.bf16.mxu0 0
      %287 = vmatpush1.bf16.msra.mxu0 0
      %288 = vmatprep.subr.bf16.mxu0 0
      %289 = vmatpush1.bf16.msra.mxu0 0
      %290 = vmatprep.subr.bf16.mxu0 0
      %291 = vmatpush1.bf16.msra.mxu0 0
      %292 = vmatprep.subr.bf16.mxu0 0
      %293 = vmatpush1.bf16.msra.mxu0 0
      %294 = vmatprep.subr.bf16.mxu0 0
      %295 = vmatpush1.bf16.msra.mxu0 0
      %296 = vmatprep.subr.bf16.mxu0 0
      %297 = vmatpush1.bf16.msra.mxu0 0
      %298 = vmatprep.subr.bf16.mxu0 0
      %299 = vmatpush1.bf16.msra.mxu0 0
      %300 = vmatprep.subr.bf16.mxu0 0
      %301 = vmatpush1.bf16.msra.mxu0 0
      %302 = vmatprep.subr.bf16.mxu0 0
      %303 = vmatpush1.bf16.msra.mxu0 0
      %304 = vmatprep.subr.bf16.mxu0 0
      %305 = vmatpush1.bf16.msra.mxu0 0
      %306 = vmatprep.subr.bf16.mxu0 0
      %307 = vmatpush1.bf16.msra.mxu0 0
      %308 = vmatprep.subr.bf16.mxu0 0
      %309 = vmatpush1.bf16.msra.mxu0 0
      %310 = vmatprep.mubr.bf16.mxu0 0
      %311 = vmatmul.mubr.bf16.gmra.mrb[0].mxu0 %v272
      %v312 = vpop.f32.mrb[0].mxu0
      %v313 = vadd.f32 0.0, %v312
      %v314 = vpop.f32.mrb[0].mxu0
      %v315 = vpop.f32.mrb[0].mxu0
      %v316 = vpop.f32.mrb[0].mxu0
      %317 = vdwg.mxu0
      %319 = vrot.lane.b32.xlu0 %v204, 120
      %v320 = vpop.permute.xlu0 %319
      %321 = vrot.lane.b32.xlu0 %v205, 120
      %v322 = vpop.permute.xlu0 %321
      %v324 = vsel %vm206, %v320, 0
      %v327 = vsel %vm206, %v322, 0
      %329 = vmatprep.subr.bf16.mxu0 0
      %330 = vmatpush1.bf16.xpose.msra.mxu0 %v327
      %331 = vmatprep.subr.bf16.mxu0 0
      %332 = vmatpush1.bf16.xpose.msra.mxu0 0
      %333 = vmatprep.subr.bf16.mxu0 0
      %334 = vmatpush1.bf16.xpose.msra.mxu0 0
      %335 = vmatprep.subr.bf16.mxu0 0
      %336 = vmatpush1.bf16.xpose.msra.mxu0 0
      %337 = vmatprep.subr.bf16.mxu0 0
      %338 = vmatpush1.bf16.xpose.msra.mxu0 0
      %339 = vmatprep.subr.bf16.mxu0 0
      %340 = vmatpush1.bf16.xpose.msra.mxu0 0
      %341 = vmatprep.subr.bf16.mxu0 0
      %342 = vmatpush1.bf16.xpose.msra.mxu0 0
      %343 = vmatprep.subr.bf16.mxu0 0
      %344 = vmatpush1.bf16.xpose.msra.mxu0 0
      %345 = vmatprep.subr.bf16.mxu0 0
      %346 = vmatpush1.bf16.xpose.msra.mxu0 0
      %347 = vmatprep.subr.bf16.mxu0 0
      %348 = vmatpush1.bf16.xpose.msra.mxu0 0
      %349 = vmatprep.subr.bf16.mxu0 0
      %350 = vmatpush1.bf16.xpose.msra.mxu0 0
      %351 = vmatprep.subr.bf16.mxu0 0
      %352 = vmatpush1.bf16.xpose.msra.mxu0 0
      %353 = vmatprep.subr.bf16.mxu0 0
      %354 = vmatpush1.bf16.xpose.msra.mxu0 0
      %355 = vmatprep.subr.bf16.mxu0 0
      %356 = vmatpush1.bf16.xpose.msra.mxu0 0
      %357 = vmatprep.subr.bf16.mxu0 0
      %358 = vmatpush1.bf16.xpose.msra.mxu0 0
      %359 = vmatprep.subr.bf16.mxu0 0
      %360 = vmatpush1.bf16.xpose.msra.mxu0 0
      %361 = vmatprep.mubr.bf16.mxu0 0
      %362 = vmatmul.mubr.bf16.gmra.mrb[0].mxu0 %v324
      %v363 = vpop.f32.mrb[0].mxu0
      %v364 = vadd.f32 0.0, %v363
      %v365 = vpop.f32.mrb[0].mxu0
      %v366 = vpop.f32.mrb[0].mxu0
      %v367 = vpop.f32.mrb[0].mxu0
      %368 = vdwg.mxu0
      %v369 = vmul.f32 %v364, 0.35355338
      %v370 = vadd.f32 %v369, %v203
      %v371 = vsel %vm255, %v370, -inf
      %372 = vmax.xlane.f32.xlu0 %v371
      %v373 = vpop.xlane.xlu0 %372
      %v374 = vsub.f32 %v370, %v373
      %v375 = vmul.f32 %v374, 1.442695
      %v376 = vpow.pop %v375
      %v377 = vsel %vm255, %v376, 0.0
      %378 = vadd.xlane.f32.xlu0 %v377
      %v379 = vpop.xlane.xlu0 %378
      %v380 = vrcp.pop %v379
      %v381 = vmul.f32 %v376, %v380
      %v382 = vpack.c.bf16 %v381, %v381
      %383 = vrot.lane.b32.xlu0 %v205, 88
      %v384 = vpop.permute.xlu0 %383
      %v386 = vsel %vm206, %v382, 0
      %v389 = vsel %vm274, %v384, 0
      %391 = vmatprep.subr.bf16.mxu0 0
      %392 = vmatpush1.bf16.msra.mxu0 %v389
      %393 = vmatprep.subr.bf16.mxu0 0
      %394 = vmatpush1.bf16.msra.mxu0 0
      %395 = vmatprep.subr.bf16.mxu0 0
      %396 = vmatpush1.bf16.msra.mxu0 0
      %397 = vmatprep.subr.bf16.mxu0 0
      %398 = vmatpush1.bf16.msra.mxu0 0
      %399 = vmatprep.subr.bf16.mxu0 0
      %400 = vmatpush1.bf16.msra.mxu0 0
      %401 = vmatprep.subr.bf16.mxu0 0
      %402 = vmatpush1.bf16.msra.mxu0 0
      %403 = vmatprep.subr.bf16.mxu0 0
      %404 = vmatpush1.bf16.msra.mxu0 0
      %405 = vmatprep.subr.bf16.mxu0 0
      %406 = vmatpush1.bf16.msra.mxu0 0
      %407 = vmatprep.subr.bf16.mxu0 0
      %408 = vmatpush1.bf16.msra.mxu0 0
      %409 = vmatprep.subr.bf16.mxu0 0
      %410 = vmatpush1.bf16.msra.mxu0 0
      %411 = vmatprep.subr.bf16.mxu0 0
      %412 = vmatpush1.bf16.msra.mxu0 0
      %413 = vmatprep.subr.bf16.mxu0 0
      %414 = vmatpush1.bf16.msra.mxu0 0
      %415 = vmatprep.subr.bf16.mxu0 0
      %416 = vmatpush1.bf16.msra.mxu0 0
      %417 = vmatprep.subr.bf16.mxu0 0
      %418 = vmatpush1.bf16.msra.mxu0 0
      %419 = vmatprep.subr.bf16.mxu0 0
      %420 = vmatpush1.bf16.msra.mxu0 0
      %421 = vmatprep.subr.bf16.mxu0 0
      %422 = vmatpush1.bf16.msra.mxu0 0
      %423 = vmatprep.mubr.bf16.mxu0 0
      %424 = vmatmul.mubr.bf16.gmra.mrb[0].mxu0 %v386
      %v425 = vpop.f32.mrb[0].mxu0
      %v426 = vadd.f32 0.0, %v425
      %v427 = vpop.f32.mrb[0].mxu0
      %v428 = vpop.f32.mrb[0].mxu0
      %v429 = vpop.f32.mrb[0].mxu0
      %430 = vdwg.mxu0
      %431 = vrot.lane.b32.xlu0 %v204, 112
      %v432 = vpop.permute.xlu0 %431
      %433 = vrot.lane.b32.xlu0 %v205, 112
      %v434 = vpop.permute.xlu0 %433
      %v436 = vsel %vm206, %v432, 0
      %v439 = vsel %vm206, %v434, 0
      %441 = vmatprep.subr.bf16.mxu0 0
      %442 = vmatpush1.bf16.xpose.msra.mxu0 %v439
      %443 = vmatprep.subr.bf16.mxu0 0
      %444 = vmatpush1.bf16.xpose.msra.mxu0 0
      %445 = vmatprep.subr.bf16.mxu0 0
      %446 = vmatpush1.bf16.xpose.msra.mxu0 0
      %447 = vmatprep.subr.bf16.mxu0 0
      %448 = vmatpush1.bf16.xpose.msra.mxu0 0
      %449 = vmatprep.subr.bf16.mxu0 0
      %450 = vmatpush1.bf16.xpose.msra.mxu0 0
      %451 = vmatprep.subr.bf16.mxu0 0
      %452 = vmatpush1.bf16.xpose.msra.mxu0 0
      %453 = vmatprep.subr.bf16.mxu0 0
      %454 = vmatpush1.bf16.xpose.msra.mxu0 0
      %455 = vmatprep.subr.bf16.mxu0 0
      %456 = vmatpush1.bf16.xpose.msra.mxu0 0
      %457 = vmatprep.subr.bf16.mxu0 0
      %458 = vmatpush1.bf16.xpose.msra.mxu0 0
      %459 = vmatprep.subr.bf16.mxu0 0
      %460 = vmatpush1.bf16.xpose.msra.mxu0 0
      %461 = vmatprep.subr.bf16.mxu0 0
      %462 = vmatpush1.bf16.xpose.msra.mxu0 0
      %463 = vmatprep.subr.bf16.mxu0 0
      %464 = vmatpush1.bf16.xpose.msra.mxu0 0
      %465 = vmatprep.subr.bf16.mxu0 0
      %466 = vmatpush1.bf16.xpose.msra.mxu0 0
      %467 = vmatprep.subr.bf16.mxu0 0
      %468 = vmatpush1.bf16.xpose.msra.mxu0 0
      %469 = vmatprep.subr.bf16.mxu0 0
      %470 = vmatpush1.bf16.xpose.msra.mxu0 0
      %471 = vmatprep.subr.bf16.mxu0 0
      %472 = vmatpush1.bf16.xpose.msra.mxu0 0
      %473 = vmatprep.mubr.bf16.mxu0 0
      %474 = vmatmul.mubr.bf16.gmra.mrb[0].mxu0 %v436
      %v475 = vpop.f32.mrb[0].mxu0
      %v476 = vadd.f32 0.0, %v475
      %v477 = vpop.f32.mrb[0].mxu0
      %v478 = vpop.f32.mrb[0].mxu0
      %v479 = vpop.f32.mrb[0].mxu0
      %480 = vdwg.mxu0
      %v481 = vmul.f32 %v476, 0.35355338
      %v482 = vadd.f32 %v481, %v203
      %v483 = vsel %vm255, %v482, -inf
      %484 = vmax.xlane.f32.xlu0 %v483
      %v485 = vpop.xlane.xlu0 %484
      %v486 = vsub.f32 %v482, %v485
      %v487 = vmul.f32 %v486, 1.442695
      %v488 = vpow.pop %v487
      %v489 = vsel %vm255, %v488, 0.0
      %490 = vadd.xlane.f32.xlu0 %v489
      %v491 = vpop.xlane.xlu0 %490
      %v492 = vrcp.pop %v491
      %v493 = vmul.f32 %v488, %v492
      %v494 = vpack.c.bf16 %v493, %v493
      %495 = vrot.lane.b32.xlu0 %v205, 80
      %v496 = vpop.permute.xlu0 %495
      %v498 = vsel %vm206, %v494, 0
      %v501 = vsel %vm274, %v496, 0
      %503 = vmatprep.subr.bf16.mxu0 0
      %504 = vmatpush1.bf16.msra.mxu0 %v501
      %505 = vmatprep.subr.bf16.mxu0 0
      %506 = vmatpush1.bf16.msra.mxu0 0
      %507 = vmatprep.subr.bf16.mxu0 0
      %508 = vmatpush1.bf16.msra.mxu0 0
      %509 = vmatprep.subr.bf16.mxu0 0
      %510 = vmatpush1.bf16.msra.mxu0 0
      %511 = vmatprep.subr.bf16.mxu0 0
      %512 = vmatpush1.bf16.msra.mxu0 0
      %513 = vmatprep.subr.bf16.mxu0 0
      %514 = vmatpush1.bf16.msra.mxu0 0
      %515 = vmatprep.subr.bf16.mxu0 0
      %516 = vmatpush1.bf16.msra.mxu0 0
      %517 = vmatprep.subr.bf16.mxu0 0
      %518 = vmatpush1.bf16.msra.mxu0 0
      %519 = vmatprep.subr.bf16.mxu0 0
      %520 = vmatpush1.bf16.msra.mxu0 0
      %521 = vmatprep.subr.bf16.mxu0 0
      %522 = vmatpush1.bf16.msra.mxu0 0
      %523 = vmatprep.subr.bf16.mxu0 0
      %524 = vmatpush1.bf16.msra.mxu0 0
      %525 = vmatprep.subr.bf16.mxu0 0
      %526 = vmatpush1.bf16.msra.mxu0 0
      %527 = vmatprep.subr.bf16.mxu0 0
      %528 = vmatpush1.bf16.msra.mxu0 0
      %529 = vmatprep.subr.bf16.mxu0 0
      %530 = vmatpush1.bf16.msra.mxu0 0
      %531 = vmatprep.subr.bf16.mxu0 0
      %532 = vmatpush1.bf16.msra.mxu0 0
      %533 = vmatprep.subr.bf16.mxu0 0
      %534 = vmatpush1.bf16.msra.mxu0 0
      %535 = vmatprep.mubr.bf16.mxu0 0
      %536 = vmatmul.mubr.bf16.gmra.mrb[0].mxu0 %v498
      %v537 = vpop.f32.mrb[0].mxu0
      %v538 = vadd.f32 0.0, %v537
      %v539 = vpop.f32.mrb[0].mxu0
      %v540 = vpop.f32.mrb[0].mxu0
      %v541 = vpop.f32.mrb[0].mxu0
      %542 = vdwg.mxu0
      %543 = vrot.lane.b32.xlu0 %v204, 104
      %v544 = vpop.permute.xlu0 %543
      %545 = vrot.lane.b32.xlu0 %v205, 104
      %v546 = vpop.permute.xlu0 %545
      %v548 = vsel %vm206, %v544, 0
      %v551 = vsel %vm206, %v546, 0
      %553 = vmatprep.subr.bf16.mxu0 0
      %554 = vmatpush1.bf16.xpose.msra.mxu0 %v551
      %555 = vmatprep.subr.bf16.mxu0 0
      %556 = vmatpush1.bf16.xpose.msra.mxu0 0
      %557 = vmatprep.subr.bf16.mxu0 0
      %558 = vmatpush1.bf16.xpose.msra.mxu0 0
      %559 = vmatprep.subr.bf16.mxu0 0
      %560 = vmatpush1.bf16.xpose.msra.mxu0 0
      %561 = vmatprep.subr.bf16.mxu0 0
      %562 = vmatpush1.bf16.xpose.msra.mxu0 0
      %563 = vmatprep.subr.bf16.mxu0 0
      %564 = vmatpush1.bf16.xpose.msra.mxu0 0
      %565 = vmatprep.subr.bf16.mxu0 0
      %566 = vmatpush1.bf16.xpose.msra.mxu0 0
      %567 = vmatprep.subr.bf16.mxu0 0
      %568 = vmatpush1.bf16.xpose.msra.mxu0 0
      %569 = vmatprep.subr.bf16.mxu0 0
      %570 = vmatpush1.bf16.xpose.msra.mxu0 0
      %571 = vmatprep.subr.bf16.mxu0 0
      %572 = vmatpush1.bf16.xpose.msra.mxu0 0
      %573 = vmatprep.subr.bf16.mxu0 0
      %574 = vmatpush1.bf16.xpose.msra.mxu0 0
      %575 = vmatprep.subr.bf16.mxu0 0
      %576 = vmatpush1.bf16.xpose.msra.mxu0 0
      %577 = vmatprep.subr.bf16.mxu0 0
      %578 = vmatpush1.bf16.xpose.msra.mxu0 0
      %579 = vmatprep.subr.bf16.mxu0 0
      %580 = vmatpush1.bf16.xpose.msra.mxu0 0
      %581 = vmatprep.subr.bf16.mxu0 0
      %582 = vmatpush1.bf16.xpose.msra.mxu0 0
      %583 = vmatprep.subr.bf16.mxu0 0
      %584 = vmatpush1.bf16.xpose.msra.mxu0 0
      %585 = vmatprep.mubr.bf16.mxu0 0
      %586 = vmatmul.mubr.bf16.gmra.mrb[0].mxu0 %v548
      %v587 = vpop.f32.mrb[0].mxu0
      %v588 = vadd.f32 0.0, %v587
      %v589 = vpop.f32.mrb[0].mxu0
      %v590 = vpop.f32.mrb[0].mxu0
      %v591 = vpop.f32.mrb[0].mxu0
      %592 = vdwg.mxu0
      %v593 = vmul.f32 %v588, 0.35355338
      %v594 = vadd.f32 %v593, %v203
      %v595 = vsel %vm255, %v594, -inf
      %596 = vmax.xlane.f32.xlu0 %v595
      %v597 = vpop.xlane.xlu0 %596
      %v598 = vsub.f32 %v594, %v597
      %v599 = vmul.f32 %v598, 1.442695
      %v600 = vpow.pop %v599
      %v601 = vsel %vm255, %v600, 0.0
      %602 = vadd.xlane.f32.xlu0 %v601
      %v603 = vpop.xlane.xlu0 %602
      %v604 = vrcp.pop %v603
      %v605 = vmul.f32 %v600, %v604
      %v606 = vpack.c.bf16 %v605, %v605
      %607 = vrot.lane.b32.xlu0 %v205, 72
      %v608 = vpop.permute.xlu0 %607
      %v610 = vsel %vm206, %v606, 0
      %v613 = vsel %vm274, %v608, 0
      %615 = vmatprep.subr.bf16.mxu0 0
      %616 = vmatpush1.bf16.msra.mxu0 %v613
      %617 = vmatprep.subr.bf16.mxu0 0
      %618 = vmatpush1.bf16.msra.mxu0 0
      %619 = vmatprep.subr.bf16.mxu0 0
      %620 = vmatpush1.bf16.msra.mxu0 0
      %621 = vmatprep.subr.bf16.mxu0 0
      %622 = vmatpush1.bf16.msra.mxu0 0
      %623 = vmatprep.subr.bf16.mxu0 0
      %624 = vmatpush1.bf16.msra.mxu0 0
      %625 = vmatprep.subr.bf16.mxu0 0
      %626 = vmatpush1.bf16.msra.mxu0 0
      %627 = vmatprep.subr.bf16.mxu0 0
      %628 = vmatpush1.bf16.msra.mxu0 0
      %629 = vmatprep.subr.bf16.mxu0 0
      %630 = vmatpush1.bf16.msra.mxu0 0
      %631 = vmatprep.subr.bf16.mxu0 0
      %632 = vmatpush1.bf16.msra.mxu0 0
      %633 = vmatprep.subr.bf16.mxu0 0
      %634 = vmatpush1.bf16.msra.mxu0 0
      %635 = vmatprep.subr.bf16.mxu0 0
      %636 = vmatpush1.bf16.msra.mxu0 0
      %637 = vmatprep.subr.bf16.mxu0 0
      %638 = vmatpush1.bf16.msra.mxu0 0
      %639 = vmatprep.subr.bf16.mxu0 0
      %640 = vmatpush1.bf16.msra.mxu0 0
      %641 = vmatprep.subr.bf16.mxu0 0
      %642 = vmatpush1.bf16.msra.mxu0 0
      %643 = vmatprep.subr.bf16.mxu0 0
      %644 = vmatpush1.bf16.msra.mxu0 0
      %645 = vmatprep.subr.bf16.mxu0 0
      %646 = vmatpush1.bf16.msra.mxu0 0
      %647 = vmatprep.mubr.bf16.mxu0 0
      %648 = vmatmul.mubr.bf16.gmra.mrb[0].mxu0 %v610
      %v649 = vpop.f32.mrb[0].mxu0
      %v650 = vadd.f32 0.0, %v649
      %v651 = vpop.f32.mrb[0].mxu0
      %v652 = vpop.f32.mrb[0].mxu0
      %v653 = vpop.f32.mrb[0].mxu0
      %654 = vdwg.mxu0
      %656 = vrot.lane.b32.xlu0 %v426, 8
      %v657 = vpop.permute.xlu0 %656
      %660 = vrot.lane.b32.xlu0 %v538, 16
      %v661 = vpop.permute.xlu0 %660
      %664 = vrot.lane.b32.xlu0 %v650, 24
      %v665 = vpop.permute.xlu0 %664
      %v667 = vsel %vm206, %v313, %v657
      %vm668 = vcmask 130048
      %v669 = vsel %vm668, %v667, %v661
      %vm670 = vcmask 195584
      %v671 = vsel %vm670, %v669, %v665
      %vm672 = vcmask 260096
      %673 = vst.msk [vmem:[%s199] sm:$0x7f] %vm672, %v671
      %p674 = scmp.lt.s32.totalorder %s14, 1
      %s675 = scalar_select %p674, %s14, 1
      %s676 = smul.addr %s675, 8
      %s677 = scalar_lea.vmem %s3, %s676
      // Predicated region
      $region33: #{translation_model_forward.40} parent=31 // pred_check
        %p678 = pneg %p110
      $region34: #{translation_model_forward.40} parent=31 // pred_check_branch
        %680 = sbr.rel (%p678) target = $region36
      $region35: #{translation_model_forward.40} parent=31 // pred_region
        _
      $region36: #{translation_model_forward.40} parent=31 // pred_fallthru
        _
    $region32: #{translation_model_forward.40} parent=5 // pred_fallthru
      _
    %p681 = scmp.le.s32.totalorder 2, %s9
    // Predicated region
    $region37: #{translation_model_forward.40} parent=5 // pred_check
      %p682 = pneg %p681
    $region38: #{translation_model_forward.40} parent=5 // pred_check_branch
      %684 = sbr.rel (%p682) target = $region40
    $region39: #{translation_model_forward.40} parent=5 // pred_region
      %s685 = ssub.s32 %s9, 2
      // Predicated region
      $region41: #{translation_model_forward.40} parent=39 // pred_check
        %p686 = pneg %p116
      $region42: #{translation_model_forward.40} parent=39 // pred_check_branch
        %688 = sbr.rel (%p686) target = $region44
      $region43: #{translation_model_forward.40} parent=39 // pred_region
        %p689 = scmp.lt.s32.totalorder %s15, 1
        %s690 = scalar_select %p689, %s15, 1
        %s691 = smul.addr %s690, 8
        %s692 = scalar_lea.vmem %s3, %s691
      $region44: #{translation_model_forward.40} parent=39 // pred_fallthru
        _
    $region40: #{translation_model_forward.40} parent=5 // pred_fallthru
      _
  $region6: #{translation_model_forward.40} parent=0 // loop_footer
    %s13 = sadd.s32 1, %s9
  $region7: #{translation_model_forward.40} parent=0 // loop_footer_branch
    %8 = sbr.rel target = $region3
  $region8: #{translation_model_forward.40} parent=0 // loop_exit
    _

</llo_original>
